<compile_context>
chip_gen: v7x
topology: tpu7x:2x2x1
jax: 0.10.0
libtpu: 0.0.40
codegen_flags: <defaults>
</compile_context>

<pallas_src>
import functools

import numpy as np
import jax
import jax.numpy as jnp
from jax.experimental import pallas as pl
from jax.experimental.pallas import tpu as pltpu

_KW = 4            # Discriminator kernel size
_EPS = 1e-5        # InstanceNorm2d default eps
_NEG_SLOPE = 0.2   # LeakyReLU slope


# ------------------- conv4x4 (+bias +InstanceNorm +LeakyReLU) kernel ----------
def _conv_block_kernel(do_norm, do_act, p_ref, w_ref, b_ref, o_ref):
    # p_ref: (1, M, K)  bf16 im2col patches of one sample (M = Ho*Wo, K = 16*Cin)
    # w_ref: (K, Cout)  bf16
    # b_ref: (1, Cout)  f32
    # o_ref: (1, M, Cout) f32
    acc = jnp.dot(p_ref[0], w_ref[...], preferred_element_type=jnp.float32)
    acc = acc + b_ref[...]                      # single fused bias broadcast
    if do_norm:                                 # InstanceNorm2d(affine=False)
        mean = jnp.mean(acc, axis=0, keepdims=True)
        cen = acc - mean
        var = jnp.mean(cen * cen, axis=0, keepdims=True)
        acc = cen * jax.lax.rsqrt(var + _EPS)
    if do_act:                                  # LeakyReLU(0.2)
        acc = jnp.maximum(acc, _NEG_SLOPE * acc)
    o_ref[0] = acc


def conv_block(patches, w_flat, b, *, do_norm, do_act):
    # patches: (N, M, K) bf16, w_flat: (K, Cout) bf16, b: (1, Cout) f32
    N, M, K = patches.shape
    Cout = w_flat.shape[1]
    kernel = functools.partial(_conv_block_kernel, do_norm, do_act)
    return pl.pallas_call(
        kernel,
        out_shape=jax.ShapeDtypeStruct((N, M, Cout), jnp.float32),
        grid=(N,),
        in_specs=[
            pl.BlockSpec((1, M, K), lambda n: (n, 0, 0)),
            pl.BlockSpec((K, Cout), lambda n: (0, 0)),
            pl.BlockSpec((1, Cout), lambda n: (0, 0)),
        ],
        out_specs=pl.BlockSpec((1, M, Cout), lambda n: (n, 0, 0)),
        compiler_params=pltpu.CompilerParams(
            dimension_semantics=("parallel",),          # batch across v7x TCs
            vmem_limit_bytes=48 * 1024 * 1024),         # fits v7x's 64 MiB VMEM
    )(patches, w_flat, b)


# ------------------- fused head: AdaptiveAvgPool(7,7)+Flatten+Linear+Sigmoid --
def _head_kernel(f_ref, p_ref, w_ref, b_ref, o_ref):
    # f_ref: (N, S) f32 (model4 output, C==1 flattened over HxW)
    # p_ref: (S, 49) f32 transposed adaptive-avg-pool matrix
    # w_ref: (49, 1) f32 linear weight (transposed), b_ref: (1, 1) f32
    pooled = jnp.dot(f_ref[...], p_ref[...], preferred_element_type=jnp.float32)
    logit = jnp.dot(pooled, w_ref[...],
                    preferred_element_type=jnp.float32) + b_ref[...]
    o_ref[...] = 1.0 / (1.0 + jnp.exp(-logit))          # sigmoid on the EUP


def head(f_flat, pool_t, w_lin_t, b_lin):
    N = f_flat.shape[0]
    return pl.pallas_call(
        _head_kernel,
        out_shape=jax.ShapeDtypeStruct((N, 1), jnp.float32),
        in_specs=[pl.BlockSpec(memory_space=pltpu.MemorySpace.VMEM)] * 4,
        out_specs=pl.BlockSpec(memory_space=pltpu.MemorySpace.VMEM),
    )(f_flat, pool_t, w_lin_t, b_lin)


# ------------------- wrapper-side helpers -------------------------------------
def _im2col(x, k, s):
    # x: (N, H, W, C) f32 -> (N, Ho*Wo, k*k*C) bf16 patches (tap-major, channel
    # minor so it matches w.reshape(k*k*Cin, Cout)).
    N, H, W, C = x.shape
    Ho = (H - k) // s + 1
    Wo = (W - k) // s + 1
    xb = x.astype(jnp.bfloat16)
    taps = []
    for ky in range(k):
        for kx in range(k):
            taps.append(jax.lax.slice(
                xb, (0, ky, kx, 0),
                (N, ky + s * (Ho - 1) + 1, kx + s * (Wo - 1) + 1, C),
                (1, s, s, 1)))
    patches = jnp.concatenate(taps, axis=-1)             # (N, Ho, Wo, k*k*C)
    return patches.reshape(N, Ho * Wo, k * k * C), Ho, Wo


def _adaptive_pool_matrix(h, w, oh=7, ow=7):
    # PyTorch AdaptiveAvgPool2d windows: [floor(i*H/oh), ceil((i+1)*H/oh)).
    p = np.zeros((oh * ow, h * w), np.float32)
    for i in range(oh):
        hs, he = (i * h) // oh, -(-((i + 1) * h) // oh)
        for j in range(ow):
            ws, we = (j * w) // ow, -(-((j + 1) * w) // ow)
            val = 1.0 / ((he - hs) * (we - ws))
            for ih in range(hs, he):
                p[i * ow + j, ih * w + ws:ih * w + we] = val
    return jnp.asarray(p)                                # (49, h*w)


# ------------------- parameters (synthetic, deterministic) --------------------
def init_discriminator_params(key, input_nc, ndf=64):
    # Matches Discriminator(input_nc, ndf): model0..model4 conv stacks.
    defs = [(input_nc, ndf, 2, False, True)]             # conv + LeakyReLU
    nf = ndf
    for _ in range(1, 3):
        nf_prev, nf = nf, min(nf * 2, 512)
        defs.append((nf_prev, nf, 2, True, True))        # conv + IN + LeakyReLU
    nf_prev, nf = nf, min(nf * 2, 512)
    defs.append((nf_prev, nf, 1, True, True))            # conv + IN + LeakyReLU
    defs.append((nf, 1, 1, False, False))                # conv only

    convs = []
    for cin, cout, stride, do_norm, do_act in defs:
        key, wk, bk = jax.random.split(key, 3)
        std = (2.0 / (cin * _KW * _KW)) ** 0.5
        w = jax.random.normal(wk, (_KW, _KW, cin, cout), jnp.float32) * std  # HWIO
        b = jax.random.normal(bk, (1, cout), jnp.float32) * 0.01
        convs.append(dict(w=w, b=b, stride=stride, norm=do_norm, act=do_act))

    key, wk, bk = jax.random.split(key, 3)
    lin_w = jax.random.normal(wk, (1, 49), jnp.float32) * (1.0 / 7.0)
    lin_b = jax.random.normal(bk, (1, 1), jnp.float32) * 0.01
    return dict(convs=convs, lin_w=lin_w, lin_b=lin_b)


# ------------------- forward (Pallas) -----------------------------------------
def discriminator_pallas(x_nchw, params):
    # Reproduces Discriminator.forward: returns result[1:] =
    # [model0(x), ..., model4(...), model6(model5(...))] with features in NCHW.
    h = jnp.transpose(x_nchw, (0, 2, 3, 1)).astype(jnp.float32)   # NHWC
    outs = []
    for layer in params["convs"]:
        w, b = layer["w"], layer["b"]
        cout = w.shape[-1]
        patches, Ho, Wo = _im2col(h, _KW, layer["stride"])
        w_flat = w.reshape(_KW * _KW * w.shape[2], cout).astype(jnp.bfloat16)
        flat = conv_block(patches, w_flat, b,
                          do_norm=layer["norm"], do_act=layer["act"])
        h = flat.reshape(h.shape[0], Ho, Wo, cout)
        outs.append(jnp.transpose(h, (0, 3, 1, 2)))                # NCHW feature

    N, H5, W5, _ = h.shape                    # model4 output has one channel
    f_flat = h.reshape(N, H5 * W5)
    pool_t = _adaptive_pool_matrix(H5, W5).T                        # (H5*W5, 49)
    final = head(f_flat, pool_t, params["lin_w"].T, params["lin_b"])
    return outs + [final]


# ------------------- pure-JAX reference (for validation) ----------------------
def discriminator_reference(x_nchw, params):
    h = jnp.transpose(x_nchw, (0, 2, 3, 1)).astype(jnp.float32)
    outs = []
    for layer in params["convs"]:
        w, b, s = layer["w"], layer["b"], layer["stride"]
        y = jax.lax.conv_general_dilated(
            h.astype(jnp.bfloat16), w.astype(jnp.bfloat16),
            window_strides=(s, s), padding="VALID",
            dimension_numbers=("NHWC", "HWIO", "NHWC"),
            preferred_element_type=jnp.float32)
        y = y + b.reshape(1, 1, 1, -1)
        if layer["norm"]:
            mean = jnp.mean(y, axis=(1, 2), keepdims=True)
            var = jnp.mean((y - mean) ** 2, axis=(1, 2), keepdims=True)
            y = (y - mean) * jax.lax.rsqrt(var + _EPS)
        if layer["act"]:
            y = jnp.maximum(y, _NEG_SLOPE * y)
        h = y
        outs.append(jnp.transpose(h, (0, 3, 1, 2)))
    N, H5, W5, _ = h.shape
    pool = _adaptive_pool_matrix(H5, W5)                            # (49, H5*W5)
    pooled = h.reshape(N, H5 * W5) @ pool.T                         # (N, 49)
    logit = pooled @ params["lin_w"].T + params["lin_b"]
    outs.append(jax.nn.sigmoid(logit))
    return outs


if __name__ == "__main__":
    key = jax.random.PRNGKey(0)
    kx, kp = jax.random.split(key)
    # Smallest convenient input consistent with the module: four k=4/pad=0 convs
    # (three of them stride 2) need >=70 px; 118 px makes the pre-pool map
    # exactly 7x7 so AdaptiveAvgPool2d((7,7)) is exercised end-to-end.
    x = jax.random.normal(kx, (2, 4, 118, 118), jnp.float32)
    params = init_discriminator_params(kp, input_nc=4, ndf=64)

    outs = jax.block_until_ready(discriminator_pallas(x, params))
    refs = jax.block_until_ready(discriminator_reference(x, params))

    assert len(outs) == 6, len(outs)
    for i, (o, r) in enumerate(zip(outs, refs)):
        if o.shape != r.shape:
            raise AssertionError(f"output {i}: shape {o.shape} != {r.shape}")
        if not jnp.allclose(o, r, rtol=3e-2, atol=3e-2):
            err = float(jnp.max(jnp.abs(o - r)))
            raise AssertionError(f"output {i}: max abs err {err}")
    print("KERNEL_OK")
</pallas_src>

<mosaic_0001>
module attributes {stable_mosaic.version = 11 : i64} {
  func.func @_conv_block_kernel(%arg0: i32, %arg1: memref<1x3364x64xbf16, #tpu.memory_space<vmem>>, %arg2: memref<64x64xbf16, #tpu.memory_space<vmem>>, %arg3: memref<1x64xf32, #tpu.memory_space<vmem>>, %arg4: memref<1x3364x64xf32, #tpu.memory_space<vmem>>) attributes {dimension_semantics = [#tpu.dimension_semantics<parallel>], iteration_bounds = array<i64: 2>, scalar_prefetch = 0 : i64, scratch_operands = 0 : i64, tpu.core_type = #tpu.core_type<tc>, window_params = [{transform_indices = @transform_0, window_bounds = array<i64: 1, 3364, 64>}, {pipeline_mode = #tpu.pipeline_mode<synchronous>, transform_indices = @transform_1, window_bounds = array<i64: 64, 64>}, {pipeline_mode = #tpu.pipeline_mode<synchronous>, transform_indices = @transform_2, window_bounds = array<i64: 1, 64>}, {transform_indices = @transform_3, window_bounds = array<i64: 1, 3364, 64>}]} {
    %c0 = arith.constant 0 : index
    %c0_0 = arith.constant 0 : index
    %c0_1 = arith.constant 0 : index
    %0 = vector.load %arg1[%c0, %c0_0, %c0_1] : memref<1x3364x64xbf16, #tpu.memory_space<vmem>>, vector<1x3364x64xbf16>
    %1 = vector.shape_cast %0 : vector<1x3364x64xbf16> to vector<3364x64xbf16>
    %c0_2 = arith.constant 0 : index
    %c0_3 = arith.constant 0 : index
    %2 = vector.load %arg2[%c0_2, %c0_3] : memref<64x64xbf16, #tpu.memory_space<vmem>>, vector<64x64xbf16>
    %cst = arith.constant dense<0.000000e+00> : vector<3364x64xf32>
    %3 = tpu.matmul %1, %2, %cst {dimension_numbers = #tpu.dot_dimension_numbers<[1], [0], [0], [1], [0, 0, 1, 1], [], []>} : vector<3364x64xbf16>, vector<64x64xbf16>, vector<3364x64xf32> -> vector<3364x64xf32>
    %c0_4 = arith.constant 0 : index
    %c0_5 = arith.constant 0 : index
    %4 = vector.load %arg3[%c0_4, %c0_5] : memref<1x64xf32, #tpu.memory_space<vmem>>, vector<1x64xf32>
    %5 = vector.broadcast %4 : vector<1x64xf32> to vector<3364x64xf32>
    %6 = arith.addf %3, %5 : vector<3364x64xf32>
    %cst_6 = arith.constant 2.000000e-01 : f32
    %7 = vector.broadcast %cst_6 : f32 to vector<3364x64xf32>
    %8 = arith.mulf %7, %6 : vector<3364x64xf32>
    %9 = arith.maximumf %6, %8 : vector<3364x64xf32>
    %c0_7 = arith.constant 0 : index
    %c0_8 = arith.constant 0 : index
    %c0_9 = arith.constant 0 : index
    %10 = vector.load %arg4[%c0_7, %c0_8, %c0_9] : memref<1x3364x64xf32, #tpu.memory_space<vmem>>, vector<1x3364x64xf32>
    %11 = vector.shape_cast %10 : vector<1x3364x64xf32> to vector<3364x64xf32>
    %12 = vector.shape_cast %9 : vector<3364x64xf32> to vector<1x3364x64xf32>
    tpu.vector_store %arg4[%c0_7, %c0_8, %c0_9], %12 {strides = array<i32>} : memref<1x3364x64xf32, #tpu.memory_space<vmem>>, vector<1x3364x64xf32>,
    return
  }
  func.func @transform_0(%arg0: i32) -> (i32, i32, i32) {
    %c0_i32 = arith.constant 0 : i32
    %c0_i32_0 = arith.constant 0 : i32
    %c0_i32_1 = arith.constant 0 : i32
    return %arg0, %c0_i32, %c0_i32_0 : i32, i32, i32
  }
  func.func @transform_1(%arg0: i32) -> (i32, i32) {
    %c0_i32 = arith.constant 0 : i32
    %c0_i32_0 = arith.constant 0 : i32
    %c0_i32_1 = arith.constant 0 : i32
    return %c0_i32, %c0_i32_0 : i32, i32
  }
  func.func @transform_2(%arg0: i32) -> (i32, i32) {
    %c0_i32 = arith.constant 0 : i32
    %c0_i32_0 = arith.constant 0 : i32
    %c0_i32_1 = arith.constant 0 : i32
    return %c0_i32, %c0_i32_0 : i32, i32
  }
  func.func @transform_3(%arg0: i32) -> (i32, i32, i32) {
    %c0_i32 = arith.constant 0 : i32
    %c0_i32_0 = arith.constant 0 : i32
    %c0_i32_1 = arith.constant 0 : i32
    return %arg0, %c0_i32, %c0_i32_0 : i32, i32, i32
  }
}

</mosaic_0001>

<llo_original>
// kernel: tpu_custom_call.1
$region0: #{tpu_custom_call.1}
  #allocation0 [shape = 'u32[]', space=smem, size = 0x4, offset = 0x4, fixed_abs, tag = 'smem constant byte address 0x4 - core index']
  #allocation1 [shape = 'u32[144,128]{1,0:T(1,128)}', space=vmem, size = 0x12000, scoped, tag = 'internal scratch']
  %s0 = inlined_call_operand.vmem [shape: bf16[2,3364,64], index: 0, kind: input, shape index: {}]
  %s1 = inlined_call_operand.vmem [shape: bf16[64,64], index: 1, kind: input, shape index: {}]
  %s2 = inlined_call_operand.vmem [shape: f32[1,64], index: 2, kind: input, shape index: {}]
  %s3 = inlined_call_operand.vmem [shape: f32[2,3364,64], index: 3, kind: output, shape index: {}]
  %s4 = sld [smem:[#allocation0]]
  $region45: #{tpu_custom_call.1} parent=0
    _
  %s6 = ssub.s32 1, %s4
  %s7 = scalar_select 0, %s6, %s4
  loop: start=0, step=1, limit=4
  $region2: #{tpu_custom_call.1} parent=0 // loop_pre_header
    _
  $region3: #{tpu_custom_call.1} parent=0 // loop_header
    %s9 = sphi 0, %s13
    %p10 = scmp.ge.s32.totalorder %s9, 4
    %s19 = sphi 0, %s21
    %s22 = sphi 0, %s19
    %s23 = sphi 0, %s22
    %s39 = sphi 0, %s23
    %s43 = sphi 0, %s43
    %s45 = sphi 0, %s43
    %s46 = sphi 0, %s45
    %s60 = sphi 0, %s46
    %s64 = sphi 0, %s64
    %s66 = sphi 0, %s64
    %s67 = sphi 0, %s66
    %s81 = sphi 0, %s67
    %s87 = sphi 0, %s89
    %s90 = sphi 0, %s87
    %s91 = sphi 0, %s90
    %s107 = sphi 0, %s91
  $region4: #{tpu_custom_call.1} parent=0 // loop_header_branch
    %12 = sbr.rel (%p10) target = $region8
  $region5: #{tpu_custom_call.1} parent=0 // loop_body
    %s14 = ssub.s32 %s9, 1
    %s15 = ssub.s32 %s9, 2
    %s16 = sadd.s32 %s9, 1
    %s17 = ssub.s32 %s9, %s16
    %p18 = scmp.eq.s32.totalorder %s17, 0
    %s20 = sadd.s32 %s19, 1
    %s21 = scalar_select %p18, %s19, %s20
    %p24 = pneg %p18
    %p25 = scmp.eq.s32.totalorder %s9, 1
    %p26 = por %p24, %p25
    %p27 = scmp.ne.s32.totalorder %s19, %s22
    %p28 = scmp.eq.s32.totalorder %s9, 0
    %p29 = por %p27, %p28
    %p30 = scmp.ne.s32.totalorder %s19, %s22
    %p31 = scmp.eq.s32.totalorder %s14, 1
    %p32 = por %p30, %p31
    %p33 = scmp.ne.s32.totalorder %s22, %s23
    %p34 = scmp.eq.s32.totalorder %s14, 0
    %p35 = por %p33, %p34
    %p36 = scmp.ne.s32.totalorder %s22, %s23
    %p37 = scmp.eq.s32.totalorder %s15, 1
    %p38 = por %p36, %p37
    %p40 = scmp.ne.s32.totalorder %s23, %s39
    %p41 = scmp.eq.s32.totalorder %s15, 0
    %p42 = por %p40, %p41
    %s44 = sadd.s32 %s43, 1
    %p47 = scmp.eq.s32.totalorder %s9, 1
    %p48 = scmp.ne.s32.totalorder %s43, %s45
    %p49 = scmp.eq.s32.totalorder %s9, 0
    %p50 = por %p48, %p49
    %p51 = scmp.ne.s32.totalorder %s43, %s45
    %p52 = scmp.eq.s32.totalorder %s14, 1
    %p53 = por %p51, %p52
    %p54 = scmp.ne.s32.totalorder %s45, %s46
    %p55 = scmp.eq.s32.totalorder %s14, 0
    %p56 = por %p54, %p55
    %p57 = scmp.ne.s32.totalorder %s45, %s46
    %p58 = scmp.eq.s32.totalorder %s15, 1
    %p59 = por %p57, %p58
    %p61 = scmp.ne.s32.totalorder %s46, %s60
    %p62 = scmp.eq.s32.totalorder %s15, 0
    %p63 = por %p61, %p62
    %s65 = sadd.s32 %s64, 1
    %p68 = scmp.eq.s32.totalorder %s9, 1
    %p69 = scmp.ne.s32.totalorder %s64, %s66
    %p70 = scmp.eq.s32.totalorder %s9, 0
    %p71 = por %p69, %p70
    %p72 = scmp.ne.s32.totalorder %s64, %s66
    %p73 = scmp.eq.s32.totalorder %s14, 1
    %p74 = por %p72, %p73
    %p75 = scmp.ne.s32.totalorder %s66, %s67
    %p76 = scmp.eq.s32.totalorder %s14, 0
    %p77 = por %p75, %p76
    %p78 = scmp.ne.s32.totalorder %s66, %s67
    %p79 = scmp.eq.s32.totalorder %s15, 1
    %p80 = por %p78, %p79
    %p82 = scmp.ne.s32.totalorder %s67, %s81
    %p83 = scmp.eq.s32.totalorder %s15, 0
    %p84 = por %p82, %p83
    %s85 = ssub.s32 %s9, %s16
    %p86 = scmp.eq.s32.totalorder %s85, 0
    %s88 = sadd.s32 %s87, 1
    %s89 = scalar_select %p86, %s87, %s88
    %p92 = pneg %p86
    %p93 = scmp.eq.s32.totalorder %s9, 1
    %p94 = por %p92, %p93
    %p95 = scmp.ne.s32.totalorder %s87, %s90
    %p96 = scmp.eq.s32.totalorder %s9, 0
    %p97 = por %p95, %p96
    %p98 = scmp.ne.s32.totalorder %s87, %s90
    %p99 = scmp.eq.s32.totalorder %s14, 1
    %p100 = por %p98, %p99
    %p101 = scmp.ne.s32.totalorder %s90, %s91
    %p102 = scmp.eq.s32.totalorder %s14, 0
    %p103 = por %p101, %p102
    %p104 = scmp.ne.s32.totalorder %s90, %s91
    %p105 = scmp.eq.s32.totalorder %s15, 1
    %p106 = por %p104, %p105
    %p108 = scmp.ne.s32.totalorder %s91, %s107
    %p109 = scmp.eq.s32.totalorder %s15, 0
    %p110 = por %p108, %p109
    %p111 = scmp.le.s32.totalorder 1, %s9
    %p112 = scmp.lt.s32.totalorder %s9, 3
    %p113 = pnand %p111, %p112
    %p114 = pneg %p113
    // Predicated region
    $region9: #{tpu_custom_call.1} parent=5 // pred_check
      _
    $region10: #{tpu_custom_call.1} parent=5 // pred_check_branch
      %116 = sbr.rel (%p113) target = $region12
    $region11: #{tpu_custom_call.1} parent=5 // pred_region
      %s117 = ssub.s32 %s9, 1
      // Predicated region
      $region13: #{tpu_custom_call.1} parent=11 // pred_check
        %p118 = pneg %p56
      $region14: #{tpu_custom_call.1} parent=11 // pred_check_branch
        %120 = sbr.rel (%p118) target = $region16
      $region15: #{tpu_custom_call.1} parent=11 // pred_region
        _
      $region16: #{tpu_custom_call.1} parent=11 // pred_fallthru
        _
      // Predicated region
      $region17: #{tpu_custom_call.1} parent=11 // pred_check
        %p121 = pneg %p77
      $region18: #{tpu_custom_call.1} parent=11 // pred_check_branch
        %123 = sbr.rel (%p121) target = $region20
      $region19: #{tpu_custom_call.1} parent=11 // pred_region
        _
      $region20: #{tpu_custom_call.1} parent=11 // pred_fallthru
        _
    $region12: #{tpu_custom_call.1} parent=5 // pred_fallthru
      _
    %p124 = scmp.lt.s32.totalorder %s9, 2
    // Predicated region
    $region21: #{tpu_custom_call.1} parent=5 // pred_check
      %p125 = pneg %p124
    $region22: #{tpu_custom_call.1} parent=5 // pred_check_branch
      %127 = sbr.rel (%p125) target = $region24
    $region23: #{tpu_custom_call.1} parent=5 // pred_region
      // Predicated region
      $region25: #{tpu_custom_call.1} parent=23 // pred_check
        %p128 = pneg %p29
      $region26: #{tpu_custom_call.1} parent=23 // pred_check_branch
        %130 = sbr.rel (%p128) target = $region28
      $region27: #{tpu_custom_call.1} parent=23 // pred_region
        %p131 = scmp.lt.s32.totalorder %s9, 1
        %s132 = scalar_select %p131, %s9, 1
        %s133 = smul.addr %s132, 421
        %s134 = smul.addr %s133, 4
        %s135 = scalar_lea.vmem %s0, %s134
      $region28: #{tpu_custom_call.1} parent=23 // pred_fallthru
        _
    $region24: #{tpu_custom_call.1} parent=5 // pred_fallthru
      _
    %p136 = scmp.le.s32.totalorder 1, %s9
    %p137 = scmp.lt.s32.totalorder %s9, 3
    %p138 = pnand %p136, %p137
    %p139 = pneg %p138
    // Predicated region
    $region29: #{tpu_custom_call.1} parent=5 // pred_check
      _
    $region30: #{tpu_custom_call.1} parent=5 // pred_check_branch
      %141 = sbr.rel (%p138) target = $region32
    $region31: #{tpu_custom_call.1} parent=5 // pred_region
      %s142 = ssub.s32 %s9, 1
      %p143 = scmp.lt.s32.totalorder %s14, 1
      %s144 = scalar_select %p143, %s14, 1
      %s145 = smul.addr %s144, 421
      %s146 = smul.addr %s145, 4
      %s147 = scalar_lea.vmem %s0, %s146
      %p148 = pneg %p35
      %p149 = pneg %p32
      %p150 = pneg %p56
      %p151 = pneg %p53
      %p152 = pneg %p77
      %p153 = pneg %p74
      %p154 = pneg %p103
      %p155 = pneg %p100
      %p156 = scmp.lt.s32.totalorder %s14, 1
      %s157 = scalar_select %p156, %s14, 1
      %s158 = smul.addr %s157, 421
      %s159 = smul.addr %s158, 8
      %s160 = scalar_lea.vmem %s3, %s159
      %p161 = scmp.lt.s32.totalorder %s14, 1
      %s162 = scalar_select %p161, %s14, 1
      %s163 = smul.addr %s162, 421
      %s164 = smul.addr %s163, 4
      %s165 = scalar_lea.vmem %s0, %s164
      %p166 = scmp.lt.s32.totalorder %s14, 1
      %s167 = scalar_select %p166, %s14, 1
      %s168 = smul.addr %s167, 421
      %s169 = smul.addr %s168, 8
      %s170 = scalar_lea.vmem %s3, %s169
      %v172 = vld [vmem:[%s165] sm:$0xf]
      %v173 = vld [vmem:[%s165 + $0x4] sm:$0xf]
      %v174 = vld [vmem:[%s165 + $0x8] sm:$0xf]
      %v175 = vld [vmem:[%s165 + $0xc] sm:$0xf]
      %v176 = vld [vmem:[%s165 + $0x10] sm:$0xf]
      %v177 = vld [vmem:[%s165 + $0x14] sm:$0xf]
      %v178 = vld [vmem:[%s165 + $0x18] sm:$0xf]
      %v179 = vld [vmem:[%s165 + $0x1c] sm:$0xf]
      %v180 = vld [vmem:[%s165 + $0x20] sm:$0xf]
      %v181 = vld [vmem:[%s165 + $0x24] sm:$0xf]
      %v182 = vld [vmem:[%s165 + $0x28] sm:$0xf]
      %v183 = vld [vmem:[%s165 + $0x2c] sm:$0xf]
      %v184 = vld [vmem:[%s165 + $0x30] sm:$0xf]
      %v185 = vld [vmem:[%s165 + $0x34] sm:$0xf]
      %v186 = vld [vmem:[%s165 + $0x38] sm:$0xf]
      %v187 = vld [vmem:[%s165 + $0x3c] sm:$0xf]
      %v188 = vld [vmem:[%s165 + $0x40] sm:$0xf]
      %v189 = vld [vmem:[%s165 + $0x44] sm:$0xf]
      %v190 = vld [vmem:[%s165 + $0x48] sm:$0xf]
      %v191 = vld [vmem:[%s165 + $0x4c] sm:$0xf]
      %v192 = vld [vmem:[%s165 + $0x50] sm:$0xf]
      %v193 = vld [vmem:[%s165 + $0x54] sm:$0xf]
      %v194 = vld [vmem:[%s165 + $0x58] sm:$0xf]
      %v195 = vld [vmem:[%s165 + $0x5c] sm:$0xf]
      %v196 = vld [vmem:[%s165 + $0x60] sm:$0xf]
      %v197 = vld [vmem:[%s165 + $0x64] sm:$0xf]
      %v198 = vld [vmem:[%s165 + $0x68] sm:$0xf]
      %v199 = vld [vmem:[%s165 + $0x6c] sm:$0xf]
      %v200 = vld [vmem:[%s165 + $0x70] sm:$0xf]
      %v201 = vld [vmem:[%s165 + $0x74] sm:$0xf]
      %v202 = vld [vmem:[%s165 + $0x78] sm:$0xf]
      %v203 = vld [vmem:[%s165 + $0x7c] sm:$0xf]
      %v204 = vld [vmem:[%s165 + $0x80] sm:$0xf]
      %v205 = vld [vmem:[%s165 + $0x84] sm:$0xf]
      %v206 = vld [vmem:[%s165 + $0x88] sm:$0xf]
      %v207 = vld [vmem:[%s165 + $0x8c] sm:$0xf]
      %v208 = vld [vmem:[%s165 + $0x90] sm:$0xf]
      %v209 = vld [vmem:[%s165 + $0x94] sm:$0xf]
      %v210 = vld [vmem:[%s165 + $0x98] sm:$0xf]
      %v211 = vld [vmem:[%s165 + $0x9c] sm:$0xf]
      %v212 = vld [vmem:[%s165 + $0xa0] sm:$0xf]
      %v213 = vld [vmem:[%s165 + $0xa4] sm:$0xf]
      %v214 = vld [vmem:[%s165 + $0xa8] sm:$0xf]
      %v215 = vld [vmem:[%s165 + $0xac] sm:$0xf]
      %v216 = vld [vmem:[%s165 + $0xb0] sm:$0xf]
      %v217 = vld [vmem:[%s165 + $0xb4] sm:$0xf]
      %v218 = vld [vmem:[%s165 + $0xb8] sm:$0xf]
      %v219 = vld [vmem:[%s165 + $0xbc] sm:$0xf]
      %v220 = vld [vmem:[%s165 + $0xc0] sm:$0xf]
      %v221 = vld [vmem:[%s165 + $0xc4] sm:$0xf]
      %v222 = vld [vmem:[%s165 + $0xc8] sm:$0xf]
      %v223 = vld [vmem:[%s165 + $0xcc] sm:$0xf]
      %v224 = vld [vmem:[%s165 + $0xd0] sm:$0xf]
      %v225 = vld [vmem:[%s165 + $0xd4] sm:$0xf]
      %v226 = vld [vmem:[%s165 + $0xd8] sm:$0xf]
      %v227 = vld [vmem:[%s165 + $0xdc] sm:$0xf]
      %v228 = vld [vmem:[%s165 + $0xe0] sm:$0xf]
      %v229 = vld [vmem:[%s165 + $0xe4] sm:$0xf]
      %v230 = vld [vmem:[%s165 + $0xe8] sm:$0xf]
      %v231 = vld [vmem:[%s165 + $0xec] sm:$0xf]
      %v232 = vld [vmem:[%s165 + $0xf0] sm:$0xf]
      %v233 = vld [vmem:[%s165 + $0xf4] sm:$0xf]
      %v234 = vld [vmem:[%s165 + $0xf8] sm:$0xf]
      %v235 = vld [vmem:[%s165 + $0xfc] sm:$0xf]
      %v236 = vld [vmem:[%s165 + $0x100] sm:$0xf]
      %v237 = vld [vmem:[%s165 + $0x104] sm:$0xf]
      %v238 = vld [vmem:[%s165 + $0x108] sm:$0xf]
      %v239 = vld [vmem:[%s165 + $0x10c] sm:$0xf]
      %v240 = vld [vmem:[%s165 + $0x110] sm:$0xf]
      %v241 = vld [vmem:[%s165 + $0x114] sm:$0xf]
      %v242 = vld [vmem:[%s165 + $0x118] sm:$0xf]
      %v243 = vld [vmem:[%s165 + $0x11c] sm:$0xf]
      %v244 = vld [vmem:[%s165 + $0x120] sm:$0xf]
      %v245 = vld [vmem:[%s165 + $0x124] sm:$0xf]
      %v246 = vld [vmem:[%s165 + $0x128] sm:$0xf]
      %v247 = vld [vmem:[%s165 + $0x12c] sm:$0xf]
      %v248 = vld [vmem:[%s165 + $0x130] sm:$0xf]
      %v249 = vld [vmem:[%s165 + $0x134] sm:$0xf]
      %v250 = vld [vmem:[%s165 + $0x138] sm:$0xf]
      %v251 = vld [vmem:[%s165 + $0x13c] sm:$0xf]
      %v252 = vld [vmem:[%s165 + $0x140] sm:$0xf]
      %v253 = vld [vmem:[%s165 + $0x144] sm:$0xf]
      %v254 = vld [vmem:[%s165 + $0x148] sm:$0xf]
      %v255 = vld [vmem:[%s165 + $0x14c] sm:$0xf]
      %v256 = vld [vmem:[%s165 + $0x150] sm:$0xf]
      %v257 = vld [vmem:[%s165 + $0x154] sm:$0xf]
      %v258 = vld [vmem:[%s165 + $0x158] sm:$0xf]
      %v259 = vld [vmem:[%s165 + $0x15c] sm:$0xf]
      %v260 = vld [vmem:[%s165 + $0x160] sm:$0xf]
      %v261 = vld [vmem:[%s165 + $0x164] sm:$0xf]
      %v262 = vld [vmem:[%s165 + $0x168] sm:$0xf]
      %v263 = vld [vmem:[%s165 + $0x16c] sm:$0xf]
      %v264 = vld [vmem:[%s165 + $0x170] sm:$0xf]
      %v265 = vld [vmem:[%s165 + $0x174] sm:$0xf]
      %v266 = vld [vmem:[%s165 + $0x178] sm:$0xf]
      %v267 = vld [vmem:[%s165 + $0x17c] sm:$0xf]
      %v268 = vld [vmem:[%s165 + $0x180] sm:$0xf]
      %v269 = vld [vmem:[%s165 + $0x184] sm:$0xf]
      %v270 = vld [vmem:[%s165 + $0x188] sm:$0xf]
      %v271 = vld [vmem:[%s165 + $0x18c] sm:$0xf]
      %v272 = vld [vmem:[%s165 + $0x190] sm:$0xf]
      %v273 = vld [vmem:[%s165 + $0x194] sm:$0xf]
      %v274 = vld [vmem:[%s165 + $0x198] sm:$0xf]
      %v275 = vld [vmem:[%s165 + $0x19c] sm:$0xf]
      %v276 = vld [vmem:[%s165 + $0x1a0] sm:$0xf]
      %v277 = vld [vmem:[%s165 + $0x1a4] sm:$0xf]
      %v278 = vld [vmem:[%s165 + $0x1a8] sm:$0xf]
      %v279 = vld [vmem:[%s165 + $0x1ac] sm:$0xf]
      %v280 = vld [vmem:[%s165 + $0x1b0] sm:$0xf]
      %v281 = vld [vmem:[%s165 + $0x1b4] sm:$0xf]
      %v282 = vld [vmem:[%s165 + $0x1b8] sm:$0xf]
      %v283 = vld [vmem:[%s165 + $0x1bc] sm:$0xf]
      %v284 = vld [vmem:[%s165 + $0x1c0] sm:$0xf]
      %v285 = vld [vmem:[%s165 + $0x1c4] sm:$0xf]
      %v286 = vld [vmem:[%s165 + $0x1c8] sm:$0xf]
      %v287 = vld [vmem:[%s165 + $0x1cc] sm:$0xf]
      %v288 = vld [vmem:[%s165 + $0x1d0] sm:$0xf]
      %v289 = vld [vmem:[%s165 + $0x1d4] sm:$0xf]
      %v290 = vld [vmem:[%s165 + $0x1d8] sm:$0xf]
      %v291 = vld [vmem:[%s165 + $0x1dc] sm:$0xf]
      %v292 = vld [vmem:[%s165 + $0x1e0] sm:$0xf]
      %v293 = vld [vmem:[%s165 + $0x1e4] sm:$0xf]
      %v294 = vld [vmem:[%s165 + $0x1e8] sm:$0xf]
      %v295 = vld [vmem:[%s165 + $0x1ec] sm:$0xf]
      %v296 = vld [vmem:[%s165 + $0x1f0] sm:$0xf]
      %v297 = vld [vmem:[%s165 + $0x1f4] sm:$0xf]
      %v298 = vld [vmem:[%s165 + $0x1f8] sm:$0xf]
      %v299 = vld [vmem:[%s165 + $0x1fc] sm:$0xf]
      %v300 = vld [vmem:[%s165 + $0x200] sm:$0xf]
      %v301 = vld [vmem:[%s165 + $0x204] sm:$0xf]
      %v302 = vld [vmem:[%s165 + $0x208] sm:$0xf]
      %v303 = vld [vmem:[%s165 + $0x20c] sm:$0xf]
      %v304 = vld [vmem:[%s165 + $0x210] sm:$0xf]
      %v305 = vld [vmem:[%s165 + $0x214] sm:$0xf]
      %v306 = vld [vmem:[%s165 + $0x218] sm:$0xf]
      %v307 = vld [vmem:[%s165 + $0x21c] sm:$0xf]
      %v308 = vld [vmem:[%s165 + $0x220] sm:$0xf]
      %v309 = vld [vmem:[%s165 + $0x224] sm:$0xf]
      %v310 = vld [vmem:[%s165 + $0x228] sm:$0xf]
      %v311 = vld [vmem:[%s165 + $0x22c] sm:$0xf]
      %v312 = vld [vmem:[%s165 + $0x230] sm:$0xf]
      %v313 = vld [vmem:[%s165 + $0x234] sm:$0xf]
      %v314 = vld [vmem:[%s165 + $0x238] sm:$0xf]
      %v315 = vld [vmem:[%s165 + $0x23c] sm:$0xf]
      %v316 = vld [vmem:[%s165 + $0x240] sm:$0xf]
      %v317 = vld [vmem:[%s165 + $0x244] sm:$0xf]
      %v318 = vld [vmem:[%s165 + $0x248] sm:$0xf]
      %v319 = vld [vmem:[%s165 + $0x24c] sm:$0xf]
      %v320 = vld [vmem:[%s165 + $0x250] sm:$0xf]
      %v321 = vld [vmem:[%s165 + $0x254] sm:$0xf]
      %v322 = vld [vmem:[%s165 + $0x258] sm:$0xf]
      %v323 = vld [vmem:[%s165 + $0x25c] sm:$0xf]
      %v324 = vld [vmem:[%s165 + $0x260] sm:$0xf]
      %v325 = vld [vmem:[%s165 + $0x264] sm:$0xf]
      %v326 = vld [vmem:[%s165 + $0x268] sm:$0xf]
      %v327 = vld [vmem:[%s165 + $0x26c] sm:$0xf]
      %v328 = vld [vmem:[%s165 + $0x270] sm:$0xf]
      %v329 = vld [vmem:[%s165 + $0x274] sm:$0xf]
      %v330 = vld [vmem:[%s165 + $0x278] sm:$0xf]
      %v331 = vld [vmem:[%s165 + $0x27c] sm:$0xf]
      %v332 = vld [vmem:[%s165 + $0x280] sm:$0xf]
      %v333 = vld [vmem:[%s165 + $0x284] sm:$0xf]
      %v334 = vld [vmem:[%s165 + $0x288] sm:$0xf]
      %v335 = vld [vmem:[%s165 + $0x28c] sm:$0xf]
      %v336 = vld [vmem:[%s165 + $0x290] sm:$0xf]
      %v337 = vld [vmem:[%s165 + $0x294] sm:$0xf]
      %v338 = vld [vmem:[%s165 + $0x298] sm:$0xf]
      %v339 = vld [vmem:[%s165 + $0x29c] sm:$0xf]
      %v340 = vld [vmem:[%s165 + $0x2a0] sm:$0xf]
      %v341 = vld [vmem:[%s165 + $0x2a4] sm:$0xf]
      %v342 = vld [vmem:[%s165 + $0x2a8] sm:$0xf]
      %v343 = vld [vmem:[%s165 + $0x2ac] sm:$0xf]
      %v344 = vld [vmem:[%s165 + $0x2b0] sm:$0xf]
      %v345 = vld [vmem:[%s165 + $0x2b4] sm:$0xf]
      %v346 = vld [vmem:[%s165 + $0x2b8] sm:$0xf]
      %v347 = vld [vmem:[%s165 + $0x2bc] sm:$0xf]
      %v348 = vld [vmem:[%s165 + $0x2c0] sm:$0xf]
      %v349 = vld [vmem:[%s165 + $0x2c4] sm:$0xf]
      %v350 = vld [vmem:[%s165 + $0x2c8] sm:$0xf]
      %v351 = vld [vmem:[%s165 + $0x2cc] sm:$0xf]
      %v352 = vld [vmem:[%s165 + $0x2d0] sm:$0xf]
      %v353 = vld [vmem:[%s165 + $0x2d4] sm:$0xf]
      %v354 = vld [vmem:[%s165 + $0x2d8] sm:$0xf]
      %v355 = vld [vmem:[%s165 + $0x2dc] sm:$0xf]
      %v356 = vld [vmem:[%s165 + $0x2e0] sm:$0xf]
      %v357 = vld [vmem:[%s165 + $0x2e4] sm:$0xf]
      %v358 = vld [vmem:[%s165 + $0x2e8] sm:$0xf]
      %v359 = vld [vmem:[%s165 + $0x2ec] sm:$0xf]
      %v360 = vld [vmem:[%s165 + $0x2f0] sm:$0xf]
      %v361 = vld [vmem:[%s165 + $0x2f4] sm:$0xf]
      %v362 = vld [vmem:[%s165 + $0x2f8] sm:$0xf]
      %v363 = vld [vmem:[%s165 + $0x2fc] sm:$0xf]
      %v364 = vld [vmem:[%s165 + $0x300] sm:$0xf]
      %v365 = vld [vmem:[%s165 + $0x304] sm:$0xf]
      %v366 = vld [vmem:[%s165 + $0x308] sm:$0xf]
      %v367 = vld [vmem:[%s165 + $0x30c] sm:$0xf]
      %v368 = vld [vmem:[%s165 + $0x310] sm:$0xf]
      %v369 = vld [vmem:[%s165 + $0x314] sm:$0xf]
      %v370 = vld [vmem:[%s165 + $0x318] sm:$0xf]
      %v371 = vld [vmem:[%s165 + $0x31c] sm:$0xf]
      %v372 = vld [vmem:[%s165 + $0x320] sm:$0xf]
      %v373 = vld [vmem:[%s165 + $0x324] sm:$0xf]
      %v374 = vld [vmem:[%s165 + $0x328] sm:$0xf]
      %v375 = vld [vmem:[%s165 + $0x32c] sm:$0xf]
      %v376 = vld [vmem:[%s165 + $0x330] sm:$0xf]
      %v377 = vld [vmem:[%s165 + $0x334] sm:$0xf]
      %v378 = vld [vmem:[%s165 + $0x338] sm:$0xf]
      %v379 = vld [vmem:[%s165 + $0x33c] sm:$0xf]
      %v380 = vld [vmem:[%s165 + $0x340] sm:$0xf]
      %v381 = vld [vmem:[%s165 + $0x344] sm:$0xf]
      %v382 = vld [vmem:[%s165 + $0x348] sm:$0xf]
      %v383 = vld [vmem:[%s165 + $0x34c] sm:$0xf]
      %v384 = vld [vmem:[%s165 + $0x350] sm:$0xf]
      %v385 = vld [vmem:[%s165 + $0x354] sm:$0xf]
      %v386 = vld [vmem:[%s165 + $0x358] sm:$0xf]
      %v387 = vld [vmem:[%s165 + $0x35c] sm:$0xf]
      %v388 = vld [vmem:[%s165 + $0x360] sm:$0xf]
      %v389 = vld [vmem:[%s165 + $0x364] sm:$0xf]
      %v390 = vld [vmem:[%s165 + $0x368] sm:$0xf]
      %v391 = vld [vmem:[%s165 + $0x36c] sm:$0xf]
      %v392 = vld [vmem:[%s165 + $0x370] sm:$0xf]
      %v393 = vld [vmem:[%s165 + $0x374] sm:$0xf]
      %v394 = vld [vmem:[%s165 + $0x378] sm:$0xf]
      %v395 = vld [vmem:[%s165 + $0x37c] sm:$0xf]
      %v396 = vld [vmem:[%s165 + $0x380] sm:$0xf]
      %v397 = vld [vmem:[%s165 + $0x384] sm:$0xf]
      %v398 = vld [vmem:[%s165 + $0x388] sm:$0xf]
      %v399 = vld [vmem:[%s165 + $0x38c] sm:$0xf]
      %v400 = vld [vmem:[%s165 + $0x390] sm:$0xf]
      %v401 = vld [vmem:[%s165 + $0x394] sm:$0xf]
      %v402 = vld [vmem:[%s165 + $0x398] sm:$0xf]
      %v403 = vld [vmem:[%s165 + $0x39c] sm:$0xf]
      %v404 = vld [vmem:[%s165 + $0x3a0] sm:$0xf]
      %v405 = vld [vmem:[%s165 + $0x3a4] sm:$0xf]
      %v406 = vld [vmem:[%s165 + $0x3a8] sm:$0xf]
      %v407 = vld [vmem:[%s165 + $0x3ac] sm:$0xf]
      %v408 = vld [vmem:[%s165 + $0x3b0] sm:$0xf]
      %v409 = vld [vmem:[%s165 + $0x3b4] sm:$0xf]
      %v410 = vld [vmem:[%s165 + $0x3b8] sm:$0xf]
      %v411 = vld [vmem:[%s165 + $0x3bc] sm:$0xf]
      %v412 = vld [vmem:[%s165 + $0x3c0] sm:$0xf]
      %v413 = vld [vmem:[%s165 + $0x3c4] sm:$0xf]
      %v414 = vld [vmem:[%s165 + $0x3c8] sm:$0xf]
      %v415 = vld [vmem:[%s165 + $0x3cc] sm:$0xf]
      %v416 = vld [vmem:[%s165 + $0x3d0] sm:$0xf]
      %v417 = vld [vmem:[%s165 + $0x3d4] sm:$0xf]
      %v418 = vld [vmem:[%s165 + $0x3d8] sm:$0xf]
      %v419 = vld [vmem:[%s165 + $0x3dc] sm:$0xf]
      %v420 = vld [vmem:[%s165 + $0x3e0] sm:$0xf]
      %v421 = vld [vmem:[%s165 + $0x3e4] sm:$0xf]
      %v422 = vld [vmem:[%s165 + $0x3e8] sm:$0xf]
      %v423 = vld [vmem:[%s165 + $0x3ec] sm:$0xf]
      %v424 = vld [vmem:[%s165 + $0x3f0] sm:$0xf]
      %v425 = vld [vmem:[%s165 + $0x3f4] sm:$0xf]
      %v426 = vld [vmem:[%s165 + $0x3f8] sm:$0xf]
      %v427 = vld [vmem:[%s165 + $0x3fc] sm:$0xf]
      %v428 = vld [vmem:[%s165 + $0x400] sm:$0xf]
      %v429 = vld [vmem:[%s165 + $0x404] sm:$0xf]
      %v430 = vld [vmem:[%s165 + $0x408] sm:$0xf]
      %v431 = vld [vmem:[%s165 + $0x40c] sm:$0xf]
      %v432 = vld [vmem:[%s165 + $0x410] sm:$0xf]
      %v433 = vld [vmem:[%s165 + $0x414] sm:$0xf]
      %v434 = vld [vmem:[%s165 + $0x418] sm:$0xf]
      %v435 = vld [vmem:[%s165 + $0x41c] sm:$0xf]
      %v436 = vld [vmem:[%s165 + $0x420] sm:$0xf]
      %v437 = vld [vmem:[%s165 + $0x424] sm:$0xf]
      %v438 = vld [vmem:[%s165 + $0x428] sm:$0xf]
      %v439 = vld [vmem:[%s165 + $0x42c] sm:$0xf]
      %v440 = vld [vmem:[%s165 + $0x430] sm:$0xf]
      %v441 = vld [vmem:[%s165 + $0x434] sm:$0xf]
      %v442 = vld [vmem:[%s165 + $0x438] sm:$0xf]
      %v443 = vld [vmem:[%s165 + $0x43c] sm:$0xf]
      %v444 = vld [vmem:[%s165 + $0x440] sm:$0xf]
      %v445 = vld [vmem:[%s165 + $0x444] sm:$0xf]
      %v446 = vld [vmem:[%s165 + $0x448] sm:$0xf]
      %v447 = vld [vmem:[%s165 + $0x44c] sm:$0xf]
      %v448 = vld [vmem:[%s165 + $0x450] sm:$0xf]
      %v449 = vld [vmem:[%s165 + $0x454] sm:$0xf]
      %v450 = vld [vmem:[%s165 + $0x458] sm:$0xf]
      %v451 = vld [vmem:[%s165 + $0x45c] sm:$0xf]
      %v452 = vld [vmem:[%s165 + $0x460] sm:$0xf]
      %v453 = vld [vmem:[%s165 + $0x464] sm:$0xf]
      %v454 = vld [vmem:[%s165 + $0x468] sm:$0xf]
      %v455 = vld [vmem:[%s165 + $0x46c] sm:$0xf]
      %v456 = vld [vmem:[%s165 + $0x470] sm:$0xf]
      %v457 = vld [vmem:[%s165 + $0x474] sm:$0xf]
      %v458 = vld [vmem:[%s165 + $0x478] sm:$0xf]
      %v459 = vld [vmem:[%s165 + $0x47c] sm:$0xf]
      %v460 = vld [vmem:[%s165 + $0x480] sm:$0xf]
      %v461 = vld [vmem:[%s165 + $0x484] sm:$0xf]
      %v462 = vld [vmem:[%s165 + $0x488] sm:$0xf]
      %v463 = vld [vmem:[%s165 + $0x48c] sm:$0xf]
      %v464 = vld [vmem:[%s165 + $0x490] sm:$0xf]
      %v465 = vld [vmem:[%s165 + $0x494] sm:$0xf]
      %v466 = vld [vmem:[%s165 + $0x498] sm:$0xf]
      %v467 = vld [vmem:[%s165 + $0x49c] sm:$0xf]
      %v468 = vld [vmem:[%s165 + $0x4a0] sm:$0xf]
      %v469 = vld [vmem:[%s165 + $0x4a4] sm:$0xf]
      %v470 = vld [vmem:[%s165 + $0x4a8] sm:$0xf]
      %v471 = vld [vmem:[%s165 + $0x4ac] sm:$0xf]
      %v472 = vld [vmem:[%s165 + $0x4b0] sm:$0xf]
      %v473 = vld [vmem:[%s165 + $0x4b4] sm:$0xf]
      %v474 = vld [vmem:[%s165 + $0x4b8] sm:$0xf]
      %v475 = vld [vmem:[%s165 + $0x4bc] sm:$0xf]
      %v476 = vld [vmem:[%s165 + $0x4c0] sm:$0xf]
      %v477 = vld [vmem:[%s165 + $0x4c4] sm:$0xf]
      %v478 = vld [vmem:[%s165 + $0x4c8] sm:$0xf]
      %v479 = vld [vmem:[%s165 + $0x4cc] sm:$0xf]
      %v480 = vld [vmem:[%s165 + $0x4d0] sm:$0xf]
      %v481 = vld [vmem:[%s165 + $0x4d4] sm:$0xf]
      %v482 = vld [vmem:[%s165 + $0x4d8] sm:$0xf]
      %v483 = vld [vmem:[%s165 + $0x4dc] sm:$0xf]
      %v484 = vld [vmem:[%s165 + $0x4e0] sm:$0xf]
      %v485 = vld [vmem:[%s165 + $0x4e4] sm:$0xf]
      %v486 = vld [vmem:[%s165 + $0x4e8] sm:$0xf]
      %v487 = vld [vmem:[%s165 + $0x4ec] sm:$0xf]
      %v488 = vld [vmem:[%s165 + $0x4f0] sm:$0xf]
      %v489 = vld [vmem:[%s165 + $0x4f4] sm:$0xf]
      %v490 = vld [vmem:[%s165 + $0x4f8] sm:$0xf]
      %v491 = vld [vmem:[%s165 + $0x4fc] sm:$0xf]
      %v492 = vld [vmem:[%s165 + $0x500] sm:$0xf]
      %v493 = vld [vmem:[%s165 + $0x504] sm:$0xf]
      %v494 = vld [vmem:[%s165 + $0x508] sm:$0xf]
      %v495 = vld [vmem:[%s165 + $0x50c] sm:$0xf]
      %v496 = vld [vmem:[%s165 + $0x510] sm:$0xf]
      %v497 = vld [vmem:[%s165 + $0x514] sm:$0xf]
      %v498 = vld [vmem:[%s165 + $0x518] sm:$0xf]
      %v499 = vld [vmem:[%s165 + $0x51c] sm:$0xf]
      %v500 = vld [vmem:[%s165 + $0x520] sm:$0xf]
      %v501 = vld [vmem:[%s165 + $0x524] sm:$0xf]
      %v502 = vld [vmem:[%s165 + $0x528] sm:$0xf]
      %v503 = vld [vmem:[%s165 + $0x52c] sm:$0xf]
      %v504 = vld [vmem:[%s165 + $0x530] sm:$0xf]
      %v505 = vld [vmem:[%s165 + $0x534] sm:$0xf]
      %v506 = vld [vmem:[%s165 + $0x538] sm:$0xf]
      %v507 = vld [vmem:[%s165 + $0x53c] sm:$0xf]
      %v508 = vld [vmem:[%s165 + $0x540] sm:$0xf]
      %v509 = vld [vmem:[%s165 + $0x544] sm:$0xf]
      %v510 = vld [vmem:[%s165 + $0x548] sm:$0xf]
      %v511 = vld [vmem:[%s165 + $0x54c] sm:$0xf]
      %v512 = vld [vmem:[%s165 + $0x550] sm:$0xf]
      %v513 = vld [vmem:[%s165 + $0x554] sm:$0xf]
      %v514 = vld [vmem:[%s165 + $0x558] sm:$0xf]
      %v515 = vld [vmem:[%s165 + $0x55c] sm:$0xf]
      %v516 = vld [vmem:[%s165 + $0x560] sm:$0xf]
      %v517 = vld [vmem:[%s165 + $0x564] sm:$0xf]
      %v518 = vld [vmem:[%s165 + $0x568] sm:$0xf]
      %v519 = vld [vmem:[%s165 + $0x56c] sm:$0xf]
      %v520 = vld [vmem:[%s165 + $0x570] sm:$0xf]
      %v521 = vld [vmem:[%s165 + $0x574] sm:$0xf]
      %v522 = vld [vmem:[%s165 + $0x578] sm:$0xf]
      %v523 = vld [vmem:[%s165 + $0x57c] sm:$0xf]
      %v524 = vld [vmem:[%s165 + $0x580] sm:$0xf]
      %v525 = vld [vmem:[%s165 + $0x584] sm:$0xf]
      %v526 = vld [vmem:[%s165 + $0x588] sm:$0xf]
      %v527 = vld [vmem:[%s165 + $0x58c] sm:$0xf]
      %v528 = vld [vmem:[%s165 + $0x590] sm:$0xf]
      %v529 = vld [vmem:[%s165 + $0x594] sm:$0xf]
      %v530 = vld [vmem:[%s165 + $0x598] sm:$0xf]
      %v531 = vld [vmem:[%s165 + $0x59c] sm:$0xf]
      %v532 = vld [vmem:[%s165 + $0x5a0] sm:$0xf]
      %v533 = vld [vmem:[%s165 + $0x5a4] sm:$0xf]
      %v534 = vld [vmem:[%s165 + $0x5a8] sm:$0xf]
      %v535 = vld [vmem:[%s165 + $0x5ac] sm:$0xf]
      %v536 = vld [vmem:[%s165 + $0x5b0] sm:$0xf]
      %v537 = vld [vmem:[%s165 + $0x5b4] sm:$0xf]
      %v538 = vld [vmem:[%s165 + $0x5b8] sm:$0xf]
      %v539 = vld [vmem:[%s165 + $0x5bc] sm:$0xf]
      %v540 = vld [vmem:[%s165 + $0x5c0] sm:$0xf]
      %v541 = vld [vmem:[%s165 + $0x5c4] sm:$0xf]
      %v542 = vld [vmem:[%s165 + $0x5c8] sm:$0xf]
      %v543 = vld [vmem:[%s165 + $0x5cc] sm:$0xf]
      %v544 = vld [vmem:[%s165 + $0x5d0] sm:$0xf]
      %v545 = vld [vmem:[%s165 + $0x5d4] sm:$0xf]
      %v546 = vld [vmem:[%s165 + $0x5d8] sm:$0xf]
      %v547 = vld [vmem:[%s165 + $0x5dc] sm:$0xf]
      %v548 = vld [vmem:[%s165 + $0x5e0] sm:$0xf]
      %v549 = vld [vmem:[%s165 + $0x5e4] sm:$0xf]
      %v550 = vld [vmem:[%s165 + $0x5e8] sm:$0xf]
      %v551 = vld [vmem:[%s165 + $0x5ec] sm:$0xf]
      %v552 = vld [vmem:[%s165 + $0x5f0] sm:$0xf]
      %v553 = vld [vmem:[%s165 + $0x5f4] sm:$0xf]
      %v554 = vld [vmem:[%s165 + $0x5f8] sm:$0xf]
      %v555 = vld [vmem:[%s165 + $0x5fc] sm:$0xf]
      %v556 = vld [vmem:[%s165 + $0x600] sm:$0xf]
      %v557 = vld [vmem:[%s165 + $0x604] sm:$0xf]
      %v558 = vld [vmem:[%s165 + $0x608] sm:$0xf]
      %v559 = vld [vmem:[%s165 + $0x60c] sm:$0xf]
      %v560 = vld [vmem:[%s165 + $0x610] sm:$0xf]
      %v561 = vld [vmem:[%s165 + $0x614] sm:$0xf]
      %v562 = vld [vmem:[%s165 + $0x618] sm:$0xf]
      %v563 = vld [vmem:[%s165 + $0x61c] sm:$0xf]
      %v564 = vld [vmem:[%s165 + $0x620] sm:$0xf]
      %v565 = vld [vmem:[%s165 + $0x624] sm:$0xf]
      %v566 = vld [vmem:[%s165 + $0x628] sm:$0xf]
      %v567 = vld [vmem:[%s165 + $0x62c] sm:$0xf]
      %v568 = vld [vmem:[%s165 + $0x630] sm:$0xf]
      %v569 = vld [vmem:[%s165 + $0x634] sm:$0xf]
      %v570 = vld [vmem:[%s165 + $0x638] sm:$0xf]
      %v571 = vld [vmem:[%s165 + $0x63c] sm:$0xf]
      %v572 = vld [vmem:[%s165 + $0x640] sm:$0xf]
      %v573 = vld [vmem:[%s165 + $0x644] sm:$0xf]
      %v574 = vld [vmem:[%s165 + $0x648] sm:$0xf]
      %v575 = vld [vmem:[%s165 + $0x64c] sm:$0xf]
      %v576 = vld [vmem:[%s165 + $0x650] sm:$0xf]
      %v577 = vld [vmem:[%s165 + $0x654] sm:$0xf]
      %v578 = vld [vmem:[%s165 + $0x658] sm:$0xf]
      %v579 = vld [vmem:[%s165 + $0x65c] sm:$0xf]
      %v580 = vld [vmem:[%s165 + $0x660] sm:$0xf]
      %v581 = vld [vmem:[%s165 + $0x664] sm:$0xf]
      %v582 = vld [vmem:[%s165 + $0x668] sm:$0xf]
      %v583 = vld [vmem:[%s165 + $0x66c] sm:$0xf]
      %v584 = vld [vmem:[%s165 + $0x670] sm:$0xf]
      %v585 = vld [vmem:[%s165 + $0x674] sm:$0xf]
      %v586 = vld [vmem:[%s165 + $0x678] sm:$0xf]
      %v587 = vld [vmem:[%s165 + $0x67c] sm:$0xf]
      %v588 = vld [vmem:[%s165 + $0x680] sm:$0xf]
      %v589 = vld [vmem:[%s165 + $0x684] sm:$0xf]
      %v590 = vld [vmem:[%s165 + $0x688] sm:$0xf]
      %v591 = vld [vmem:[%s165 + $0x68c] sm:$0xf]
      %v592 = vld [vmem:[%s165 + $0x690] sm:$0x3]
      %v593 = vld [vmem:[%s1] sm:$0xf]
      %v594 = vld [vmem:[%s1 + $0x4] sm:$0xf]
      %v595 = vld [vmem:[%s1 + $0x8] sm:$0xf]
      %v596 = vld [vmem:[%s1 + $0xc] sm:$0xf]
      %v597 = vld [vmem:[%s1 + $0x10] sm:$0xf]
      %v598 = vld [vmem:[%s1 + $0x14] sm:$0xf]
      %v599 = vld [vmem:[%s1 + $0x18] sm:$0xf]
      %v600 = vld [vmem:[%s1 + $0x1c] sm:$0xf]
      %v601 = vld [vmem:[%s2] sm:$0x1]
      %v603 = vlaneseq
      %v604 = vshrl.u32 %v603, 7
      %v605 = vsub.s32 0, %v604
      %v606 = vrot.slane %v601, %v605
      %v1029 = vunpack.c.l.b16 %v172
      %v1030 = vunpack.c.l.b16 %v173
      %v1031 = vunpack.c.l.b16 %v174
      %v1032 = vunpack.c.l.b16 %v175
      %v1033 = vunpack.c.l.b16 %v176
      %v1034 = vunpack.c.l.b16 %v177
      %v1035 = vunpack.c.l.b16 %v178
      %v1036 = vunpack.c.l.b16 %v179
      %v1037 = vunpack.c.l.b16 %v180
      %v1038 = vunpack.c.l.b16 %v181
      %v1039 = vunpack.c.l.b16 %v182
      %v1040 = vunpack.c.l.b16 %v183
      %v1041 = vunpack.c.l.b16 %v184
      %v1042 = vunpack.c.l.b16 %v185
      %v1043 = vunpack.c.l.b16 %v186
      %v1044 = vunpack.c.l.b16 %v187
      %v1045 = vunpack.c.l.b16 %v188
      %v1046 = vunpack.c.l.b16 %v189
      %v1047 = vunpack.c.l.b16 %v190
      %v1048 = vunpack.c.l.b16 %v191
      %v1049 = vunpack.c.l.b16 %v192
      %v1050 = vunpack.c.l.b16 %v193
      %v1051 = vunpack.c.l.b16 %v194
      %v1052 = vunpack.c.l.b16 %v195
      %v1053 = vunpack.c.l.b16 %v196
      %v1054 = vunpack.c.l.b16 %v197
      %v1055 = vunpack.c.l.b16 %v198
      %v1056 = vunpack.c.l.b16 %v199
      %v1057 = vunpack.c.l.b16 %v200
      %v1058 = vunpack.c.l.b16 %v201
      %v1059 = vunpack.c.l.b16 %v202
      %v1060 = vunpack.c.l.b16 %v203
      %v1061 = vunpack.c.l.b16 %v204
      %v1062 = vunpack.c.l.b16 %v205
      %v1063 = vunpack.c.l.b16 %v206
      %v1064 = vunpack.c.l.b16 %v207
      %v1065 = vunpack.c.l.b16 %v208
      %v1066 = vunpack.c.l.b16 %v209
      %v1067 = vunpack.c.l.b16 %v210
      %v1068 = vunpack.c.l.b16 %v211
      %v1069 = vunpack.c.l.b16 %v212
      %v1070 = vunpack.c.l.b16 %v213
      %v1071 = vunpack.c.l.b16 %v214
      %v1072 = vunpack.c.l.b16 %v215
      %v1073 = vunpack.c.l.b16 %v216
      %v1074 = vunpack.c.l.b16 %v217
      %v1075 = vunpack.c.l.b16 %v218
      %v1076 = vunpack.c.l.b16 %v219
      %v1077 = vunpack.c.l.b16 %v220
      %v1078 = vunpack.c.l.b16 %v221
      %v1079 = vunpack.c.l.b16 %v222
      %v1080 = vunpack.c.l.b16 %v223
      %v1081 = vunpack.c.l.b16 %v224
      %v1082 = vunpack.c.l.b16 %v225
      %v1083 = vunpack.c.l.b16 %v226
      %v1084 = vunpack.c.l.b16 %v227
      %v1085 = vunpack.c.l.b16 %v228
      %v1086 = vunpack.c.l.b16 %v229
      %v1087 = vunpack.c.l.b16 %v230
      %v1088 = vunpack.c.l.b16 %v231
      %v1089 = vunpack.c.l.b16 %v232
      %v1090 = vunpack.c.l.b16 %v233
      %v1091 = vunpack.c.l.b16 %v234
      %v1092 = vunpack.c.l.b16 %v235
      %v1093 = vunpack.c.l.b16 %v236
      %v1094 = vunpack.c.l.b16 %v237
      %v1095 = vunpack.c.l.b16 %v238
      %v1096 = vunpack.c.l.b16 %v239
      %v1097 = vunpack.c.l.b16 %v240
      %v1098 = vunpack.c.l.b16 %v241
      %v1099 = vunpack.c.l.b16 %v242
      %v1100 = vunpack.c.l.b16 %v243
      %v1101 = vunpack.c.l.b16 %v244
      %v1102 = vunpack.c.l.b16 %v245
      %v1103 = vunpack.c.l.b16 %v246
      %v1104 = vunpack.c.l.b16 %v247
      %v1105 = vunpack.c.l.b16 %v248
      %v1106 = vunpack.c.l.b16 %v249
      %v1107 = vunpack.c.l.b16 %v250
      %v1108 = vunpack.c.l.b16 %v251
      %v1109 = vunpack.c.l.b16 %v252
      %v1110 = vunpack.c.l.b16 %v253
      %v1111 = vunpack.c.l.b16 %v254
      %v1112 = vunpack.c.l.b16 %v255
      %v1113 = vunpack.c.l.b16 %v256
      %v1114 = vunpack.c.l.b16 %v257
      %v1115 = vunpack.c.l.b16 %v258
      %v1116 = vunpack.c.l.b16 %v259
      %v1117 = vunpack.c.l.b16 %v260
      %v1118 = vunpack.c.l.b16 %v261
      %v1119 = vunpack.c.l.b16 %v262
      %v1120 = vunpack.c.l.b16 %v263
      %v1121 = vunpack.c.l.b16 %v264
      %v1122 = vunpack.c.l.b16 %v265
      %v1123 = vunpack.c.l.b16 %v266
      %v1124 = vunpack.c.l.b16 %v267
      %v1125 = vunpack.c.l.b16 %v268
      %v1126 = vunpack.c.l.b16 %v269
      %v1127 = vunpack.c.l.b16 %v270
      %v1128 = vunpack.c.l.b16 %v271
      %v1129 = vunpack.c.l.b16 %v272
      %v1130 = vunpack.c.l.b16 %v273
      %v1131 = vunpack.c.l.b16 %v274
      %v1132 = vunpack.c.l.b16 %v275
      %v1133 = vunpack.c.l.b16 %v276
      %v1134 = vunpack.c.l.b16 %v277
      %v1135 = vunpack.c.l.b16 %v278
      %v1136 = vunpack.c.l.b16 %v279
      %v1137 = vunpack.c.l.b16 %v280
      %v1138 = vunpack.c.l.b16 %v281
      %v1139 = vunpack.c.l.b16 %v282
      %v1140 = vunpack.c.l.b16 %v283
      %v1141 = vunpack.c.l.b16 %v284
      %v1142 = vunpack.c.l.b16 %v285
      %v1143 = vunpack.c.l.b16 %v286
      %v1144 = vunpack.c.l.b16 %v287
      %v1145 = vunpack.c.l.b16 %v288
      %v1146 = vunpack.c.l.b16 %v289
      %v1147 = vunpack.c.l.b16 %v290
      %v1148 = vunpack.c.l.b16 %v291
      %v1149 = vunpack.c.l.b16 %v292
      %v1150 = vunpack.c.l.b16 %v293
      %v1151 = vunpack.c.l.b16 %v294
      %v1152 = vunpack.c.l.b16 %v295
      %v1153 = vunpack.c.l.b16 %v296
      %v1154 = vunpack.c.l.b16 %v297
      %v1155 = vunpack.c.l.b16 %v298
      %v1156 = vunpack.c.l.b16 %v299
      %v1157 = vunpack.c.l.b16 %v300
      %v1158 = vunpack.c.l.b16 %v301
      %v1159 = vunpack.c.l.b16 %v302
      %v1160 = vunpack.c.l.b16 %v303
      %v1161 = vunpack.c.l.b16 %v304
      %v1162 = vunpack.c.l.b16 %v305
      %v1163 = vunpack.c.l.b16 %v306
      %v1164 = vunpack.c.l.b16 %v307
      %v1165 = vunpack.c.l.b16 %v308
      %v1166 = vunpack.c.l.b16 %v309
      %v1167 = vunpack.c.l.b16 %v310
      %v1168 = vunpack.c.l.b16 %v311
      %v1169 = vunpack.c.l.b16 %v312
      %v1170 = vunpack.c.l.b16 %v313
      %v1171 = vunpack.c.l.b16 %v314
      %v1172 = vunpack.c.l.b16 %v315
      %v1173 = vunpack.c.l.b16 %v316
      %v1174 = vunpack.c.l.b16 %v317
      %v1175 = vunpack.c.l.b16 %v318
      %v1176 = vunpack.c.l.b16 %v319
      %v1177 = vunpack.c.l.b16 %v320
      %v1178 = vunpack.c.l.b16 %v321
      %v1179 = vunpack.c.l.b16 %v322
      %v1180 = vunpack.c.l.b16 %v323
      %v1181 = vunpack.c.l.b16 %v324
      %v1182 = vunpack.c.l.b16 %v325
      %v1183 = vunpack.c.l.b16 %v326
      %v1184 = vunpack.c.l.b16 %v327
      %v1185 = vunpack.c.l.b16 %v328
      %v1186 = vunpack.c.l.b16 %v329
      %v1187 = vunpack.c.l.b16 %v330
      %v1188 = vunpack.c.l.b16 %v331
      %v1189 = vunpack.c.l.b16 %v332
      %v1190 = vunpack.c.l.b16 %v333
      %v1191 = vunpack.c.l.b16 %v334
      %v1192 = vunpack.c.l.b16 %v335
      %v1193 = vunpack.c.l.b16 %v336
      %v1194 = vunpack.c.l.b16 %v337
      %v1195 = vunpack.c.l.b16 %v338
      %v1196 = vunpack.c.l.b16 %v339
      %v1197 = vunpack.c.l.b16 %v340
      %v1198 = vunpack.c.l.b16 %v341
      %v1199 = vunpack.c.l.b16 %v342
      %v1200 = vunpack.c.l.b16 %v343
      %v1201 = vunpack.c.l.b16 %v344
      %v1202 = vunpack.c.l.b16 %v345
      %v1203 = vunpack.c.l.b16 %v346
      %v1204 = vunpack.c.l.b16 %v347
      %v1205 = vunpack.c.l.b16 %v348
      %v1206 = vunpack.c.l.b16 %v349
      %v1207 = vunpack.c.l.b16 %v350
      %v1208 = vunpack.c.l.b16 %v351
      %v1209 = vunpack.c.l.b16 %v352
      %v1210 = vunpack.c.l.b16 %v353
      %v1211 = vunpack.c.l.b16 %v354
      %v1212 = vunpack.c.l.b16 %v355
      %v1213 = vunpack.c.l.b16 %v356
      %v1214 = vunpack.c.l.b16 %v357
      %v1215 = vunpack.c.l.b16 %v358
      %v1216 = vunpack.c.l.b16 %v359
      %v1217 = vunpack.c.l.b16 %v360
      %v1218 = vunpack.c.l.b16 %v361
      %v1219 = vunpack.c.l.b16 %v362
      %v1220 = vunpack.c.l.b16 %v363
      %v1221 = vunpack.c.l.b16 %v364
      %v1222 = vunpack.c.l.b16 %v365
      %v1223 = vunpack.c.l.b16 %v366
      %v1224 = vunpack.c.l.b16 %v367
      %v1225 = vunpack.c.l.b16 %v368
      %v1226 = vunpack.c.l.b16 %v369
      %v1227 = vunpack.c.l.b16 %v370
      %v1228 = vunpack.c.l.b16 %v371
      %v1229 = vunpack.c.l.b16 %v372
      %v1230 = vunpack.c.l.b16 %v373
      %v1231 = vunpack.c.l.b16 %v374
      %v1232 = vunpack.c.l.b16 %v375
      %v1233 = vunpack.c.l.b16 %v376
      %v1234 = vunpack.c.l.b16 %v377
      %v1235 = vunpack.c.l.b16 %v378
      %v1236 = vunpack.c.l.b16 %v379
      %v1237 = vunpack.c.l.b16 %v380
      %v1238 = vunpack.c.l.b16 %v381
      %v1239 = vunpack.c.l.b16 %v382
      %v1240 = vunpack.c.l.b16 %v383
      %v1241 = vunpack.c.l.b16 %v384
      %v1242 = vunpack.c.l.b16 %v385
      %v1243 = vunpack.c.l.b16 %v386
      %v1244 = vunpack.c.l.b16 %v387
      %v1245 = vunpack.c.l.b16 %v388
      %v1246 = vunpack.c.l.b16 %v389
      %v1247 = vunpack.c.l.b16 %v390
      %v1248 = vunpack.c.l.b16 %v391
      %v1249 = vunpack.c.l.b16 %v392
      %v1250 = vunpack.c.l.b16 %v393
      %v1251 = vunpack.c.l.b16 %v394
      %v1252 = vunpack.c.l.b16 %v395
      %v1253 = vunpack.c.l.b16 %v396
      %v1254 = vunpack.c.l.b16 %v397
      %v1255 = vunpack.c.l.b16 %v398
      %v1256 = vunpack.c.l.b16 %v399
      %v1257 = vunpack.c.l.b16 %v400
      %v1258 = vunpack.c.l.b16 %v401
      %v1259 = vunpack.c.l.b16 %v402
      %v1260 = vunpack.c.l.b16 %v403
      %v1261 = vunpack.c.l.b16 %v404
      %v1262 = vunpack.c.l.b16 %v405
      %v1263 = vunpack.c.l.b16 %v406
      %v1264 = vunpack.c.l.b16 %v407
      %v1265 = vunpack.c.l.b16 %v408
      %v1266 = vunpack.c.l.b16 %v409
      %v1267 = vunpack.c.l.b16 %v410
      %v1268 = vunpack.c.l.b16 %v411
      %v1269 = vunpack.c.l.b16 %v412
      %v1270 = vunpack.c.l.b16 %v413
      %v1271 = vunpack.c.l.b16 %v414
      %v1272 = vunpack.c.l.b16 %v415
      %v1273 = vunpack.c.l.b16 %v416
      %v1274 = vunpack.c.l.b16 %v417
      %v1275 = vunpack.c.l.b16 %v418
      %v1276 = vunpack.c.l.b16 %v419
      %v1277 = vunpack.c.l.b16 %v420
      %v1278 = vunpack.c.l.b16 %v421
      %v1279 = vunpack.c.l.b16 %v422
      %v1280 = vunpack.c.l.b16 %v423
      %v1281 = vunpack.c.l.b16 %v424
      %v1282 = vunpack.c.l.b16 %v425
      %v1283 = vunpack.c.l.b16 %v426
      %v1284 = vunpack.c.l.b16 %v427
      %v1285 = vunpack.c.l.b16 %v428
      %v1286 = vunpack.c.l.b16 %v429
      %v1287 = vunpack.c.l.b16 %v430
      %v1288 = vunpack.c.l.b16 %v431
      %v1289 = vunpack.c.l.b16 %v432
      %v1290 = vunpack.c.l.b16 %v433
      %v1291 = vunpack.c.l.b16 %v434
      %v1292 = vunpack.c.l.b16 %v435
      %v1293 = vunpack.c.l.b16 %v436
      %v1294 = vunpack.c.l.b16 %v437
      %v1295 = vunpack.c.l.b16 %v438
      %v1296 = vunpack.c.l.b16 %v439
      %v1297 = vunpack.c.l.b16 %v440
      %v1298 = vunpack.c.l.b16 %v441
      %v1299 = vunpack.c.l.b16 %v442
      %v1300 = vunpack.c.l.b16 %v443
      %v1301 = vunpack.c.l.b16 %v444
      %v1302 = vunpack.c.l.b16 %v445
      %v1303 = vunpack.c.l.b16 %v446
      %v1304 = vunpack.c.l.b16 %v447
      %v1305 = vunpack.c.l.b16 %v448
      %v1306 = vunpack.c.l.b16 %v449
      %v1307 = vunpack.c.l.b16 %v450
      %v1308 = vunpack.c.l.b16 %v451
      %v1309 = vunpack.c.l.b16 %v452
      %v1310 = vunpack.c.l.b16 %v453
      %v1311 = vunpack.c.l.b16 %v454
      %v1312 = vunpack.c.l.b16 %v455
      %v1313 = vunpack.c.l.b16 %v456
      %v1314 = vunpack.c.l.b16 %v457
      %v1315 = vunpack.c.l.b16 %v458
      %v1316 = vunpack.c.l.b16 %v459
      %v1317 = vunpack.c.l.b16 %v460
      %v1318 = vunpack.c.l.b16 %v461
      %v1319 = vunpack.c.l.b16 %v462
      %v1320 = vunpack.c.l.b16 %v463
      %v1321 = vunpack.c.l.b16 %v464
      %v1322 = vunpack.c.l.b16 %v465
      %v1323 = vunpack.c.l.b16 %v466
      %v1324 = vunpack.c.l.b16 %v467
      %v1325 = vunpack.c.l.b16 %v468
      %v1326 = vunpack.c.l.b16 %v469
      %v1327 = vunpack.c.l.b16 %v470
      %v1328 = vunpack.c.l.b16 %v471
      %v1329 = vunpack.c.l.b16 %v472
      %v1330 = vunpack.c.l.b16 %v473
      %v1331 = vunpack.c.l.b16 %v474
      %v1332 = vunpack.c.l.b16 %v475
      %v1333 = vunpack.c.l.b16 %v476
      %v1334 = vunpack.c.l.b16 %v477
      %v1335 = vunpack.c.l.b16 %v478
      %v1336 = vunpack.c.l.b16 %v479
      %v1337 = vunpack.c.l.b16 %v480
      %v1338 = vunpack.c.l.b16 %v481
      %v1339 = vunpack.c.l.b16 %v482
      %v1340 = vunpack.c.l.b16 %v483
      %v1341 = vunpack.c.l.b16 %v484
      %v1342 = vunpack.c.l.b16 %v485
      %v1343 = vunpack.c.l.b16 %v486
      %v1344 = vunpack.c.l.b16 %v487
      %v1345 = vunpack.c.l.b16 %v488
      %v1346 = vunpack.c.l.b16 %v489
      %v1347 = vunpack.c.l.b16 %v490
      %v1348 = vunpack.c.l.b16 %v491
      %v1349 = vunpack.c.l.b16 %v492
      %v1350 = vunpack.c.l.b16 %v493
      %v1351 = vunpack.c.l.b16 %v494
      %v1352 = vunpack.c.l.b16 %v495
      %v1353 = vunpack.c.l.b16 %v496
      %v1354 = vunpack.c.l.b16 %v497
      %v1355 = vunpack.c.l.b16 %v498
      %v1356 = vunpack.c.l.b16 %v499
      %v1357 = vunpack.c.l.b16 %v500
      %v1358 = vunpack.c.l.b16 %v501
      %v1359 = vunpack.c.l.b16 %v502
      %v1360 = vunpack.c.l.b16 %v503
      %v1361 = vunpack.c.l.b16 %v504
      %v1362 = vunpack.c.l.b16 %v505
      %v1363 = vunpack.c.l.b16 %v506
      %v1364 = vunpack.c.l.b16 %v507
      %v1365 = vunpack.c.l.b16 %v508
      %v1366 = vunpack.c.l.b16 %v509
      %v1367 = vunpack.c.l.b16 %v510
      %v1368 = vunpack.c.l.b16 %v511
      %v1369 = vunpack.c.l.b16 %v512
      %v1370 = vunpack.c.l.b16 %v513
      %v1371 = vunpack.c.l.b16 %v514
      %v1372 = vunpack.c.l.b16 %v515
      %v1373 = vunpack.c.l.b16 %v516
      %v1374 = vunpack.c.l.b16 %v517
      %v1375 = vunpack.c.l.b16 %v518
      %v1376 = vunpack.c.l.b16 %v519
      %v1377 = vunpack.c.l.b16 %v520
      %v1378 = vunpack.c.l.b16 %v521
      %v1379 = vunpack.c.l.b16 %v522
      %v1380 = vunpack.c.l.b16 %v523
      %v1381 = vunpack.c.l.b16 %v524
      %v1382 = vunpack.c.l.b16 %v525
      %v1383 = vunpack.c.l.b16 %v526
      %v1384 = vunpack.c.l.b16 %v527
      %v1385 = vunpack.c.l.b16 %v528
      %v1386 = vunpack.c.l.b16 %v529
      %v1387 = vunpack.c.l.b16 %v530
      %v1388 = vunpack.c.l.b16 %v531
      %v1389 = vunpack.c.l.b16 %v532
      %v1390 = vunpack.c.l.b16 %v533
      %v1391 = vunpack.c.l.b16 %v534
      %v1392 = vunpack.c.l.b16 %v535
      %v1393 = vunpack.c.l.b16 %v536
      %v1394 = vunpack.c.l.b16 %v537
      %v1395 = vunpack.c.l.b16 %v538
      %v1396 = vunpack.c.l.b16 %v539
      %v1397 = vunpack.c.l.b16 %v540
      %v1398 = vunpack.c.l.b16 %v541
      %v1399 = vunpack.c.l.b16 %v542
      %v1400 = vunpack.c.l.b16 %v543
      %v1401 = vunpack.c.l.b16 %v544
      %v1402 = vunpack.c.l.b16 %v545
      %v1403 = vunpack.c.l.b16 %v546
      %v1404 = vunpack.c.l.b16 %v547
      %v1405 = vunpack.c.l.b16 %v548
      %v1406 = vunpack.c.l.b16 %v549
      %v1407 = vunpack.c.l.b16 %v550
      %v1408 = vunpack.c.l.b16 %v551
      %v1409 = vunpack.c.l.b16 %v552
      %v1410 = vunpack.c.l.b16 %v553
      %v1411 = vunpack.c.l.b16 %v554
      %v1412 = vunpack.c.l.b16 %v555
      %v1413 = vunpack.c.l.b16 %v556
      %v1414 = vunpack.c.l.b16 %v557
      %v1415 = vunpack.c.l.b16 %v558
      %v1416 = vunpack.c.l.b16 %v559
      %v1417 = vunpack.c.l.b16 %v560
      %v1418 = vunpack.c.l.b16 %v561
      %v1419 = vunpack.c.l.b16 %v562
      %v1420 = vunpack.c.l.b16 %v563
      %v1421 = vunpack.c.l.b16 %v564
      %v1422 = vunpack.c.l.b16 %v565
      %v1423 = vunpack.c.l.b16 %v566
      %v1424 = vunpack.c.l.b16 %v567
      %v1425 = vunpack.c.l.b16 %v568
      %v1426 = vunpack.c.l.b16 %v569
      %v1427 = vunpack.c.l.b16 %v570
      %v1428 = vunpack.c.l.b16 %v571
      %v1429 = vunpack.c.l.b16 %v572
      %v1430 = vunpack.c.l.b16 %v573
      %v1431 = vunpack.c.l.b16 %v574
      %v1432 = vunpack.c.l.b16 %v575
      %v1433 = vunpack.c.l.b16 %v576
      %v1434 = vunpack.c.l.b16 %v577
      %v1435 = vunpack.c.l.b16 %v578
      %v1436 = vunpack.c.l.b16 %v579
      %v1437 = vunpack.c.l.b16 %v580
      %v1438 = vunpack.c.l.b16 %v581
      %v1439 = vunpack.c.l.b16 %v582
      %v1440 = vunpack.c.l.b16 %v583
      %v1441 = vunpack.c.l.b16 %v584
      %v1442 = vunpack.c.l.b16 %v585
      %v1443 = vunpack.c.l.b16 %v586
      %v1444 = vunpack.c.l.b16 %v587
      %v1445 = vunpack.c.l.b16 %v588
      %v1446 = vunpack.c.l.b16 %v589
      %v1447 = vunpack.c.l.b16 %v590
      %v1448 = vunpack.c.l.b16 %v591
      %v1449 = vunpack.c.l.b16 %v592
      %v1450 = vpack.c.b16 %v1030, %v1029
      %v1451 = vpack.c.b16 %v1032, %v1031
      %v1452 = vpack.c.b16 %v1034, %v1033
      %v1453 = vpack.c.b16 %v1036, %v1035
      %v1454 = vpack.c.b16 %v1038, %v1037
      %v1455 = vpack.c.b16 %v1040, %v1039
      %v1456 = vpack.c.b16 %v1042, %v1041
      %v1457 = vpack.c.b16 %v1044, %v1043
      %v1458 = vpack.c.b16 %v1046, %v1045
      %v1459 = vpack.c.b16 %v1048, %v1047
      %v1460 = vpack.c.b16 %v1050, %v1049
      %v1461 = vpack.c.b16 %v1052, %v1051
      %v1462 = vpack.c.b16 %v1054, %v1053
      %v1463 = vpack.c.b16 %v1056, %v1055
      %v1464 = vpack.c.b16 %v1058, %v1057
      %v1465 = vpack.c.b16 %v1060, %v1059
      %v1466 = vpack.c.b16 %v1062, %v1061
      %v1467 = vpack.c.b16 %v1064, %v1063
      %v1468 = vpack.c.b16 %v1066, %v1065
      %v1469 = vpack.c.b16 %v1068, %v1067
      %v1470 = vpack.c.b16 %v1070, %v1069
      %v1471 = vpack.c.b16 %v1072, %v1071
      %v1472 = vpack.c.b16 %v1074, %v1073
      %v1473 = vpack.c.b16 %v1076, %v1075
      %v1474 = vpack.c.b16 %v1078, %v1077
      %v1475 = vpack.c.b16 %v1080, %v1079
      %v1476 = vpack.c.b16 %v1082, %v1081
      %v1477 = vpack.c.b16 %v1084, %v1083
      %v1478 = vpack.c.b16 %v1086, %v1085
      %v1479 = vpack.c.b16 %v1088, %v1087
      %v1480 = vpack.c.b16 %v1090, %v1089
      %v1481 = vpack.c.b16 %v1092, %v1091
      %v1482 = vpack.c.b16 %v1094, %v1093
      %v1483 = vpack.c.b16 %v1096, %v1095
      %v1484 = vpack.c.b16 %v1098, %v1097
      %v1485 = vpack.c.b16 %v1100, %v1099
      %v1486 = vpack.c.b16 %v1102, %v1101
      %v1487 = vpack.c.b16 %v1104, %v1103
      %v1488 = vpack.c.b16 %v1106, %v1105
      %v1489 = vpack.c.b16 %v1108, %v1107
      %v1490 = vpack.c.b16 %v1110, %v1109
      %v1491 = vpack.c.b16 %v1112, %v1111
      %v1492 = vpack.c.b16 %v1114, %v1113
      %v1493 = vpack.c.b16 %v1116, %v1115
      %v1494 = vpack.c.b16 %v1118, %v1117
      %v1495 = vpack.c.b16 %v1120, %v1119
      %v1496 = vpack.c.b16 %v1122, %v1121
      %v1497 = vpack.c.b16 %v1124, %v1123
      %v1498 = vpack.c.b16 %v1126, %v1125
      %v1499 = vpack.c.b16 %v1128, %v1127
      %v1500 = vpack.c.b16 %v1130, %v1129
      %v1501 = vpack.c.b16 %v1132, %v1131
      %v1502 = vpack.c.b16 %v1134, %v1133
      %v1503 = vpack.c.b16 %v1136, %v1135
      %v1504 = vpack.c.b16 %v1138, %v1137
      %v1505 = vpack.c.b16 %v1140, %v1139
      %v1506 = vpack.c.b16 %v1142, %v1141
      %v1507 = vpack.c.b16 %v1144, %v1143
      %v1508 = vpack.c.b16 %v1146, %v1145
      %v1509 = vpack.c.b16 %v1148, %v1147
      %v1510 = vpack.c.b16 %v1150, %v1149
      %v1511 = vpack.c.b16 %v1152, %v1151
      %v1512 = vpack.c.b16 %v1154, %v1153
      %v1513 = vpack.c.b16 %v1156, %v1155
      %v1514 = vpack.c.b16 %v1158, %v1157
      %v1515 = vpack.c.b16 %v1160, %v1159
      %v1516 = vpack.c.b16 %v1162, %v1161
      %v1517 = vpack.c.b16 %v1164, %v1163
      %v1518 = vpack.c.b16 %v1166, %v1165
      %v1519 = vpack.c.b16 %v1168, %v1167
      %v1520 = vpack.c.b16 %v1170, %v1169
      %v1521 = vpack.c.b16 %v1172, %v1171
      %v1522 = vpack.c.b16 %v1174, %v1173
      %v1523 = vpack.c.b16 %v1176, %v1175
      %v1524 = vpack.c.b16 %v1178, %v1177
      %v1525 = vpack.c.b16 %v1180, %v1179
      %v1526 = vpack.c.b16 %v1182, %v1181
      %v1527 = vpack.c.b16 %v1184, %v1183
      %v1528 = vpack.c.b16 %v1186, %v1185
      %v1529 = vpack.c.b16 %v1188, %v1187
      %v1530 = vpack.c.b16 %v1190, %v1189
      %v1531 = vpack.c.b16 %v1192, %v1191
      %v1532 = vpack.c.b16 %v1194, %v1193
      %v1533 = vpack.c.b16 %v1196, %v1195
      %v1534 = vpack.c.b16 %v1198, %v1197
      %v1535 = vpack.c.b16 %v1200, %v1199
      %v1536 = vpack.c.b16 %v1202, %v1201
      %v1537 = vpack.c.b16 %v1204, %v1203
      %v1538 = vpack.c.b16 %v1206, %v1205
      %v1539 = vpack.c.b16 %v1208, %v1207
      %v1540 = vpack.c.b16 %v1210, %v1209
      %v1541 = vpack.c.b16 %v1212, %v1211
      %v1542 = vpack.c.b16 %v1214, %v1213
      %v1543 = vpack.c.b16 %v1216, %v1215
      %v1544 = vpack.c.b16 %v1218, %v1217
      %v1545 = vpack.c.b16 %v1220, %v1219
      %v1546 = vpack.c.b16 %v1222, %v1221
      %v1547 = vpack.c.b16 %v1224, %v1223
      %v1548 = vpack.c.b16 %v1226, %v1225
      %v1549 = vpack.c.b16 %v1228, %v1227
      %v1550 = vpack.c.b16 %v1230, %v1229
      %v1551 = vpack.c.b16 %v1232, %v1231
      %v1552 = vpack.c.b16 %v1234, %v1233
      %v1553 = vpack.c.b16 %v1236, %v1235
      %v1554 = vpack.c.b16 %v1238, %v1237
      %v1555 = vpack.c.b16 %v1240, %v1239
      %v1556 = vpack.c.b16 %v1242, %v1241
      %v1557 = vpack.c.b16 %v1244, %v1243
      %v1558 = vpack.c.b16 %v1246, %v1245
      %v1559 = vpack.c.b16 %v1248, %v1247
      %v1560 = vpack.c.b16 %v1250, %v1249
      %v1561 = vpack.c.b16 %v1252, %v1251
      %v1562 = vpack.c.b16 %v1254, %v1253
      %v1563 = vpack.c.b16 %v1256, %v1255
      %v1564 = vpack.c.b16 %v1258, %v1257
      %v1565 = vpack.c.b16 %v1260, %v1259
      %v1566 = vpack.c.b16 %v1262, %v1261
      %v1567 = vpack.c.b16 %v1264, %v1263
      %v1568 = vpack.c.b16 %v1266, %v1265
      %v1569 = vpack.c.b16 %v1268, %v1267
      %v1570 = vpack.c.b16 %v1270, %v1269
      %v1571 = vpack.c.b16 %v1272, %v1271
      %v1572 = vpack.c.b16 %v1274, %v1273
      %v1573 = vpack.c.b16 %v1276, %v1275
      %v1574 = vpack.c.b16 %v1278, %v1277
      %v1575 = vpack.c.b16 %v1280, %v1279
      %v1576 = vpack.c.b16 %v1282, %v1281
      %v1577 = vpack.c.b16 %v1284, %v1283
      %v1578 = vpack.c.b16 %v1286, %v1285
      %v1579 = vpack.c.b16 %v1288, %v1287
      %v1580 = vpack.c.b16 %v1290, %v1289
      %v1581 = vpack.c.b16 %v1292, %v1291
      %v1582 = vpack.c.b16 %v1294, %v1293
      %v1583 = vpack.c.b16 %v1296, %v1295
      %v1584 = vpack.c.b16 %v1298, %v1297
      %v1585 = vpack.c.b16 %v1300, %v1299
      %v1586 = vpack.c.b16 %v1302, %v1301
      %v1587 = vpack.c.b16 %v1304, %v1303
      %v1588 = vpack.c.b16 %v1306, %v1305
      %v1589 = vpack.c.b16 %v1308, %v1307
      %v1590 = vpack.c.b16 %v1310, %v1309
      %v1591 = vpack.c.b16 %v1312, %v1311
      %v1592 = vpack.c.b16 %v1314, %v1313
      %v1593 = vpack.c.b16 %v1316, %v1315
      %v1594 = vpack.c.b16 %v1318, %v1317
      %v1595 = vpack.c.b16 %v1320, %v1319
      %v1596 = vpack.c.b16 %v1322, %v1321
      %v1597 = vpack.c.b16 %v1324, %v1323
      %v1598 = vpack.c.b16 %v1326, %v1325
      %v1599 = vpack.c.b16 %v1328, %v1327
      %v1600 = vpack.c.b16 %v1330, %v1329
      %v1601 = vpack.c.b16 %v1332, %v1331
      %v1602 = vpack.c.b16 %v1334, %v1333
      %v1603 = vpack.c.b16 %v1336, %v1335
      %v1604 = vpack.c.b16 %v1338, %v1337
      %v1605 = vpack.c.b16 %v1340, %v1339
      %v1606 = vpack.c.b16 %v1342, %v1341
      %v1607 = vpack.c.b16 %v1344, %v1343
      %v1608 = vpack.c.b16 %v1346, %v1345
      %v1609 = vpack.c.b16 %v1348, %v1347
      %v1610 = vpack.c.b16 %v1350, %v1349
      %v1611 = vpack.c.b16 %v1352, %v1351
      %v1612 = vpack.c.b16 %v1354, %v1353
      %v1613 = vpack.c.b16 %v1356, %v1355
      %v1614 = vpack.c.b16 %v1358, %v1357
      %v1615 = vpack.c.b16 %v1360, %v1359
      %v1616 = vpack.c.b16 %v1362, %v1361
      %v1617 = vpack.c.b16 %v1364, %v1363
      %v1618 = vpack.c.b16 %v1366, %v1365
      %v1619 = vpack.c.b16 %v1368, %v1367
      %v1620 = vpack.c.b16 %v1370, %v1369
      %v1621 = vpack.c.b16 %v1372, %v1371
      %v1622 = vpack.c.b16 %v1374, %v1373
      %v1623 = vpack.c.b16 %v1376, %v1375
      %v1624 = vpack.c.b16 %v1378, %v1377
      %v1625 = vpack.c.b16 %v1380, %v1379
      %v1626 = vpack.c.b16 %v1382, %v1381
      %v1627 = vpack.c.b16 %v1384, %v1383
      %v1628 = vpack.c.b16 %v1386, %v1385
      %v1629 = vpack.c.b16 %v1388, %v1387
      %v1630 = vpack.c.b16 %v1390, %v1389
      %v1631 = vpack.c.b16 %v1392, %v1391
      %v1632 = vpack.c.b16 %v1394, %v1393
      %v1633 = vpack.c.b16 %v1396, %v1395
      %v1634 = vpack.c.b16 %v1398, %v1397
      %v1635 = vpack.c.b16 %v1400, %v1399
      %v1636 = vpack.c.b16 %v1402, %v1401
      %v1637 = vpack.c.b16 %v1404, %v1403
      %v1638 = vpack.c.b16 %v1406, %v1405
      %v1639 = vpack.c.b16 %v1408, %v1407
      %v1640 = vpack.c.b16 %v1410, %v1409
      %v1641 = vpack.c.b16 %v1412, %v1411
      %v1642 = vpack.c.b16 %v1414, %v1413
      %v1643 = vpack.c.b16 %v1416, %v1415
      %v1644 = vpack.c.b16 %v1418, %v1417
      %v1645 = vpack.c.b16 %v1420, %v1419
      %v1646 = vpack.c.b16 %v1422, %v1421
      %v1647 = vpack.c.b16 %v1424, %v1423
      %v1648 = vpack.c.b16 %v1426, %v1425
      %v1649 = vpack.c.b16 %v1428, %v1427
      %v1650 = vpack.c.b16 %v1430, %v1429
      %v1651 = vpack.c.b16 %v1432, %v1431
      %v1652 = vpack.c.b16 %v1434, %v1433
      %v1653 = vpack.c.b16 %v1436, %v1435
      %v1654 = vpack.c.b16 %v1438, %v1437
      %v1655 = vpack.c.b16 %v1440, %v1439
      %v1656 = vpack.c.b16 %v1442, %v1441
      %v1657 = vpack.c.b16 %v1444, %v1443
      %v1658 = vpack.c.b16 %v1446, %v1445
      %v1659 = vpack.c.b16 %v1448, %v1447
      %v1660 = vpack.c.b16 %v1449, %v1449
      %v1669 = vunpack.c.l.b16 %v593
      %v1670 = vunpack.c.l.b16 %v594
      %v1671 = vunpack.c.l.b16 %v595
      %v1672 = vunpack.c.l.b16 %v596
      %v1673 = vunpack.c.l.b16 %v597
      %v1674 = vunpack.c.l.b16 %v598
      %v1675 = vunpack.c.l.b16 %v599
      %v1676 = vunpack.c.l.b16 %v600
      %v1677 = vpack.c.b16 %v1670, %v1669
      %v1678 = vpack.c.b16 %v1672, %v1671
      %v1679 = vpack.c.b16 %v1674, %v1673
      %v1680 = vpack.c.b16 %v1676, %v1675
      %vm1685 = vcmask 523264
      %v1687 = vsel %vm1685, %v1450, 0
      %v1690 = vsel %vm1685, %v1451, 0
      %v1693 = vsel %vm1685, %v1452, 0
      %v1696 = vsel %vm1685, %v1453, 0
      %v1699 = vsel %vm1685, %v1454, 0
      %v1702 = vsel %vm1685, %v1455, 0
      %v1705 = vsel %vm1685, %v1456, 0
      %v1708 = vsel %vm1685, %v1457, 0
      %v1711 = vsel %vm1685, %v1458, 0
      %v1714 = vsel %vm1685, %v1459, 0
      %v1717 = vsel %vm1685, %v1460, 0
      %v1720 = vsel %vm1685, %v1461, 0
      %v1723 = vsel %vm1685, %v1462, 0
      %v1726 = vsel %vm1685, %v1463, 0
      %v1729 = vsel %vm1685, %v1464, 0
      %v1732 = vsel %vm1685, %v1465, 0
      %v1735 = vsel %vm1685, %v1466, 0
      %v1738 = vsel %vm1685, %v1467, 0
      %v1741 = vsel %vm1685, %v1468, 0
      %v1744 = vsel %vm1685, %v1469, 0
      %v1747 = vsel %vm1685, %v1470, 0
      %v1750 = vsel %vm1685, %v1471, 0
      %v1753 = vsel %vm1685, %v1472, 0
      %v1756 = vsel %vm1685, %v1473, 0
      %v1759 = vsel %vm1685, %v1474, 0
      %v1762 = vsel %vm1685, %v1475, 0
      %v1765 = vsel %vm1685, %v1476, 0
      %v1768 = vsel %vm1685, %v1477, 0
      %v1771 = vsel %vm1685, %v1478, 0
      %v1774 = vsel %vm1685, %v1479, 0
      %v1777 = vsel %vm1685, %v1480, 0
      %v1780 = vsel %vm1685, %v1481, 0
      %v1783 = vsel %vm1685, %v1482, 0
      %v1786 = vsel %vm1685, %v1483, 0
      %v1789 = vsel %vm1685, %v1484, 0
      %v1792 = vsel %vm1685, %v1485, 0
      %v1795 = vsel %vm1685, %v1486, 0
      %v1798 = vsel %vm1685, %v1487, 0
      %v1801 = vsel %vm1685, %v1488, 0
      %v1804 = vsel %vm1685, %v1489, 0
      %v1807 = vsel %vm1685, %v1490, 0
      %v1810 = vsel %vm1685, %v1491, 0
      %v1813 = vsel %vm1685, %v1492, 0
      %v1816 = vsel %vm1685, %v1493, 0
      %v1819 = vsel %vm1685, %v1494, 0
      %v1822 = vsel %vm1685, %v1495, 0
      %v1825 = vsel %vm1685, %v1496, 0
      %v1828 = vsel %vm1685, %v1497, 0
      %v1831 = vsel %vm1685, %v1498, 0
      %v1834 = vsel %vm1685, %v1499, 0
      %v1837 = vsel %vm1685, %v1500, 0
      %v1840 = vsel %vm1685, %v1501, 0
      %v1843 = vsel %vm1685, %v1502, 0
      %v1846 = vsel %vm1685, %v1503, 0
      %v1849 = vsel %vm1685, %v1504, 0
      %v1852 = vsel %vm1685, %v1505, 0
      %v1855 = vsel %vm1685, %v1506, 0
      %v1858 = vsel %vm1685, %v1507, 0
      %v1861 = vsel %vm1685, %v1508, 0
      %v1864 = vsel %vm1685, %v1509, 0
      %v1867 = vsel %vm1685, %v1510, 0
      %v1870 = vsel %vm1685, %v1511, 0
      %v1873 = vsel %vm1685, %v1512, 0
      %v1876 = vsel %vm1685, %v1513, 0
      %v1879 = vsel %vm1685, %v1514, 0
      %v1882 = vsel %vm1685, %v1515, 0
      %v1885 = vsel %vm1685, %v1516, 0
      %v1888 = vsel %vm1685, %v1517, 0
      %v1891 = vsel %vm1685, %v1518, 0
      %v1894 = vsel %vm1685, %v1519, 0
      %v1897 = vsel %vm1685, %v1520, 0
      %v1900 = vsel %vm1685, %v1521, 0
      %v1903 = vsel %vm1685, %v1522, 0
      %v1906 = vsel %vm1685, %v1523, 0
      %v1909 = vsel %vm1685, %v1524, 0
      %v1912 = vsel %vm1685, %v1525, 0
      %v1915 = vsel %vm1685, %v1526, 0
      %v1918 = vsel %vm1685, %v1527, 0
      %v1921 = vsel %vm1685, %v1528, 0
      %v1924 = vsel %vm1685, %v1529, 0
      %v1927 = vsel %vm1685, %v1530, 0
      %v1930 = vsel %vm1685, %v1531, 0
      %v1933 = vsel %vm1685, %v1532, 0
      %v1936 = vsel %vm1685, %v1533, 0
      %v1939 = vsel %vm1685, %v1534, 0
      %v1942 = vsel %vm1685, %v1535, 0
      %v1945 = vsel %vm1685, %v1536, 0
      %v1948 = vsel %vm1685, %v1537, 0
      %v1951 = vsel %vm1685, %v1538, 0
      %v1954 = vsel %vm1685, %v1539, 0
      %v1957 = vsel %vm1685, %v1540, 0
      %v1960 = vsel %vm1685, %v1541, 0
      %v1963 = vsel %vm1685, %v1542, 0
      %v1966 = vsel %vm1685, %v1543, 0
      %v1969 = vsel %vm1685, %v1544, 0
      %v1972 = vsel %vm1685, %v1545, 0
      %v1975 = vsel %vm1685, %v1546, 0
      %v1978 = vsel %vm1685, %v1547, 0
      %v1981 = vsel %vm1685, %v1548, 0
      %v1984 = vsel %vm1685, %v1549, 0
      %v1987 = vsel %vm1685, %v1550, 0
      %v1990 = vsel %vm1685, %v1551, 0
      %v1993 = vsel %vm1685, %v1552, 0
      %v1996 = vsel %vm1685, %v1553, 0
      %v1999 = vsel %vm1685, %v1554, 0
      %v2002 = vsel %vm1685, %v1555, 0
      %v2005 = vsel %vm1685, %v1556, 0
      %v2008 = vsel %vm1685, %v1557, 0
      %v2011 = vsel %vm1685, %v1558, 0
      %v2014 = vsel %vm1685, %v1559, 0
      %v2017 = vsel %vm1685, %v1560, 0
      %v2020 = vsel %vm1685, %v1561, 0
      %v2023 = vsel %vm1685, %v1562, 0
      %v2026 = vsel %vm1685, %v1563, 0
      %v2029 = vsel %vm1685, %v1564, 0
      %v2032 = vsel %vm1685, %v1565, 0
      %v2035 = vsel %vm1685, %v1566, 0
      %v2038 = vsel %vm1685, %v1567, 0
      %v2041 = vsel %vm1685, %v1568, 0
      %v2044 = vsel %vm1685, %v1569, 0
      %v2047 = vsel %vm1685, %v1570, 0
      %v2050 = vsel %vm1685, %v1571, 0
      %v2053 = vsel %vm1685, %v1572, 0
      %v2056 = vsel %vm1685, %v1573, 0
      %v2059 = vsel %vm1685, %v1574, 0
      %v2062 = vsel %vm1685, %v1575, 0
      %v2065 = vsel %vm1685, %v1576, 0
      %v2068 = vsel %vm1685, %v1577, 0
      %v2071 = vsel %vm1685, %v1578, 0
      %v2074 = vsel %vm1685, %v1579, 0
      %v2077 = vsel %vm1685, %v1580, 0
      %v2080 = vsel %vm1685, %v1581, 0
      %v2083 = vsel %vm1685, %v1582, 0
      %v2086 = vsel %vm1685, %v1583, 0
      %v2089 = vsel %vm1685, %v1584, 0
      %v2092 = vsel %vm1685, %v1585, 0
      %v2095 = vsel %vm1685, %v1586, 0
      %v2098 = vsel %vm1685, %v1587, 0
      %v2101 = vsel %vm1685, %v1588, 0
      %v2104 = vsel %vm1685, %v1589, 0
      %v2107 = vsel %vm1685, %v1590, 0
      %v2110 = vsel %vm1685, %v1591, 0
      %v2113 = vsel %vm1685, %v1592, 0
      %v2116 = vsel %vm1685, %v1593, 0
      %v2119 = vsel %vm1685, %v1594, 0
      %v2122 = vsel %vm1685, %v1595, 0
      %v2125 = vsel %vm1685, %v1596, 0
      %v2128 = vsel %vm1685, %v1597, 0
      %v2131 = vsel %vm1685, %v1598, 0
      %v2134 = vsel %vm1685, %v1599, 0
      %v2137 = vsel %vm1685, %v1600, 0
      %v2140 = vsel %vm1685, %v1601, 0
      %v2143 = vsel %vm1685, %v1602, 0
      %v2146 = vsel %vm1685, %v1603, 0
      %v2149 = vsel %vm1685, %v1604, 0
      %v2152 = vsel %vm1685, %v1605, 0
      %v2155 = vsel %vm1685, %v1606, 0
      %v2158 = vsel %vm1685, %v1607, 0
      %v2161 = vsel %vm1685, %v1608, 0
      %v2164 = vsel %vm1685, %v1609, 0
      %v2167 = vsel %vm1685, %v1610, 0
      %v2170 = vsel %vm1685, %v1611, 0
      %v2173 = vsel %vm1685, %v1612, 0
      %v2176 = vsel %vm1685, %v1613, 0
      %v2179 = vsel %vm1685, %v1614, 0
      %v2182 = vsel %vm1685, %v1615, 0
      %v2185 = vsel %vm1685, %v1616, 0
      %v2188 = vsel %vm1685, %v1617, 0
      %v2191 = vsel %vm1685, %v1618, 0
      %v2194 = vsel %vm1685, %v1619, 0
      %v2197 = vsel %vm1685, %v1620, 0
      %v2200 = vsel %vm1685, %v1621, 0
      %v2203 = vsel %vm1685, %v1622, 0
      %v2206 = vsel %vm1685, %v1623, 0
      %v2209 = vsel %vm1685, %v1624, 0
      %v2212 = vsel %vm1685, %v1625, 0
      %v2215 = vsel %vm1685, %v1626, 0
      %v2218 = vsel %vm1685, %v1627, 0
      %v2221 = vsel %vm1685, %v1628, 0
      %v2224 = vsel %vm1685, %v1629, 0
      %v2227 = vsel %vm1685, %v1630, 0
      %v2230 = vsel %vm1685, %v1631, 0
      %v2233 = vsel %vm1685, %v1632, 0
      %v2236 = vsel %vm1685, %v1633, 0
      %v2239 = vsel %vm1685, %v1634, 0
      %v2242 = vsel %vm1685, %v1635, 0
      %v2245 = vsel %vm1685, %v1636, 0
      %v2248 = vsel %vm1685, %v1637, 0
      %v2251 = vsel %vm1685, %v1638, 0
      %v2254 = vsel %vm1685, %v1639, 0
      %v2257 = vsel %vm1685, %v1640, 0
      %v2260 = vsel %vm1685, %v1641, 0
      %v2263 = vsel %vm1685, %v1642, 0
      %v2266 = vsel %vm1685, %v1643, 0
      %v2269 = vsel %vm1685, %v1644, 0
      %v2272 = vsel %vm1685, %v1645, 0
      %v2275 = vsel %vm1685, %v1646, 0
      %v2278 = vsel %vm1685, %v1647, 0
      %v2281 = vsel %vm1685, %v1648, 0
      %v2284 = vsel %vm1685, %v1649, 0
      %v2287 = vsel %vm1685, %v1650, 0
      %v2290 = vsel %vm1685, %v1651, 0
      %v2293 = vsel %vm1685, %v1652, 0
      %v2296 = vsel %vm1685, %v1653, 0
      %v2299 = vsel %vm1685, %v1654, 0
      %v2302 = vsel %vm1685, %v1655, 0
      %v2305 = vsel %vm1685, %v1656, 0
      %v2308 = vsel %vm1685, %v1657, 0
      %v2311 = vsel %vm1685, %v1658, 0
      %v2314 = vsel %vm1685, %v1659, 0
      %v2317 = vsel %vm1685, %v1660, 0
      %2319 = vmatprep.subr.bf16.mxu0 0
      %2320 = vmatpush1.bf16.msra.mxu0 %v1677
      %2321 = vmatprep.subr.bf16.mxu0 0
      %2322 = vmatpush1.bf16.msra.mxu0 %v1678
      %2323 = vmatprep.subr.bf16.mxu0 0
      %2324 = vmatpush1.bf16.msra.mxu0 %v1679
      %2325 = vmatprep.subr.bf16.mxu0 0
      %2326 = vmatpush1.bf16.msra.mxu0 %v1680
      %2327 = vmatprep.subr.bf16.mxu0 0
      %2328 = vmatpush1.bf16.msra.mxu0 0
      %2329 = vmatprep.subr.bf16.mxu0 0
      %2330 = vmatpush1.bf16.msra.mxu0 0
      %2331 = vmatprep.subr.bf16.mxu0 0
      %2332 = vmatpush1.bf16.msra.mxu0 0
      %2333 = vmatprep.subr.bf16.mxu0 0
      %2334 = vmatpush1.bf16.msra.mxu0 0
      %2335 = vmatprep.subr.bf16.mxu0 0
      %2336 = vmatpush1.bf16.msra.mxu0 0
      %2337 = vmatprep.subr.bf16.mxu0 0
      %2338 = vmatpush1.bf16.msra.mxu0 0
      %2339 = vmatprep.subr.bf16.mxu0 0
      %2340 = vmatpush1.bf16.msra.mxu0 0
      %2341 = vmatprep.subr.bf16.mxu0 0
      %2342 = vmatpush1.bf16.msra.mxu0 0
      %2343 = vmatprep.subr.bf16.mxu0 0
      %2344 = vmatpush1.bf16.msra.mxu0 0
      %2345 = vmatprep.subr.bf16.mxu0 0
      %2346 = vmatpush1.bf16.msra.mxu0 0
      %2347 = vmatprep.subr.bf16.mxu0 0
      %2348 = vmatpush1.bf16.msra.mxu0 0
      %2349 = vmatprep.subr.bf16.mxu0 0
      %2350 = vmatpush1.bf16.msra.mxu0 0
      %2351 = vmatprep.mubr.bf16.mxu0 0
      %2352 = vmatmul.mubr.bf16.gmra.mrb[0].mxu0 %v1687
      %v2353 = vpop.f32.mrb[0].mxu0
      %v2354 = vadd.f32 %v606, %v2353
      %v2355 = vpop.f32.mrb[0].mxu0
      %v2356 = vpop.f32.mrb[0].mxu0
      %v2357 = vadd.f32 %v606, %v2356
      %v2358 = vpop.f32.mrb[0].mxu0
      %2359 = vmatprep.mubr.bf16.mxu0 0
      %2360 = vmatmul.mubr.bf16.gmra.mrb[0].mxu0 %v1690
      %v2361 = vpop.f32.mrb[0].mxu0
      %v2362 = vadd.f32 %v606, %v2361
      %v2363 = vpop.f32.mrb[0].mxu0
      %v2364 = vpop.f32.mrb[0].mxu0
      %v2365 = vadd.f32 %v606, %v2364
      %v2366 = vpop.f32.mrb[0].mxu0
      %2367 = vmatprep.mubr.bf16.mxu0 0
      %2368 = vmatmul.mubr.bf16.gmra.mrb[0].mxu0 %v1693
      %v2369 = vpop.f32.mrb[0].mxu0
      %v2370 = vadd.f32 %v606, %v2369
      %v2371 = vpop.f32.mrb[0].mxu0
      %v2372 = vpop.f32.mrb[0].mxu0
      %v2373 = vadd.f32 %v606, %v2372
      %v2374 = vpop.f32.mrb[0].mxu0
      %2375 = vmatprep.mubr.bf16.mxu0 0
      %2376 = vmatmul.mubr.bf16.gmra.mrb[0].mxu0 %v1696
      %v2377 = vpop.f32.mrb[0].mxu0
      %v2378 = vadd.f32 %v606, %v2377
      %v2379 = vpop.f32.mrb[0].mxu0
      %v2380 = vpop.f32.mrb[0].mxu0
      %v2381 = vadd.f32 %v606, %v2380
      %v2382 = vpop.f32.mrb[0].mxu0
      %2383 = vmatprep.mubr.bf16.mxu0 0
      %2384 = vmatmul.mubr.bf16.gmra.mrb[0].mxu0 %v1699
      %v2385 = vpop.f32.mrb[0].mxu0
      %v2386 = vadd.f32 %v606, %v2385
      %v2387 = vpop.f32.mrb[0].mxu0
      %v2388 = vpop.f32.mrb[0].mxu0
      %v2389 = vadd.f32 %v606, %v2388
      %v2390 = vpop.f32.mrb[0].mxu0
      %2391 = vmatprep.mubr.bf16.mxu0 0
      %2392 = vmatmul.mubr.bf16.gmra.mrb[0].mxu0 %v1702
      %v2393 = vpop.f32.mrb[0].mxu0
      %v2394 = vadd.f32 %v606, %v2393
      %v2395 = vpop.f32.mrb[0].mxu0
      %v2396 = vpop.f32.mrb[0].mxu0
      %v2397 = vadd.f32 %v606, %v2396
      %v2398 = vpop.f32.mrb[0].mxu0
      %2399 = vmatprep.mubr.bf16.mxu0 0
      %2400 = vmatmul.mubr.bf16.gmra.mrb[0].mxu0 %v1705
      %v2401 = vpop.f32.mrb[0].mxu0
      %v2402 = vadd.f32 %v606, %v2401
      %v2403 = vpop.f32.mrb[0].mxu0
      %v2404 = vpop.f32.mrb[0].mxu0
      %v2405 = vadd.f32 %v606, %v2404
      %v2406 = vpop.f32.mrb[0].mxu0
      %2407 = vmatprep.mubr.bf16.mxu0 0
      %2408 = vmatmul.mubr.bf16.gmra.mrb[0].mxu0 %v1708
      %v2409 = vpop.f32.mrb[0].mxu0
      %v2410 = vadd.f32 %v606, %v2409
      %v2411 = vpop.f32.mrb[0].mxu0
      %v2412 = vpop.f32.mrb[0].mxu0
      %v2413 = vadd.f32 %v606, %v2412
      %v2414 = vpop.f32.mrb[0].mxu0
      %2415 = vmatprep.mubr.bf16.mxu0 0
      %2416 = vmatmul.mubr.bf16.gmra.mrb[0].mxu0 %v1711
      %v2417 = vpop.f32.mrb[0].mxu0
      %v2418 = vadd.f32 %v606, %v2417
      %v2419 = vpop.f32.mrb[0].mxu0
      %v2420 = vpop.f32.mrb[0].mxu0
      %v2421 = vadd.f32 %v606, %v2420
      %v2422 = vpop.f32.mrb[0].mxu0
      %2423 = vmatprep.mubr.bf16.mxu0 0
      %2424 = vmatmul.mubr.bf16.gmra.mrb[0].mxu0 %v1714
      %v2425 = vpop.f32.mrb[0].mxu0
      %v2426 = vadd.f32 %v606, %v2425
      %v2427 = vpop.f32.mrb[0].mxu0
      %v2428 = vpop.f32.mrb[0].mxu0
      %v2429 = vadd.f32 %v606, %v2428
      %v2430 = vpop.f32.mrb[0].mxu0
      %2431 = vmatprep.mubr.bf16.mxu0 0
      %2432 = vmatmul.mubr.bf16.gmra.mrb[0].mxu0 %v1717
      %v2433 = vpop.f32.mrb[0].mxu0
      %v2434 = vadd.f32 %v606, %v2433
      %v2435 = vpop.f32.mrb[0].mxu0
      %v2436 = vpop.f32.mrb[0].mxu0
      %v2437 = vadd.f32 %v606, %v2436
      %v2438 = vpop.f32.mrb[0].mxu0
      %2439 = vmatprep.mubr.bf16.mxu0 0
      %2440 = vmatmul.mubr.bf16.gmra.mrb[0].mxu0 %v1720
      %v2441 = vpop.f32.mrb[0].mxu0
      %v2442 = vadd.f32 %v606, %v2441
      %v2443 = vpop.f32.mrb[0].mxu0
      %v2444 = vpop.f32.mrb[0].mxu0
      %v2445 = vadd.f32 %v606, %v2444
      %v2446 = vpop.f32.mrb[0].mxu0
      %2447 = vmatprep.mubr.bf16.mxu0 0
      %2448 = vmatmul.mubr.bf16.gmra.mrb[0].mxu0 %v1723
      %v2449 = vpop.f32.mrb[0].mxu0
      %v2450 = vadd.f32 %v606, %v2449
      %v2451 = vpop.f32.mrb[0].mxu0
      %v2452 = vpop.f32.mrb[0].mxu0
      %v2453 = vadd.f32 %v606, %v2452
      %v2454 = vpop.f32.mrb[0].mxu0
      %2455 = vmatprep.mubr.bf16.mxu0 0
      %2456 = vmatmul.mubr.bf16.gmra.mrb[0].mxu0 %v1726
      %v2457 = vpop.f32.mrb[0].mxu0
      %v2458 = vadd.f32 %v606, %v2457
      %v2459 = vpop.f32.mrb[0].mxu0
      %v2460 = vpop.f32.mrb[0].mxu0
      %v2461 = vadd.f32 %v606, %v2460
      %v2462 = vpop.f32.mrb[0].mxu0
      %2463 = vmatprep.mubr.bf16.mxu0 0
      %2464 = vmatmul.mubr.bf16.gmra.mrb[0].mxu0 %v1729
      %v2465 = vpop.f32.mrb[0].mxu0
      %v2466 = vadd.f32 %v606, %v2465
      %v2467 = vpop.f32.mrb[0].mxu0
      %v2468 = vpop.f32.mrb[0].mxu0
      %v2469 = vadd.f32 %v606, %v2468
      %v2470 = vpop.f32.mrb[0].mxu0
      %2471 = vmatprep.mubr.bf16.mxu0 0
      %2472 = vmatmul.mubr.bf16.gmra.mrb[0].mxu0 %v1732
      %v2473 = vpop.f32.mrb[0].mxu0
      %v2474 = vadd.f32 %v606, %v2473
      %v2475 = vpop.f32.mrb[0].mxu0
      %v2476 = vpop.f32.mrb[0].mxu0
      %v2477 = vadd.f32 %v606, %v2476
      %v2478 = vpop.f32.mrb[0].mxu0
      %2479 = vmatprep.mubr.bf16.mxu0 0
      %2480 = vmatmul.mubr.bf16.gmra.mrb[0].mxu0 %v1735
      %v2481 = vpop.f32.mrb[0].mxu0
      %v2482 = vadd.f32 %v606, %v2481
      %v2483 = vpop.f32.mrb[0].mxu0
      %v2484 = vpop.f32.mrb[0].mxu0
      %v2485 = vadd.f32 %v606, %v2484
      %v2486 = vpop.f32.mrb[0].mxu0
      %2487 = vmatprep.mubr.bf16.mxu0 0
      %2488 = vmatmul.mubr.bf16.gmra.mrb[0].mxu0 %v1738
      %v2489 = vpop.f32.mrb[0].mxu0
      %v2490 = vadd.f32 %v606, %v2489
      %v2491 = vpop.f32.mrb[0].mxu0
      %v2492 = vpop.f32.mrb[0].mxu0
      %v2493 = vadd.f32 %v606, %v2492
      %v2494 = vpop.f32.mrb[0].mxu0
      %2495 = vmatprep.mubr.bf16.mxu0 0
      %2496 = vmatmul.mubr.bf16.gmra.mrb[0].mxu0 %v1741
      %v2497 = vpop.f32.mrb[0].mxu0
      %v2498 = vadd.f32 %v606, %v2497
      %v2499 = vpop.f32.mrb[0].mxu0
      %v2500 = vpop.f32.mrb[0].mxu0
      %v2501 = vadd.f32 %v606, %v2500
      %v2502 = vpop.f32.mrb[0].mxu0
      %2503 = vmatprep.mubr.bf16.mxu0 0
      %2504 = vmatmul.mubr.bf16.gmra.mrb[0].mxu0 %v1744
      %v2505 = vpop.f32.mrb[0].mxu0
      %v2506 = vadd.f32 %v606, %v2505
      %v2507 = vpop.f32.mrb[0].mxu0
      %v2508 = vpop.f32.mrb[0].mxu0
      %v2509 = vadd.f32 %v606, %v2508
      %v2510 = vpop.f32.mrb[0].mxu0
      %2511 = vmatprep.mubr.bf16.mxu0 0
      %2512 = vmatmul.mubr.bf16.gmra.mrb[0].mxu0 %v1747
      %v2513 = vpop.f32.mrb[0].mxu0
      %v2514 = vadd.f32 %v606, %v2513
      %v2515 = vpop.f32.mrb[0].mxu0
      %v2516 = vpop.f32.mrb[0].mxu0
      %v2517 = vadd.f32 %v606, %v2516
      %v2518 = vpop.f32.mrb[0].mxu0
      %2519 = vmatprep.mubr.bf16.mxu0 0
      %2520 = vmatmul.mubr.bf16.gmra.mrb[0].mxu0 %v1750
      %v2521 = vpop.f32.mrb[0].mxu0
      %v2522 = vadd.f32 %v606, %v2521
      %v2523 = vpop.f32.mrb[0].mxu0
      %v2524 = vpop.f32.mrb[0].mxu0
      %v2525 = vadd.f32 %v606, %v2524
      %v2526 = vpop.f32.mrb[0].mxu0
      %2527 = vmatprep.mubr.bf16.mxu0 0
      %2528 = vmatmul.mubr.bf16.gmra.mrb[0].mxu0 %v1753
      %v2529 = vpop.f32.mrb[0].mxu0
      %v2530 = vadd.f32 %v606, %v2529
      %v2531 = vpop.f32.mrb[0].mxu0
      %v2532 = vpop.f32.mrb[0].mxu0
      %v2533 = vadd.f32 %v606, %v2532
      %v2534 = vpop.f32.mrb[0].mxu0
      %2535 = vmatprep.mubr.bf16.mxu0 0
      %2536 = vmatmul.mubr.bf16.gmra.mrb[0].mxu0 %v1756
      %v2537 = vpop.f32.mrb[0].mxu0
      %v2538 = vadd.f32 %v606, %v2537
      %v2539 = vpop.f32.mrb[0].mxu0
      %v2540 = vpop.f32.mrb[0].mxu0
      %v2541 = vadd.f32 %v606, %v2540
      %v2542 = vpop.f32.mrb[0].mxu0
      %2543 = vmatprep.mubr.bf16.mxu0 0
      %2544 = vmatmul.mubr.bf16.gmra.mrb[0].mxu0 %v1759
      %v2545 = vpop.f32.mrb[0].mxu0
      %v2546 = vadd.f32 %v606, %v2545
      %v2547 = vpop.f32.mrb[0].mxu0
      %v2548 = vpop.f32.mrb[0].mxu0
      %v2549 = vadd.f32 %v606, %v2548
      %v2550 = vpop.f32.mrb[0].mxu0
      %2551 = vmatprep.mubr.bf16.mxu0 0
      %2552 = vmatmul.mubr.bf16.gmra.mrb[0].mxu0 %v1762
      %v2553 = vpop.f32.mrb[0].mxu0
      %v2554 = vadd.f32 %v606, %v2553
      %v2555 = vpop.f32.mrb[0].mxu0
      %v2556 = vpop.f32.mrb[0].mxu0
      %v2557 = vadd.f32 %v606, %v2556
      %v2558 = vpop.f32.mrb[0].mxu0
      %2559 = vmatprep.mubr.bf16.mxu0 0
      %2560 = vmatmul.mubr.bf16.gmra.mrb[0].mxu0 %v1765
      %v2561 = vpop.f32.mrb[0].mxu0
      %v2562 = vadd.f32 %v606, %v2561
      %v2563 = vpop.f32.mrb[0].mxu0
      %v2564 = vpop.f32.mrb[0].mxu0
      %v2565 = vadd.f32 %v606, %v2564
      %v2566 = vpop.f32.mrb[0].mxu0
      %2567 = vmatprep.mubr.bf16.mxu0 0
      %2568 = vmatmul.mubr.bf16.gmra.mrb[0].mxu0 %v1768
      %v2569 = vpop.f32.mrb[0].mxu0
      %v2570 = vadd.f32 %v606, %v2569
      %v2571 = vpop.f32.mrb[0].mxu0
      %v2572 = vpop.f32.mrb[0].mxu0
      %v2573 = vadd.f32 %v606, %v2572
      %v2574 = vpop.f32.mrb[0].mxu0
      %2575 = vmatprep.mubr.bf16.mxu0 0
      %2576 = vmatmul.mubr.bf16.gmra.mrb[0].mxu0 %v1771
      %v2577 = vpop.f32.mrb[0].mxu0
      %v2578 = vadd.f32 %v606, %v2577
      %v2579 = vpop.f32.mrb[0].mxu0
      %v2580 = vpop.f32.mrb[0].mxu0
      %v2581 = vadd.f32 %v606, %v2580
      %v2582 = vpop.f32.mrb[0].mxu0
      %2583 = vmatprep.mubr.bf16.mxu0 0
      %2584 = vmatmul.mubr.bf16.gmra.mrb[0].mxu0 %v1774
      %v2585 = vpop.f32.mrb[0].mxu0
      %v2586 = vadd.f32 %v606, %v2585
      %v2587 = vpop.f32.mrb[0].mxu0
      %v2588 = vpop.f32.mrb[0].mxu0
      %v2589 = vadd.f32 %v606, %v2588
      %v2590 = vpop.f32.mrb[0].mxu0
      %2591 = vmatprep.mubr.bf16.mxu0 0
      %2592 = vmatmul.mubr.bf16.gmra.mrb[0].mxu0 %v1777
      %v2593 = vpop.f32.mrb[0].mxu0
      %v2594 = vadd.f32 %v606, %v2593
      %v2595 = vpop.f32.mrb[0].mxu0
      %v2596 = vpop.f32.mrb[0].mxu0
      %v2597 = vadd.f32 %v606, %v2596
      %v2598 = vpop.f32.mrb[0].mxu0
      %2599 = vmatprep.mubr.bf16.mxu0 0
      %2600 = vmatmul.mubr.bf16.gmra.mrb[0].mxu0 %v1780
      %v2601 = vpop.f32.mrb[0].mxu0
      %v2602 = vadd.f32 %v606, %v2601
      %v2603 = vpop.f32.mrb[0].mxu0
      %v2604 = vpop.f32.mrb[0].mxu0
      %v2605 = vadd.f32 %v606, %v2604
      %v2606 = vpop.f32.mrb[0].mxu0
      %2607 = vmatprep.mubr.bf16.mxu0 0
      %2608 = vmatmul.mubr.bf16.gmra.mrb[0].mxu0 %v1783
      %v2609 = vpop.f32.mrb[0].mxu0
      %v2610 = vadd.f32 %v606, %v2609
      %v2611 = vpop.f32.mrb[0].mxu0
      %v2612 = vpop.f32.mrb[0].mxu0
      %v2613 = vadd.f32 %v606, %v2612
      %v2614 = vpop.f32.mrb[0].mxu0
      %2615 = vmatprep.mubr.bf16.mxu0 0
      %2616 = vmatmul.mubr.bf16.gmra.mrb[0].mxu0 %v1786
      %v2617 = vpop.f32.mrb[0].mxu0
      %v2618 = vadd.f32 %v606, %v2617
      %v2619 = vpop.f32.mrb[0].mxu0
      %v2620 = vpop.f32.mrb[0].mxu0
      %v2621 = vadd.f32 %v606, %v2620
      %v2622 = vpop.f32.mrb[0].mxu0
      %2623 = vmatprep.mubr.bf16.mxu0 0
      %2624 = vmatmul.mubr.bf16.gmra.mrb[0].mxu0 %v1789
      %v2625 = vpop.f32.mrb[0].mxu0
      %v2626 = vadd.f32 %v606, %v2625
      %v2627 = vpop.f32.mrb[0].mxu0
      %v2628 = vpop.f32.mrb[0].mxu0
      %v2629 = vadd.f32 %v606, %v2628
      %v2630 = vpop.f32.mrb[0].mxu0
      %2631 = vmatprep.mubr.bf16.mxu0 0
      %2632 = vmatmul.mubr.bf16.gmra.mrb[0].mxu0 %v1792
      %v2633 = vpop.f32.mrb[0].mxu0
      %v2634 = vadd.f32 %v606, %v2633
      %v2635 = vpop.f32.mrb[0].mxu0
      %v2636 = vpop.f32.mrb[0].mxu0
      %v2637 = vadd.f32 %v606, %v2636
      %v2638 = vpop.f32.mrb[0].mxu0
      %2639 = vmatprep.mubr.bf16.mxu0 0
      %2640 = vmatmul.mubr.bf16.gmra.mrb[0].mxu0 %v1795
      %v2641 = vpop.f32.mrb[0].mxu0
      %v2642 = vadd.f32 %v606, %v2641
      %v2643 = vpop.f32.mrb[0].mxu0
      %v2644 = vpop.f32.mrb[0].mxu0
      %v2645 = vadd.f32 %v606, %v2644
      %v2646 = vpop.f32.mrb[0].mxu0
      %2647 = vmatprep.mubr.bf16.mxu0 0
      %2648 = vmatmul.mubr.bf16.gmra.mrb[0].mxu0 %v1798
      %v2649 = vpop.f32.mrb[0].mxu0
      %v2650 = vadd.f32 %v606, %v2649
      %v2651 = vpop.f32.mrb[0].mxu0
      %v2652 = vpop.f32.mrb[0].mxu0
      %v2653 = vadd.f32 %v606, %v2652
      %v2654 = vpop.f32.mrb[0].mxu0
      %2655 = vmatprep.mubr.bf16.mxu0 0
      %2656 = vmatmul.mubr.bf16.gmra.mrb[0].mxu0 %v1801
      %v2657 = vpop.f32.mrb[0].mxu0
      %v2658 = vadd.f32 %v606, %v2657
      %v2659 = vpop.f32.mrb[0].mxu0
      %v2660 = vpop.f32.mrb[0].mxu0
      %v2661 = vadd.f32 %v606, %v2660
      %v2662 = vpop.f32.mrb[0].mxu0
      %2663 = vmatprep.mubr.bf16.mxu0 0
      %2664 = vmatmul.mubr.bf16.gmra.mrb[0].mxu0 %v1804
      %v2665 = vpop.f32.mrb[0].mxu0
      %v2666 = vadd.f32 %v606, %v2665
      %v2667 = vpop.f32.mrb[0].mxu0
      %v2668 = vpop.f32.mrb[0].mxu0
      %v2669 = vadd.f32 %v606, %v2668
      %v2670 = vpop.f32.mrb[0].mxu0
      %2671 = vmatprep.mubr.bf16.mxu0 0
      %2672 = vmatmul.mubr.bf16.gmra.mrb[0].mxu0 %v1807
      %v2673 = vpop.f32.mrb[0].mxu0
      %v2674 = vadd.f32 %v606, %v2673
      %v2675 = vpop.f32.mrb[0].mxu0
      %v2676 = vpop.f32.mrb[0].mxu0
      %v2677 = vadd.f32 %v606, %v2676
      %v2678 = vpop.f32.mrb[0].mxu0
      %2679 = vmatprep.mubr.bf16.mxu0 0
      %2680 = vmatmul.mubr.bf16.gmra.mrb[0].mxu0 %v1810
      %v2681 = vpop.f32.mrb[0].mxu0
      %v2682 = vadd.f32 %v606, %v2681
      %v2683 = vpop.f32.mrb[0].mxu0
      %v2684 = vpop.f32.mrb[0].mxu0
      %v2685 = vadd.f32 %v606, %v2684
      %v2686 = vpop.f32.mrb[0].mxu0
      %2687 = vmatprep.mubr.bf16.mxu0 0
      %2688 = vmatmul.mubr.bf16.gmra.mrb[0].mxu0 %v1813
      %v2689 = vpop.f32.mrb[0].mxu0
      %v2690 = vadd.f32 %v606, %v2689
      %v2691 = vpop.f32.mrb[0].mxu0
      %v2692 = vpop.f32.mrb[0].mxu0
      %v2693 = vadd.f32 %v606, %v2692
      %v2694 = vpop.f32.mrb[0].mxu0
      %2695 = vmatprep.mubr.bf16.mxu0 0
      %2696 = vmatmul.mubr.bf16.gmra.mrb[0].mxu0 %v1816
      %v2697 = vpop.f32.mrb[0].mxu0
      %v2698 = vadd.f32 %v606, %v2697
      %v2699 = vpop.f32.mrb[0].mxu0
      %v2700 = vpop.f32.mrb[0].mxu0
      %v2701 = vadd.f32 %v606, %v2700
      %v2702 = vpop.f32.mrb[0].mxu0
      %2703 = vmatprep.mubr.bf16.mxu0 0
      %2704 = vmatmul.mubr.bf16.gmra.mrb[0].mxu0 %v1819
      %v2705 = vpop.f32.mrb[0].mxu0
      %v2706 = vadd.f32 %v606, %v2705
      %v2707 = vpop.f32.mrb[0].mxu0
      %v2708 = vpop.f32.mrb[0].mxu0
      %v2709 = vadd.f32 %v606, %v2708
      %v2710 = vpop.f32.mrb[0].mxu0
      %2711 = vmatprep.mubr.bf16.mxu0 0
      %2712 = vmatmul.mubr.bf16.gmra.mrb[0].mxu0 %v1822
      %v2713 = vpop.f32.mrb[0].mxu0
      %v2714 = vadd.f32 %v606, %v2713
      %v2715 = vpop.f32.mrb[0].mxu0
      %v2716 = vpop.f32.mrb[0].mxu0
      %v2717 = vadd.f32 %v606, %v2716
      %v2718 = vpop.f32.mrb[0].mxu0
      %2719 = vmatprep.mubr.bf16.mxu0 0
      %2720 = vmatmul.mubr.bf16.gmra.mrb[0].mxu0 %v1825
      %v2721 = vpop.f32.mrb[0].mxu0
      %v2722 = vadd.f32 %v606, %v2721
      %v2723 = vpop.f32.mrb[0].mxu0
      %v2724 = vpop.f32.mrb[0].mxu0
      %v2725 = vadd.f32 %v606, %v2724
      %v2726 = vpop.f32.mrb[0].mxu0
      %2727 = vmatprep.mubr.bf16.mxu0 0
      %2728 = vmatmul.mubr.bf16.gmra.mrb[0].mxu0 %v1828
      %v2729 = vpop.f32.mrb[0].mxu0
      %v2730 = vadd.f32 %v606, %v2729
      %v2731 = vpop.f32.mrb[0].mxu0
      %v2732 = vpop.f32.mrb[0].mxu0
      %v2733 = vadd.f32 %v606, %v2732
      %v2734 = vpop.f32.mrb[0].mxu0
      %2735 = vmatprep.mubr.bf16.mxu0 0
      %2736 = vmatmul.mubr.bf16.gmra.mrb[0].mxu0 %v1831
      %v2737 = vpop.f32.mrb[0].mxu0
      %v2738 = vadd.f32 %v606, %v2737
      %v2739 = vpop.f32.mrb[0].mxu0
      %v2740 = vpop.f32.mrb[0].mxu0
      %v2741 = vadd.f32 %v606, %v2740
      %v2742 = vpop.f32.mrb[0].mxu0
      %2743 = vmatprep.mubr.bf16.mxu0 0
      %2744 = vmatmul.mubr.bf16.gmra.mrb[0].mxu0 %v1834
      %v2745 = vpop.f32.mrb[0].mxu0
      %v2746 = vadd.f32 %v606, %v2745
      %v2747 = vpop.f32.mrb[0].mxu0
      %v2748 = vpop.f32.mrb[0].mxu0
      %v2749 = vadd.f32 %v606, %v2748
      %v2750 = vpop.f32.mrb[0].mxu0
      %2751 = vmatprep.mubr.bf16.mxu0 0
      %2752 = vmatmul.mubr.bf16.gmra.mrb[0].mxu0 %v1837
      %v2753 = vpop.f32.mrb[0].mxu0
      %v2754 = vadd.f32 %v606, %v2753
      %v2755 = vpop.f32.mrb[0].mxu0
      %v2756 = vpop.f32.mrb[0].mxu0
      %v2757 = vadd.f32 %v606, %v2756
      %v2758 = vpop.f32.mrb[0].mxu0
      %2759 = vmatprep.mubr.bf16.mxu0 0
      %2760 = vmatmul.mubr.bf16.gmra.mrb[0].mxu0 %v1840
      %v2761 = vpop.f32.mrb[0].mxu0
      %v2762 = vadd.f32 %v606, %v2761
      %v2763 = vpop.f32.mrb[0].mxu0
      %v2764 = vpop.f32.mrb[0].mxu0
      %v2765 = vadd.f32 %v606, %v2764
      %v2766 = vpop.f32.mrb[0].mxu0
      %2767 = vmatprep.mubr.bf16.mxu0 0
      %2768 = vmatmul.mubr.bf16.gmra.mrb[0].mxu0 %v1843
      %v2769 = vpop.f32.mrb[0].mxu0
      %v2770 = vadd.f32 %v606, %v2769
      %v2771 = vpop.f32.mrb[0].mxu0
      %v2772 = vpop.f32.mrb[0].mxu0
      %v2773 = vadd.f32 %v606, %v2772
      %v2774 = vpop.f32.mrb[0].mxu0
      %2775 = vmatprep.mubr.bf16.mxu0 0
      %2776 = vmatmul.mubr.bf16.gmra.mrb[0].mxu0 %v1846
      %v2777 = vpop.f32.mrb[0].mxu0
      %v2778 = vadd.f32 %v606, %v2777
      %v2779 = vpop.f32.mrb[0].mxu0
      %v2780 = vpop.f32.mrb[0].mxu0
      %v2781 = vadd.f32 %v606, %v2780
      %v2782 = vpop.f32.mrb[0].mxu0
      %2783 = vmatprep.mubr.bf16.mxu0 0
      %2784 = vmatmul.mubr.bf16.gmra.mrb[0].mxu0 %v1849
      %v2785 = vpop.f32.mrb[0].mxu0
      %v2786 = vadd.f32 %v606, %v2785
      %v2787 = vpop.f32.mrb[0].mxu0
      %v2788 = vpop.f32.mrb[0].mxu0
      %v2789 = vadd.f32 %v606, %v2788
      %v2790 = vpop.f32.mrb[0].mxu0
      %2791 = vmatprep.mubr.bf16.mxu0 0
      %2792 = vmatmul.mubr.bf16.gmra.mrb[0].mxu0 %v1852
      %v2793 = vpop.f32.mrb[0].mxu0
      %v2794 = vadd.f32 %v606, %v2793
      %v2795 = vpop.f32.mrb[0].mxu0
      %v2796 = vpop.f32.mrb[0].mxu0
      %v2797 = vadd.f32 %v606, %v2796
      %v2798 = vpop.f32.mrb[0].mxu0
      %2799 = vmatprep.mubr.bf16.mxu0 0
      %2800 = vmatmul.mubr.bf16.gmra.mrb[0].mxu0 %v1855
      %v2801 = vpop.f32.mrb[0].mxu0
      %v2802 = vadd.f32 %v606, %v2801
      %v2803 = vpop.f32.mrb[0].mxu0
      %v2804 = vpop.f32.mrb[0].mxu0
      %v2805 = vadd.f32 %v606, %v2804
      %v2806 = vpop.f32.mrb[0].mxu0
      %2807 = vmatprep.mubr.bf16.mxu0 0
      %2808 = vmatmul.mubr.bf16.gmra.mrb[0].mxu0 %v1858
      %v2809 = vpop.f32.mrb[0].mxu0
      %v2810 = vadd.f32 %v606, %v2809
      %v2811 = vpop.f32.mrb[0].mxu0
      %v2812 = vpop.f32.mrb[0].mxu0
      %v2813 = vadd.f32 %v606, %v2812
      %v2814 = vpop.f32.mrb[0].mxu0
      %2815 = vmatprep.mubr.bf16.mxu0 0
      %2816 = vmatmul.mubr.bf16.gmra.mrb[0].mxu0 %v1861
      %v2817 = vpop.f32.mrb[0].mxu0
      %v2818 = vadd.f32 %v606, %v2817
      %v2819 = vpop.f32.mrb[0].mxu0
      %v2820 = vpop.f32.mrb[0].mxu0
      %v2821 = vadd.f32 %v606, %v2820
      %v2822 = vpop.f32.mrb[0].mxu0
      %2823 = vmatprep.mubr.bf16.mxu0 0
      %2824 = vmatmul.mubr.bf16.gmra.mrb[0].mxu0 %v1864
      %v2825 = vpop.f32.mrb[0].mxu0
      %v2826 = vadd.f32 %v606, %v2825
      %v2827 = vpop.f32.mrb[0].mxu0
      %v2828 = vpop.f32.mrb[0].mxu0
      %v2829 = vadd.f32 %v606, %v2828
      %v2830 = vpop.f32.mrb[0].mxu0
      %2831 = vmatprep.mubr.bf16.mxu0 0
      %2832 = vmatmul.mubr.bf16.gmra.mrb[0].mxu0 %v1867
      %v2833 = vpop.f32.mrb[0].mxu0
      %v2834 = vadd.f32 %v606, %v2833
      %v2835 = vpop.f32.mrb[0].mxu0
      %v2836 = vpop.f32.mrb[0].mxu0
      %v2837 = vadd.f32 %v606, %v2836
      %v2838 = vpop.f32.mrb[0].mxu0
      %2839 = vmatprep.mubr.bf16.mxu0 0
      %2840 = vmatmul.mubr.bf16.gmra.mrb[0].mxu0 %v1870
      %v2841 = vpop.f32.mrb[0].mxu0
      %v2842 = vadd.f32 %v606, %v2841
      %v2843 = vpop.f32.mrb[0].mxu0
      %v2844 = vpop.f32.mrb[0].mxu0
      %v2845 = vadd.f32 %v606, %v2844
      %v2846 = vpop.f32.mrb[0].mxu0
      %2847 = vmatprep.mubr.bf16.mxu0 0
      %2848 = vmatmul.mubr.bf16.gmra.mrb[0].mxu0 %v1873
      %v2849 = vpop.f32.mrb[0].mxu0
      %v2850 = vadd.f32 %v606, %v2849
      %v2851 = vpop.f32.mrb[0].mxu0
      %v2852 = vpop.f32.mrb[0].mxu0
      %v2853 = vadd.f32 %v606, %v2852
      %v2854 = vpop.f32.mrb[0].mxu0
      %2855 = vmatprep.mubr.bf16.mxu0 0
      %2856 = vmatmul.mubr.bf16.gmra.mrb[0].mxu0 %v1876
      %v2857 = vpop.f32.mrb[0].mxu0
      %v2858 = vadd.f32 %v606, %v2857
      %v2859 = vpop.f32.mrb[0].mxu0
      %v2860 = vpop.f32.mrb[0].mxu0
      %v2861 = vadd.f32 %v606, %v2860
      %v2862 = vpop.f32.mrb[0].mxu0
      %2863 = vmatprep.mubr.bf16.mxu0 0
      %2864 = vmatmul.mubr.bf16.gmra.mrb[0].mxu0 %v1879
      %v2865 = vpop.f32.mrb[0].mxu0
      %v2866 = vadd.f32 %v606, %v2865
      %v2867 = vpop.f32.mrb[0].mxu0
      %v2868 = vpop.f32.mrb[0].mxu0
      %v2869 = vadd.f32 %v606, %v2868
      %v2870 = vpop.f32.mrb[0].mxu0
      %2871 = vmatprep.mubr.bf16.mxu0 0
      %2872 = vmatmul.mubr.bf16.gmra.mrb[0].mxu0 %v1882
      %v2873 = vpop.f32.mrb[0].mxu0
      %v2874 = vadd.f32 %v606, %v2873
      %v2875 = vpop.f32.mrb[0].mxu0
      %v2876 = vpop.f32.mrb[0].mxu0
      %v2877 = vadd.f32 %v606, %v2876
      %v2878 = vpop.f32.mrb[0].mxu0
      %2879 = vmatprep.mubr.bf16.mxu0 0
      %2880 = vmatmul.mubr.bf16.gmra.mrb[0].mxu0 %v1885
      %v2881 = vpop.f32.mrb[0].mxu0
      %v2882 = vadd.f32 %v606, %v2881
      %v2883 = vpop.f32.mrb[0].mxu0
      %v2884 = vpop.f32.mrb[0].mxu0
      %v2885 = vadd.f32 %v606, %v2884
      %v2886 = vpop.f32.mrb[0].mxu0
      %2887 = vmatprep.mubr.bf16.mxu0 0
      %2888 = vmatmul.mubr.bf16.gmra.mrb[0].mxu0 %v1888
      %v2889 = vpop.f32.mrb[0].mxu0
      %v2890 = vadd.f32 %v606, %v2889
      %v2891 = vpop.f32.mrb[0].mxu0
      %v2892 = vpop.f32.mrb[0].mxu0
      %v2893 = vadd.f32 %v606, %v2892
      %v2894 = vpop.f32.mrb[0].mxu0
      %2895 = vmatprep.mubr.bf16.mxu0 0
      %2896 = vmatmul.mubr.bf16.gmra.mrb[0].mxu0 %v1891
      %v2897 = vpop.f32.mrb[0].mxu0
      %v2898 = vadd.f32 %v606, %v2897
      %v2899 = vpop.f32.mrb[0].mxu0
      %v2900 = vpop.f32.mrb[0].mxu0
      %v2901 = vadd.f32 %v606, %v2900
      %v2902 = vpop.f32.mrb[0].mxu0
      %2903 = vmatprep.mubr.bf16.mxu0 0
      %2904 = vmatmul.mubr.bf16.gmra.mrb[0].mxu0 %v1894
      %v2905 = vpop.f32.mrb[0].mxu0
      %v2906 = vadd.f32 %v606, %v2905
      %v2907 = vpop.f32.mrb[0].mxu0
      %v2908 = vpop.f32.mrb[0].mxu0
      %v2909 = vadd.f32 %v606, %v2908
      %v2910 = vpop.f32.mrb[0].mxu0
      %2911 = vmatprep.mubr.bf16.mxu0 0
      %2912 = vmatmul.mubr.bf16.gmra.mrb[0].mxu0 %v1897
      %v2913 = vpop.f32.mrb[0].mxu0
      %v2914 = vadd.f32 %v606, %v2913
      %v2915 = vpop.f32.mrb[0].mxu0
      %v2916 = vpop.f32.mrb[0].mxu0
      %v2917 = vadd.f32 %v606, %v2916
      %v2918 = vpop.f32.mrb[0].mxu0
      %2919 = vmatprep.mubr.bf16.mxu0 0
      %2920 = vmatmul.mubr.bf16.gmra.mrb[0].mxu0 %v1900
      %v2921 = vpop.f32.mrb[0].mxu0
      %v2922 = vadd.f32 %v606, %v2921
      %v2923 = vpop.f32.mrb[0].mxu0
      %v2924 = vpop.f32.mrb[0].mxu0
      %v2925 = vadd.f32 %v606, %v2924
      %v2926 = vpop.f32.mrb[0].mxu0
      %2927 = vmatprep.mubr.bf16.mxu0 0
      %2928 = vmatmul.mubr.bf16.gmra.mrb[0].mxu0 %v1903
      %v2929 = vpop.f32.mrb[0].mxu0
      %v2930 = vadd.f32 %v606, %v2929
      %v2931 = vpop.f32.mrb[0].mxu0
      %v2932 = vpop.f32.mrb[0].mxu0
      %v2933 = vadd.f32 %v606, %v2932
      %v2934 = vpop.f32.mrb[0].mxu0
      %2935 = vmatprep.mubr.bf16.mxu0 0
      %2936 = vmatmul.mubr.bf16.gmra.mrb[0].mxu0 %v1906
      %v2937 = vpop.f32.mrb[0].mxu0
      %v2938 = vadd.f32 %v606, %v2937
      %v2939 = vpop.f32.mrb[0].mxu0
      %v2940 = vpop.f32.mrb[0].mxu0
      %v2941 = vadd.f32 %v606, %v2940
      %v2942 = vpop.f32.mrb[0].mxu0
      %2943 = vmatprep.mubr.bf16.mxu0 0
      %2944 = vmatmul.mubr.bf16.gmra.mrb[0].mxu0 %v1909
      %v2945 = vpop.f32.mrb[0].mxu0
      %v2946 = vadd.f32 %v606, %v2945
      %v2947 = vpop.f32.mrb[0].mxu0
      %v2948 = vpop.f32.mrb[0].mxu0
      %v2949 = vadd.f32 %v606, %v2948
      %v2950 = vpop.f32.mrb[0].mxu0
      %2951 = vmatprep.mubr.bf16.mxu0 0
      %2952 = vmatmul.mubr.bf16.gmra.mrb[0].mxu0 %v1912
      %v2953 = vpop.f32.mrb[0].mxu0
      %v2954 = vadd.f32 %v606, %v2953
      %v2955 = vpop.f32.mrb[0].mxu0
      %v2956 = vpop.f32.mrb[0].mxu0
      %v2957 = vadd.f32 %v606, %v2956
      %v2958 = vpop.f32.mrb[0].mxu0
      %2959 = vmatprep.mubr.bf16.mxu0 0
      %2960 = vmatmul.mubr.bf16.gmra.mrb[0].mxu0 %v1915
      %v2961 = vpop.f32.mrb[0].mxu0
      %v2962 = vadd.f32 %v606, %v2961
      %v2963 = vpop.f32.mrb[0].mxu0
      %v2964 = vpop.f32.mrb[0].mxu0
      %v2965 = vadd.f32 %v606, %v2964
      %v2966 = vpop.f32.mrb[0].mxu0
      %2967 = vmatprep.mubr.bf16.mxu0 0
      %2968 = vmatmul.mubr.bf16.gmra.mrb[0].mxu0 %v1918
      %v2969 = vpop.f32.mrb[0].mxu0
      %v2970 = vadd.f32 %v606, %v2969
      %v2971 = vpop.f32.mrb[0].mxu0
      %v2972 = vpop.f32.mrb[0].mxu0
      %v2973 = vadd.f32 %v606, %v2972
      %v2974 = vpop.f32.mrb[0].mxu0
      %2975 = vmatprep.mubr.bf16.mxu0 0
      %2976 = vmatmul.mubr.bf16.gmra.mrb[0].mxu0 %v1921
      %v2977 = vpop.f32.mrb[0].mxu0
      %v2978 = vadd.f32 %v606, %v2977
      %v2979 = vpop.f32.mrb[0].mxu0
      %v2980 = vpop.f32.mrb[0].mxu0
      %v2981 = vadd.f32 %v606, %v2980
      %v2982 = vpop.f32.mrb[0].mxu0
      %2983 = vmatprep.mubr.bf16.mxu0 0
      %2984 = vmatmul.mubr.bf16.gmra.mrb[0].mxu0 %v1924
      %v2985 = vpop.f32.mrb[0].mxu0
      %v2986 = vadd.f32 %v606, %v2985
      %v2987 = vpop.f32.mrb[0].mxu0
      %v2988 = vpop.f32.mrb[0].mxu0
      %v2989 = vadd.f32 %v606, %v2988
      %v2990 = vpop.f32.mrb[0].mxu0
      %2991 = vmatprep.mubr.bf16.mxu0 0
      %2992 = vmatmul.mubr.bf16.gmra.mrb[0].mxu0 %v1927
      %v2993 = vpop.f32.mrb[0].mxu0
      %v2994 = vadd.f32 %v606, %v2993
      %v2995 = vpop.f32.mrb[0].mxu0
      %v2996 = vpop.f32.mrb[0].mxu0
      %v2997 = vadd.f32 %v606, %v2996
      %v2998 = vpop.f32.mrb[0].mxu0
      %2999 = vmatprep.mubr.bf16.mxu0 0
      %3000 = vmatmul.mubr.bf16.gmra.mrb[0].mxu0 %v1930
      %v3001 = vpop.f32.mrb[0].mxu0
      %v3002 = vadd.f32 %v606, %v3001
      %v3003 = vpop.f32.mrb[0].mxu0
      %v3004 = vpop.f32.mrb[0].mxu0
      %v3005 = vadd.f32 %v606, %v3004
      %v3006 = vpop.f32.mrb[0].mxu0
      %3007 = vmatprep.mubr.bf16.mxu0 0
      %3008 = vmatmul.mubr.bf16.gmra.mrb[0].mxu0 %v1933
      %v3009 = vpop.f32.mrb[0].mxu0
      %v3010 = vadd.f32 %v606, %v3009
      %v3011 = vpop.f32.mrb[0].mxu0
      %v3012 = vpop.f32.mrb[0].mxu0
      %v3013 = vadd.f32 %v606, %v3012
      %v3014 = vpop.f32.mrb[0].mxu0
      %3015 = vmatprep.mubr.bf16.mxu0 0
      %3016 = vmatmul.mubr.bf16.gmra.mrb[0].mxu0 %v1936
      %v3017 = vpop.f32.mrb[0].mxu0
      %v3018 = vadd.f32 %v606, %v3017
      %v3019 = vpop.f32.mrb[0].mxu0
      %v3020 = vpop.f32.mrb[0].mxu0
      %v3021 = vadd.f32 %v606, %v3020
      %v3022 = vpop.f32.mrb[0].mxu0
      %3023 = vmatprep.mubr.bf16.mxu0 0
      %3024 = vmatmul.mubr.bf16.gmra.mrb[0].mxu0 %v1939
      %v3025 = vpop.f32.mrb[0].mxu0
      %v3026 = vadd.f32 %v606, %v3025
      %v3027 = vpop.f32.mrb[0].mxu0
      %v3028 = vpop.f32.mrb[0].mxu0
      %v3029 = vadd.f32 %v606, %v3028
      %v3030 = vpop.f32.mrb[0].mxu0
      %3031 = vmatprep.mubr.bf16.mxu0 0
      %3032 = vmatmul.mubr.bf16.gmra.mrb[0].mxu0 %v1942
      %v3033 = vpop.f32.mrb[0].mxu0
      %v3034 = vadd.f32 %v606, %v3033
      %v3035 = vpop.f32.mrb[0].mxu0
      %v3036 = vpop.f32.mrb[0].mxu0
      %v3037 = vadd.f32 %v606, %v3036
      %v3038 = vpop.f32.mrb[0].mxu0
      %3039 = vmatprep.mubr.bf16.mxu0 0
      %3040 = vmatmul.mubr.bf16.gmra.mrb[0].mxu0 %v1945
      %v3041 = vpop.f32.mrb[0].mxu0
      %v3042 = vadd.f32 %v606, %v3041
      %v3043 = vpop.f32.mrb[0].mxu0
      %v3044 = vpop.f32.mrb[0].mxu0
      %v3045 = vadd.f32 %v606, %v3044
      %v3046 = vpop.f32.mrb[0].mxu0
      %3047 = vmatprep.mubr.bf16.mxu0 0
      %3048 = vmatmul.mubr.bf16.gmra.mrb[0].mxu0 %v1948
      %v3049 = vpop.f32.mrb[0].mxu0
      %v3050 = vadd.f32 %v606, %v3049
      %v3051 = vpop.f32.mrb[0].mxu0
      %v3052 = vpop.f32.mrb[0].mxu0
      %v3053 = vadd.f32 %v606, %v3052
      %v3054 = vpop.f32.mrb[0].mxu0
      %3055 = vmatprep.mubr.bf16.mxu0 0
      %3056 = vmatmul.mubr.bf16.gmra.mrb[0].mxu0 %v1951
      %v3057 = vpop.f32.mrb[0].mxu0
      %v3058 = vadd.f32 %v606, %v3057
      %v3059 = vpop.f32.mrb[0].mxu0
      %v3060 = vpop.f32.mrb[0].mxu0
      %v3061 = vadd.f32 %v606, %v3060
      %v3062 = vpop.f32.mrb[0].mxu0
      %3063 = vmatprep.mubr.bf16.mxu0 0
      %3064 = vmatmul.mubr.bf16.gmra.mrb[0].mxu0 %v1954
      %v3065 = vpop.f32.mrb[0].mxu0
      %v3066 = vadd.f32 %v606, %v3065
      %v3067 = vpop.f32.mrb[0].mxu0
      %v3068 = vpop.f32.mrb[0].mxu0
      %v3069 = vadd.f32 %v606, %v3068
      %v3070 = vpop.f32.mrb[0].mxu0
      %3071 = vmatprep.mubr.bf16.mxu0 0
      %3072 = vmatmul.mubr.bf16.gmra.mrb[0].mxu0 %v1957
      %v3073 = vpop.f32.mrb[0].mxu0
      %v3074 = vadd.f32 %v606, %v3073
      %v3075 = vpop.f32.mrb[0].mxu0
      %v3076 = vpop.f32.mrb[0].mxu0
      %v3077 = vadd.f32 %v606, %v3076
      %v3078 = vpop.f32.mrb[0].mxu0
      %3079 = vmatprep.mubr.bf16.mxu0 0
      %3080 = vmatmul.mubr.bf16.gmra.mrb[0].mxu0 %v1960
      %v3081 = vpop.f32.mrb[0].mxu0
      %v3082 = vadd.f32 %v606, %v3081
      %v3083 = vpop.f32.mrb[0].mxu0
      %v3084 = vpop.f32.mrb[0].mxu0
      %v3085 = vadd.f32 %v606, %v3084
      %v3086 = vpop.f32.mrb[0].mxu0
      %3087 = vmatprep.mubr.bf16.mxu0 0
      %3088 = vmatmul.mubr.bf16.gmra.mrb[0].mxu0 %v1963
      %v3089 = vpop.f32.mrb[0].mxu0
      %v3090 = vadd.f32 %v606, %v3089
      %v3091 = vpop.f32.mrb[0].mxu0
      %v3092 = vpop.f32.mrb[0].mxu0
      %v3093 = vadd.f32 %v606, %v3092
      %v3094 = vpop.f32.mrb[0].mxu0
      %3095 = vmatprep.mubr.bf16.mxu0 0
      %3096 = vmatmul.mubr.bf16.gmra.mrb[0].mxu0 %v1966
      %v3097 = vpop.f32.mrb[0].mxu0
      %v3098 = vadd.f32 %v606, %v3097
      %v3099 = vpop.f32.mrb[0].mxu0
      %v3100 = vpop.f32.mrb[0].mxu0
      %v3101 = vadd.f32 %v606, %v3100
      %v3102 = vpop.f32.mrb[0].mxu0
      %3103 = vmatprep.mubr.bf16.mxu0 0
      %3104 = vmatmul.mubr.bf16.gmra.mrb[0].mxu0 %v1969
      %v3105 = vpop.f32.mrb[0].mxu0
      %v3106 = vadd.f32 %v606, %v3105
      %v3107 = vpop.f32.mrb[0].mxu0
      %v3108 = vpop.f32.mrb[0].mxu0
      %v3109 = vadd.f32 %v606, %v3108
      %v3110 = vpop.f32.mrb[0].mxu0
      %3111 = vmatprep.mubr.bf16.mxu0 0
      %3112 = vmatmul.mubr.bf16.gmra.mrb[0].mxu0 %v1972
      %v3113 = vpop.f32.mrb[0].mxu0
      %v3114 = vadd.f32 %v606, %v3113
      %v3115 = vpop.f32.mrb[0].mxu0
      %v3116 = vpop.f32.mrb[0].mxu0
      %v3117 = vadd.f32 %v606, %v3116
      %v3118 = vpop.f32.mrb[0].mxu0
      %3119 = vmatprep.mubr.bf16.mxu0 0
      %3120 = vmatmul.mubr.bf16.gmra.mrb[0].mxu0 %v1975
      %v3121 = vpop.f32.mrb[0].mxu0
      %v3122 = vadd.f32 %v606, %v3121
      %v3123 = vpop.f32.mrb[0].mxu0
      %v3124 = vpop.f32.mrb[0].mxu0
      %v3125 = vadd.f32 %v606, %v3124
      %v3126 = vpop.f32.mrb[0].mxu0
      %3127 = vmatprep.mubr.bf16.mxu0 0
      %3128 = vmatmul.mubr.bf16.gmra.mrb[0].mxu0 %v1978
      %v3129 = vpop.f32.mrb[0].mxu0
      %v3130 = vadd.f32 %v606, %v3129
      %v3131 = vpop.f32.mrb[0].mxu0
      %v3132 = vpop.f32.mrb[0].mxu0
      %v3133 = vadd.f32 %v606, %v3132
      %v3134 = vpop.f32.mrb[0].mxu0
      %3135 = vmatprep.mubr.bf16.mxu0 0
      %3136 = vmatmul.mubr.bf16.gmra.mrb[0].mxu0 %v1981
      %v3137 = vpop.f32.mrb[0].mxu0
      %v3138 = vadd.f32 %v606, %v3137
      %v3139 = vpop.f32.mrb[0].mxu0
      %v3140 = vpop.f32.mrb[0].mxu0
      %v3141 = vadd.f32 %v606, %v3140
      %v3142 = vpop.f32.mrb[0].mxu0
      %3143 = vmatprep.mubr.bf16.mxu0 0
      %3144 = vmatmul.mubr.bf16.gmra.mrb[0].mxu0 %v1984
      %v3145 = vpop.f32.mrb[0].mxu0
      %v3146 = vadd.f32 %v606, %v3145
      %v3147 = vpop.f32.mrb[0].mxu0
      %v3148 = vpop.f32.mrb[0].mxu0
      %v3149 = vadd.f32 %v606, %v3148
      %v3150 = vpop.f32.mrb[0].mxu0
      %3151 = vmatprep.mubr.bf16.mxu0 0
      %3152 = vmatmul.mubr.bf16.gmra.mrb[0].mxu0 %v1987
      %v3153 = vpop.f32.mrb[0].mxu0
      %v3154 = vadd.f32 %v606, %v3153
      %v3155 = vpop.f32.mrb[0].mxu0
      %v3156 = vpop.f32.mrb[0].mxu0
      %v3157 = vadd.f32 %v606, %v3156
      %v3158 = vpop.f32.mrb[0].mxu0
      %3159 = vmatprep.mubr.bf16.mxu0 0
      %3160 = vmatmul.mubr.bf16.gmra.mrb[0].mxu0 %v1990
      %v3161 = vpop.f32.mrb[0].mxu0
      %v3162 = vadd.f32 %v606, %v3161
      %v3163 = vpop.f32.mrb[0].mxu0
      %v3164 = vpop.f32.mrb[0].mxu0
      %v3165 = vadd.f32 %v606, %v3164
      %v3166 = vpop.f32.mrb[0].mxu0
      %3167 = vmatprep.mubr.bf16.mxu0 0
      %3168 = vmatmul.mubr.bf16.gmra.mrb[0].mxu0 %v1993
      %v3169 = vpop.f32.mrb[0].mxu0
      %v3170 = vadd.f32 %v606, %v3169
      %v3171 = vpop.f32.mrb[0].mxu0
      %v3172 = vpop.f32.mrb[0].mxu0
      %v3173 = vadd.f32 %v606, %v3172
      %v3174 = vpop.f32.mrb[0].mxu0
      %3175 = vmatprep.mubr.bf16.mxu0 0
      %3176 = vmatmul.mubr.bf16.gmra.mrb[0].mxu0 %v1996
      %v3177 = vpop.f32.mrb[0].mxu0
      %v3178 = vadd.f32 %v606, %v3177
      %v3179 = vpop.f32.mrb[0].mxu0
      %v3180 = vpop.f32.mrb[0].mxu0
      %v3181 = vadd.f32 %v606, %v3180
      %v3182 = vpop.f32.mrb[0].mxu0
      %3183 = vmatprep.mubr.bf16.mxu0 0
      %3184 = vmatmul.mubr.bf16.gmra.mrb[0].mxu0 %v1999
      %v3185 = vpop.f32.mrb[0].mxu0
      %v3186 = vadd.f32 %v606, %v3185
      %v3187 = vpop.f32.mrb[0].mxu0
      %v3188 = vpop.f32.mrb[0].mxu0
      %v3189 = vadd.f32 %v606, %v3188
      %v3190 = vpop.f32.mrb[0].mxu0
      %3191 = vmatprep.mubr.bf16.mxu0 0
      %3192 = vmatmul.mubr.bf16.gmra.mrb[0].mxu0 %v2002
      %v3193 = vpop.f32.mrb[0].mxu0
      %v3194 = vadd.f32 %v606, %v3193
      %v3195 = vpop.f32.mrb[0].mxu0
      %v3196 = vpop.f32.mrb[0].mxu0
      %v3197 = vadd.f32 %v606, %v3196
      %v3198 = vpop.f32.mrb[0].mxu0
      %3199 = vmatprep.mubr.bf16.mxu0 0
      %3200 = vmatmul.mubr.bf16.gmra.mrb[0].mxu0 %v2005
      %v3201 = vpop.f32.mrb[0].mxu0
      %v3202 = vadd.f32 %v606, %v3201
      %v3203 = vpop.f32.mrb[0].mxu0
      %v3204 = vpop.f32.mrb[0].mxu0
      %v3205 = vadd.f32 %v606, %v3204
      %v3206 = vpop.f32.mrb[0].mxu0
      %3207 = vmatprep.mubr.bf16.mxu0 0
      %3208 = vmatmul.mubr.bf16.gmra.mrb[0].mxu0 %v2008
      %v3209 = vpop.f32.mrb[0].mxu0
      %v3210 = vadd.f32 %v606, %v3209
      %v3211 = vpop.f32.mrb[0].mxu0
      %v3212 = vpop.f32.mrb[0].mxu0
      %v3213 = vadd.f32 %v606, %v3212
      %v3214 = vpop.f32.mrb[0].mxu0
      %3215 = vmatprep.mubr.bf16.mxu0 0
      %3216 = vmatmul.mubr.bf16.gmra.mrb[0].mxu0 %v2011
      %v3217 = vpop.f32.mrb[0].mxu0
      %v3218 = vadd.f32 %v606, %v3217
      %v3219 = vpop.f32.mrb[0].mxu0
      %v3220 = vpop.f32.mrb[0].mxu0
      %v3221 = vadd.f32 %v606, %v3220
      %v3222 = vpop.f32.mrb[0].mxu0
      %3223 = vmatprep.mubr.bf16.mxu0 0
      %3224 = vmatmul.mubr.bf16.gmra.mrb[0].mxu0 %v2014
      %v3225 = vpop.f32.mrb[0].mxu0
      %v3226 = vadd.f32 %v606, %v3225
      %v3227 = vpop.f32.mrb[0].mxu0
      %v3228 = vpop.f32.mrb[0].mxu0
      %v3229 = vadd.f32 %v606, %v3228
      %v3230 = vpop.f32.mrb[0].mxu0
      %3231 = vmatprep.mubr.bf16.mxu0 0
      %3232 = vmatmul.mubr.bf16.gmra.mrb[0].mxu0 %v2017
      %v3233 = vpop.f32.mrb[0].mxu0
      %v3234 = vadd.f32 %v606, %v3233
      %v3235 = vpop.f32.mrb[0].mxu0
      %v3236 = vpop.f32.mrb[0].mxu0
      %v3237 = vadd.f32 %v606, %v3236
      %v3238 = vpop.f32.mrb[0].mxu0
      %3239 = vmatprep.mubr.bf16.mxu0 0
      %3240 = vmatmul.mubr.bf16.gmra.mrb[0].mxu0 %v2020
      %v3241 = vpop.f32.mrb[0].mxu0
      %v3242 = vadd.f32 %v606, %v3241
      %v3243 = vpop.f32.mrb[0].mxu0
      %v3244 = vpop.f32.mrb[0].mxu0
      %v3245 = vadd.f32 %v606, %v3244
      %v3246 = vpop.f32.mrb[0].mxu0
      %3247 = vmatprep.mubr.bf16.mxu0 0
      %3248 = vmatmul.mubr.bf16.gmra.mrb[0].mxu0 %v2023
      %v3249 = vpop.f32.mrb[0].mxu0
      %v3250 = vadd.f32 %v606, %v3249
      %v3251 = vpop.f32.mrb[0].mxu0
      %v3252 = vpop.f32.mrb[0].mxu0
      %v3253 = vadd.f32 %v606, %v3252
      %v3254 = vpop.f32.mrb[0].mxu0
      %3255 = vmatprep.mubr.bf16.mxu0 0
      %3256 = vmatmul.mubr.bf16.gmra.mrb[0].mxu0 %v2026
      %v3257 = vpop.f32.mrb[0].mxu0
      %v3258 = vadd.f32 %v606, %v3257
      %v3259 = vpop.f32.mrb[0].mxu0
      %v3260 = vpop.f32.mrb[0].mxu0
      %v3261 = vadd.f32 %v606, %v3260
      %v3262 = vpop.f32.mrb[0].mxu0
      %3263 = vmatprep.mubr.bf16.mxu0 0
      %3264 = vmatmul.mubr.bf16.gmra.mrb[0].mxu0 %v2029
      %v3265 = vpop.f32.mrb[0].mxu0
      %v3266 = vadd.f32 %v606, %v3265
      %v3267 = vpop.f32.mrb[0].mxu0
      %v3268 = vpop.f32.mrb[0].mxu0
      %v3269 = vadd.f32 %v606, %v3268
      %v3270 = vpop.f32.mrb[0].mxu0
      %3271 = vmatprep.mubr.bf16.mxu0 0
      %3272 = vmatmul.mubr.bf16.gmra.mrb[0].mxu0 %v2032
      %v3273 = vpop.f32.mrb[0].mxu0
      %v3274 = vadd.f32 %v606, %v3273
      %v3275 = vpop.f32.mrb[0].mxu0
      %v3276 = vpop.f32.mrb[0].mxu0
      %v3277 = vadd.f32 %v606, %v3276
      %v3278 = vpop.f32.mrb[0].mxu0
      %3279 = vmatprep.mubr.bf16.mxu0 0
      %3280 = vmatmul.mubr.bf16.gmra.mrb[0].mxu0 %v2035
      %v3281 = vpop.f32.mrb[0].mxu0
      %v3282 = vadd.f32 %v606, %v3281
      %v3283 = vpop.f32.mrb[0].mxu0
      %v3284 = vpop.f32.mrb[0].mxu0
      %v3285 = vadd.f32 %v606, %v3284
      %v3286 = vpop.f32.mrb[0].mxu0
      %3287 = vmatprep.mubr.bf16.mxu0 0
      %3288 = vmatmul.mubr.bf16.gmra.mrb[0].mxu0 %v2038
      %v3289 = vpop.f32.mrb[0].mxu0
      %v3290 = vadd.f32 %v606, %v3289
      %v3291 = vpop.f32.mrb[0].mxu0
      %v3292 = vpop.f32.mrb[0].mxu0
      %v3293 = vadd.f32 %v606, %v3292
      %v3294 = vpop.f32.mrb[0].mxu0
      %3295 = vmatprep.mubr.bf16.mxu0 0
      %3296 = vmatmul.mubr.bf16.gmra.mrb[0].mxu0 %v2041
      %v3297 = vpop.f32.mrb[0].mxu0
      %v3298 = vadd.f32 %v606, %v3297
      %v3299 = vpop.f32.mrb[0].mxu0
      %v3300 = vpop.f32.mrb[0].mxu0
      %v3301 = vadd.f32 %v606, %v3300
      %v3302 = vpop.f32.mrb[0].mxu0
      %3303 = vmatprep.mubr.bf16.mxu0 0
      %3304 = vmatmul.mubr.bf16.gmra.mrb[0].mxu0 %v2044
      %v3305 = vpop.f32.mrb[0].mxu0
      %v3306 = vadd.f32 %v606, %v3305
      %v3307 = vpop.f32.mrb[0].mxu0
      %v3308 = vpop.f32.mrb[0].mxu0
      %v3309 = vadd.f32 %v606, %v3308
      %v3310 = vpop.f32.mrb[0].mxu0
      %3311 = vmatprep.mubr.bf16.mxu0 0
      %3312 = vmatmul.mubr.bf16.gmra.mrb[0].mxu0 %v2047
      %v3313 = vpop.f32.mrb[0].mxu0
      %v3314 = vadd.f32 %v606, %v3313
      %v3315 = vpop.f32.mrb[0].mxu0
      %v3316 = vpop.f32.mrb[0].mxu0
      %v3317 = vadd.f32 %v606, %v3316
      %v3318 = vpop.f32.mrb[0].mxu0
      %3319 = vmatprep.mubr.bf16.mxu0 0
      %3320 = vmatmul.mubr.bf16.gmra.mrb[0].mxu0 %v2050
      %v3321 = vpop.f32.mrb[0].mxu0
      %v3322 = vadd.f32 %v606, %v3321
      %v3323 = vpop.f32.mrb[0].mxu0
      %v3324 = vpop.f32.mrb[0].mxu0
      %v3325 = vadd.f32 %v606, %v3324
      %v3326 = vpop.f32.mrb[0].mxu0
      %3327 = vmatprep.mubr.bf16.mxu0 0
      %3328 = vmatmul.mubr.bf16.gmra.mrb[0].mxu0 %v2053
      %v3329 = vpop.f32.mrb[0].mxu0
      %v3330 = vadd.f32 %v606, %v3329
      %v3331 = vpop.f32.mrb[0].mxu0
      %v3332 = vpop.f32.mrb[0].mxu0
      %v3333 = vadd.f32 %v606, %v3332
      %v3334 = vpop.f32.mrb[0].mxu0
      %3335 = vmatprep.mubr.bf16.mxu0 0
      %3336 = vmatmul.mubr.bf16.gmra.mrb[0].mxu0 %v2056
      %v3337 = vpop.f32.mrb[0].mxu0
      %v3338 = vadd.f32 %v606, %v3337
      %v3339 = vpop.f32.mrb[0].mxu0
      %v3340 = vpop.f32.mrb[0].mxu0
      %v3341 = vadd.f32 %v606, %v3340
      %v3342 = vpop.f32.mrb[0].mxu0
      %3343 = vmatprep.mubr.bf16.mxu0 0
      %3344 = vmatmul.mubr.bf16.gmra.mrb[0].mxu0 %v2059
      %v3345 = vpop.f32.mrb[0].mxu0
      %v3346 = vadd.f32 %v606, %v3345
      %v3347 = vpop.f32.mrb[0].mxu0
      %v3348 = vpop.f32.mrb[0].mxu0
      %v3349 = vadd.f32 %v606, %v3348
      %v3350 = vpop.f32.mrb[0].mxu0
      %3351 = vmatprep.mubr.bf16.mxu0 0
      %3352 = vmatmul.mubr.bf16.gmra.mrb[0].mxu0 %v2062
      %v3353 = vpop.f32.mrb[0].mxu0
      %v3354 = vadd.f32 %v606, %v3353
      %v3355 = vpop.f32.mrb[0].mxu0
      %v3356 = vpop.f32.mrb[0].mxu0
      %v3357 = vadd.f32 %v606, %v3356
      %v3358 = vpop.f32.mrb[0].mxu0
      %3359 = vmatprep.mubr.bf16.mxu0 0
      %3360 = vmatmul.mubr.bf16.gmra.mrb[0].mxu0 %v2065
      %v3361 = vpop.f32.mrb[0].mxu0
      %v3362 = vadd.f32 %v606, %v3361
      %v3363 = vpop.f32.mrb[0].mxu0
      %v3364 = vpop.f32.mrb[0].mxu0
      %v3365 = vadd.f32 %v606, %v3364
      %v3366 = vpop.f32.mrb[0].mxu0
      %3367 = vmatprep.mubr.bf16.mxu0 0
      %3368 = vmatmul.mubr.bf16.gmra.mrb[0].mxu0 %v2068
      %v3369 = vpop.f32.mrb[0].mxu0
      %v3370 = vadd.f32 %v606, %v3369
      %v3371 = vpop.f32.mrb[0].mxu0
      %v3372 = vpop.f32.mrb[0].mxu0
      %v3373 = vadd.f32 %v606, %v3372
      %v3374 = vpop.f32.mrb[0].mxu0
      %3375 = vmatprep.mubr.bf16.mxu0 0
      %3376 = vmatmul.mubr.bf16.gmra.mrb[0].mxu0 %v2071
      %v3377 = vpop.f32.mrb[0].mxu0
      %v3378 = vadd.f32 %v606, %v3377
      %v3379 = vpop.f32.mrb[0].mxu0
      %v3380 = vpop.f32.mrb[0].mxu0
      %v3381 = vadd.f32 %v606, %v3380
      %v3382 = vpop.f32.mrb[0].mxu0
      %3383 = vmatprep.mubr.bf16.mxu0 0
      %3384 = vmatmul.mubr.bf16.gmra.mrb[0].mxu0 %v2074
      %v3385 = vpop.f32.mrb[0].mxu0
      %v3386 = vadd.f32 %v606, %v3385
      %v3387 = vpop.f32.mrb[0].mxu0
      %v3388 = vpop.f32.mrb[0].mxu0
      %v3389 = vadd.f32 %v606, %v3388
      %v3390 = vpop.f32.mrb[0].mxu0
      %3391 = vmatprep.mubr.bf16.mxu0 0
      %3392 = vmatmul.mubr.bf16.gmra.mrb[0].mxu0 %v2077
      %v3393 = vpop.f32.mrb[0].mxu0
      %v3394 = vadd.f32 %v606, %v3393
      %v3395 = vpop.f32.mrb[0].mxu0
      %v3396 = vpop.f32.mrb[0].mxu0
      %v3397 = vadd.f32 %v606, %v3396
      %v3398 = vpop.f32.mrb[0].mxu0
      %3399 = vmatprep.mubr.bf16.mxu0 0
      %3400 = vmatmul.mubr.bf16.gmra.mrb[0].mxu0 %v2080
      %v3401 = vpop.f32.mrb[0].mxu0
      %v3402 = vadd.f32 %v606, %v3401
      %v3403 = vpop.f32.mrb[0].mxu0
      %v3404 = vpop.f32.mrb[0].mxu0
      %v3405 = vadd.f32 %v606, %v3404
      %v3406 = vpop.f32.mrb[0].mxu0
      %3407 = vmatprep.mubr.bf16.mxu0 0
      %3408 = vmatmul.mubr.bf16.gmra.mrb[0].mxu0 %v2083
      %v3409 = vpop.f32.mrb[0].mxu0
      %v3410 = vadd.f32 %v606, %v3409
      %v3411 = vpop.f32.mrb[0].mxu0
      %v3412 = vpop.f32.mrb[0].mxu0
      %v3413 = vadd.f32 %v606, %v3412
      %v3414 = vpop.f32.mrb[0].mxu0
      %3415 = vmatprep.mubr.bf16.mxu0 0
      %3416 = vmatmul.mubr.bf16.gmra.mrb[0].mxu0 %v2086
      %v3417 = vpop.f32.mrb[0].mxu0
      %v3418 = vadd.f32 %v606, %v3417
      %v3419 = vpop.f32.mrb[0].mxu0
      %v3420 = vpop.f32.mrb[0].mxu0
      %v3421 = vadd.f32 %v606, %v3420
      %v3422 = vpop.f32.mrb[0].mxu0
      %3423 = vmatprep.mubr.bf16.mxu0 0
      %3424 = vmatmul.mubr.bf16.gmra.mrb[0].mxu0 %v2089
      %v3425 = vpop.f32.mrb[0].mxu0
      %v3426 = vadd.f32 %v606, %v3425
      %v3427 = vpop.f32.mrb[0].mxu0
      %v3428 = vpop.f32.mrb[0].mxu0
      %v3429 = vadd.f32 %v606, %v3428
      %v3430 = vpop.f32.mrb[0].mxu0
      %3431 = vmatprep.mubr.bf16.mxu0 0
      %3432 = vmatmul.mubr.bf16.gmra.mrb[0].mxu0 %v2092
      %v3433 = vpop.f32.mrb[0].mxu0
      %v3434 = vadd.f32 %v606, %v3433
      %v3435 = vpop.f32.mrb[0].mxu0
      %v3436 = vpop.f32.mrb[0].mxu0
      %v3437 = vadd.f32 %v606, %v3436
      %v3438 = vpop.f32.mrb[0].mxu0
      %3439 = vmatprep.mubr.bf16.mxu0 0
      %3440 = vmatmul.mubr.bf16.gmra.mrb[0].mxu0 %v2095
      %v3441 = vpop.f32.mrb[0].mxu0
      %v3442 = vadd.f32 %v606, %v3441
      %v3443 = vpop.f32.mrb[0].mxu0
      %v3444 = vpop.f32.mrb[0].mxu0
      %v3445 = vadd.f32 %v606, %v3444
      %v3446 = vpop.f32.mrb[0].mxu0
      %3447 = vmatprep.mubr.bf16.mxu0 0
      %3448 = vmatmul.mubr.bf16.gmra.mrb[0].mxu0 %v2098
      %v3449 = vpop.f32.mrb[0].mxu0
      %v3450 = vadd.f32 %v606, %v3449
      %v3451 = vpop.f32.mrb[0].mxu0
      %v3452 = vpop.f32.mrb[0].mxu0
      %v3453 = vadd.f32 %v606, %v3452
      %v3454 = vpop.f32.mrb[0].mxu0
      %3455 = vmatprep.mubr.bf16.mxu0 0
      %3456 = vmatmul.mubr.bf16.gmra.mrb[0].mxu0 %v2101
      %v3457 = vpop.f32.mrb[0].mxu0
      %v3458 = vadd.f32 %v606, %v3457
      %v3459 = vpop.f32.mrb[0].mxu0
      %v3460 = vpop.f32.mrb[0].mxu0
      %v3461 = vadd.f32 %v606, %v3460
      %v3462 = vpop.f32.mrb[0].mxu0
      %3463 = vmatprep.mubr.bf16.mxu0 0
      %3464 = vmatmul.mubr.bf16.gmra.mrb[0].mxu0 %v2104
      %v3465 = vpop.f32.mrb[0].mxu0
      %v3466 = vadd.f32 %v606, %v3465
      %v3467 = vpop.f32.mrb[0].mxu0
      %v3468 = vpop.f32.mrb[0].mxu0
      %v3469 = vadd.f32 %v606, %v3468
      %v3470 = vpop.f32.mrb[0].mxu0
      %3471 = vmatprep.mubr.bf16.mxu0 0
      %3472 = vmatmul.mubr.bf16.gmra.mrb[0].mxu0 %v2107
      %v3473 = vpop.f32.mrb[0].mxu0
      %v3474 = vadd.f32 %v606, %v3473
      %v3475 = vpop.f32.mrb[0].mxu0
      %v3476 = vpop.f32.mrb[0].mxu0
      %v3477 = vadd.f32 %v606, %v3476
      %v3478 = vpop.f32.mrb[0].mxu0
      %3479 = vmatprep.mubr.bf16.mxu0 0
      %3480 = vmatmul.mubr.bf16.gmra.mrb[0].mxu0 %v2110
      %v3481 = vpop.f32.mrb[0].mxu0
      %v3482 = vadd.f32 %v606, %v3481
      %v3483 = vpop.f32.mrb[0].mxu0
      %v3484 = vpop.f32.mrb[0].mxu0
      %v3485 = vadd.f32 %v606, %v3484
      %v3486 = vpop.f32.mrb[0].mxu0
      %3487 = vmatprep.mubr.bf16.mxu0 0
      %3488 = vmatmul.mubr.bf16.gmra.mrb[0].mxu0 %v2113
      %v3489 = vpop.f32.mrb[0].mxu0
      %v3490 = vadd.f32 %v606, %v3489
      %v3491 = vpop.f32.mrb[0].mxu0
      %v3492 = vpop.f32.mrb[0].mxu0
      %v3493 = vadd.f32 %v606, %v3492
      %v3494 = vpop.f32.mrb[0].mxu0
      %3495 = vmatprep.mubr.bf16.mxu0 0
      %3496 = vmatmul.mubr.bf16.gmra.mrb[0].mxu0 %v2116
      %v3497 = vpop.f32.mrb[0].mxu0
      %v3498 = vadd.f32 %v606, %v3497
      %v3499 = vpop.f32.mrb[0].mxu0
      %v3500 = vpop.f32.mrb[0].mxu0
      %v3501 = vadd.f32 %v606, %v3500
      %v3502 = vpop.f32.mrb[0].mxu0
      %3503 = vmatprep.mubr.bf16.mxu0 0
      %3504 = vmatmul.mubr.bf16.gmra.mrb[0].mxu0 %v2119
      %v3505 = vpop.f32.mrb[0].mxu0
      %v3506 = vadd.f32 %v606, %v3505
      %v3507 = vpop.f32.mrb[0].mxu0
      %v3508 = vpop.f32.mrb[0].mxu0
      %v3509 = vadd.f32 %v606, %v3508
      %v3510 = vpop.f32.mrb[0].mxu0
      %3511 = vmatprep.mubr.bf16.mxu0 0
      %3512 = vmatmul.mubr.bf16.gmra.mrb[0].mxu0 %v2122
      %v3513 = vpop.f32.mrb[0].mxu0
      %v3514 = vadd.f32 %v606, %v3513
      %v3515 = vpop.f32.mrb[0].mxu0
      %v3516 = vpop.f32.mrb[0].mxu0
      %v3517 = vadd.f32 %v606, %v3516
      %v3518 = vpop.f32.mrb[0].mxu0
      %3519 = vmatprep.mubr.bf16.mxu0 0
      %3520 = vmatmul.mubr.bf16.gmra.mrb[0].mxu0 %v2125
      %v3521 = vpop.f32.mrb[0].mxu0
      %v3522 = vadd.f32 %v606, %v3521
      %v3523 = vpop.f32.mrb[0].mxu0
      %v3524 = vpop.f32.mrb[0].mxu0
      %v3525 = vadd.f32 %v606, %v3524
      %v3526 = vpop.f32.mrb[0].mxu0
      %3527 = vmatprep.mubr.bf16.mxu0 0
      %3528 = vmatmul.mubr.bf16.gmra.mrb[0].mxu0 %v2128
      %v3529 = vpop.f32.mrb[0].mxu0
      %v3530 = vadd.f32 %v606, %v3529
      %v3531 = vpop.f32.mrb[0].mxu0
      %v3532 = vpop.f32.mrb[0].mxu0
      %v3533 = vadd.f32 %v606, %v3532
      %v3534 = vpop.f32.mrb[0].mxu0
      %3535 = vmatprep.mubr.bf16.mxu0 0
      %3536 = vmatmul.mubr.bf16.gmra.mrb[0].mxu0 %v2131
      %v3537 = vpop.f32.mrb[0].mxu0
      %v3538 = vadd.f32 %v606, %v3537
      %v3539 = vpop.f32.mrb[0].mxu0
      %v3540 = vpop.f32.mrb[0].mxu0
      %v3541 = vadd.f32 %v606, %v3540
      %v3542 = vpop.f32.mrb[0].mxu0
      %3543 = vmatprep.mubr.bf16.mxu0 0
      %3544 = vmatmul.mubr.bf16.gmra.mrb[0].mxu0 %v2134
      %v3545 = vpop.f32.mrb[0].mxu0
      %v3546 = vadd.f32 %v606, %v3545
      %v3547 = vpop.f32.mrb[0].mxu0
      %v3548 = vpop.f32.mrb[0].mxu0
      %v3549 = vadd.f32 %v606, %v3548
      %v3550 = vpop.f32.mrb[0].mxu0
      %3551 = vmatprep.mubr.bf16.mxu0 0
      %3552 = vmatmul.mubr.bf16.gmra.mrb[0].mxu0 %v2137
      %v3553 = vpop.f32.mrb[0].mxu0
      %v3554 = vadd.f32 %v606, %v3553
      %v3555 = vpop.f32.mrb[0].mxu0
      %v3556 = vpop.f32.mrb[0].mxu0
      %v3557 = vadd.f32 %v606, %v3556
      %v3558 = vpop.f32.mrb[0].mxu0
      %3559 = vmatprep.mubr.bf16.mxu0 0
      %3560 = vmatmul.mubr.bf16.gmra.mrb[0].mxu0 %v2140
      %v3561 = vpop.f32.mrb[0].mxu0
      %v3562 = vadd.f32 %v606, %v3561
      %v3563 = vpop.f32.mrb[0].mxu0
      %v3564 = vpop.f32.mrb[0].mxu0
      %v3565 = vadd.f32 %v606, %v3564
      %v3566 = vpop.f32.mrb[0].mxu0
      %3567 = vmatprep.mubr.bf16.mxu0 0
      %3568 = vmatmul.mubr.bf16.gmra.mrb[0].mxu0 %v2143
      %v3569 = vpop.f32.mrb[0].mxu0
      %v3570 = vadd.f32 %v606, %v3569
      %v3571 = vpop.f32.mrb[0].mxu0
      %v3572 = vpop.f32.mrb[0].mxu0
      %v3573 = vadd.f32 %v606, %v3572
      %v3574 = vpop.f32.mrb[0].mxu0
      %3575 = vmatprep.mubr.bf16.mxu0 0
      %3576 = vmatmul.mubr.bf16.gmra.mrb[0].mxu0 %v2146
      %v3577 = vpop.f32.mrb[0].mxu0
      %v3578 = vadd.f32 %v606, %v3577
      %v3579 = vpop.f32.mrb[0].mxu0
      %v3580 = vpop.f32.mrb[0].mxu0
      %v3581 = vadd.f32 %v606, %v3580
      %v3582 = vpop.f32.mrb[0].mxu0
      %3583 = vmatprep.mubr.bf16.mxu0 0
      %3584 = vmatmul.mubr.bf16.gmra.mrb[0].mxu0 %v2149
      %v3585 = vpop.f32.mrb[0].mxu0
      %v3586 = vadd.f32 %v606, %v3585
      %v3587 = vpop.f32.mrb[0].mxu0
      %v3588 = vpop.f32.mrb[0].mxu0
      %v3589 = vadd.f32 %v606, %v3588
      %v3590 = vpop.f32.mrb[0].mxu0
      %3591 = vmatprep.mubr.bf16.mxu0 0
      %3592 = vmatmul.mubr.bf16.gmra.mrb[0].mxu0 %v2152
      %v3593 = vpop.f32.mrb[0].mxu0
      %v3594 = vadd.f32 %v606, %v3593
      %v3595 = vpop.f32.mrb[0].mxu0
      %v3596 = vpop.f32.mrb[0].mxu0
      %v3597 = vadd.f32 %v606, %v3596
      %v3598 = vpop.f32.mrb[0].mxu0
      %3599 = vmatprep.mubr.bf16.mxu0 0
      %3600 = vmatmul.mubr.bf16.gmra.mrb[0].mxu0 %v2155
      %v3601 = vpop.f32.mrb[0].mxu0
      %v3602 = vadd.f32 %v606, %v3601
      %v3603 = vpop.f32.mrb[0].mxu0
      %v3604 = vpop.f32.mrb[0].mxu0
      %v3605 = vadd.f32 %v606, %v3604
      %v3606 = vpop.f32.mrb[0].mxu0
      %3607 = vmatprep.mubr.bf16.mxu0 0
      %3608 = vmatmul.mubr.bf16.gmra.mrb[0].mxu0 %v2158
      %v3609 = vpop.f32.mrb[0].mxu0
      %v3610 = vadd.f32 %v606, %v3609
      %v3611 = vpop.f32.mrb[0].mxu0
      %v3612 = vpop.f32.mrb[0].mxu0
      %v3613 = vadd.f32 %v606, %v3612
      %v3614 = vpop.f32.mrb[0].mxu0
      %3615 = vmatprep.mubr.bf16.mxu0 0
      %3616 = vmatmul.mubr.bf16.gmra.mrb[0].mxu0 %v2161
      %v3617 = vpop.f32.mrb[0].mxu0
      %v3618 = vadd.f32 %v606, %v3617
      %v3619 = vpop.f32.mrb[0].mxu0
      %v3620 = vpop.f32.mrb[0].mxu0
      %v3621 = vadd.f32 %v606, %v3620
      %v3622 = vpop.f32.mrb[0].mxu0
      %3623 = vmatprep.mubr.bf16.mxu0 0
      %3624 = vmatmul.mubr.bf16.gmra.mrb[0].mxu0 %v2164
      %v3625 = vpop.f32.mrb[0].mxu0
      %v3626 = vadd.f32 %v606, %v3625
      %v3627 = vpop.f32.mrb[0].mxu0
      %v3628 = vpop.f32.mrb[0].mxu0
      %v3629 = vadd.f32 %v606, %v3628
      %v3630 = vpop.f32.mrb[0].mxu0
      %3631 = vmatprep.mubr.bf16.mxu0 0
      %3632 = vmatmul.mubr.bf16.gmra.mrb[0].mxu0 %v2167
      %v3633 = vpop.f32.mrb[0].mxu0
      %v3634 = vadd.f32 %v606, %v3633
      %v3635 = vpop.f32.mrb[0].mxu0
      %v3636 = vpop.f32.mrb[0].mxu0
      %v3637 = vadd.f32 %v606, %v3636
      %v3638 = vpop.f32.mrb[0].mxu0
      %3639 = vmatprep.mubr.bf16.mxu0 0
      %3640 = vmatmul.mubr.bf16.gmra.mrb[0].mxu0 %v2170
      %v3641 = vpop.f32.mrb[0].mxu0
      %v3642 = vadd.f32 %v606, %v3641
      %v3643 = vpop.f32.mrb[0].mxu0
      %v3644 = vpop.f32.mrb[0].mxu0
      %v3645 = vadd.f32 %v606, %v3644
      %v3646 = vpop.f32.mrb[0].mxu0
      %3647 = vmatprep.mubr.bf16.mxu0 0
      %3648 = vmatmul.mubr.bf16.gmra.mrb[0].mxu0 %v2173
      %v3649 = vpop.f32.mrb[0].mxu0
      %v3650 = vadd.f32 %v606, %v3649
      %v3651 = vpop.f32.mrb[0].mxu0
      %v3652 = vpop.f32.mrb[0].mxu0
      %v3653 = vadd.f32 %v606, %v3652
      %v3654 = vpop.f32.mrb[0].mxu0
      %3655 = vmatprep.mubr.bf16.mxu0 0
      %3656 = vmatmul.mubr.bf16.gmra.mrb[0].mxu0 %v2176
      %v3657 = vpop.f32.mrb[0].mxu0
      %v3658 = vadd.f32 %v606, %v3657
      %v3659 = vpop.f32.mrb[0].mxu0
      %v3660 = vpop.f32.mrb[0].mxu0
      %v3661 = vadd.f32 %v606, %v3660
      %v3662 = vpop.f32.mrb[0].mxu0
      %3663 = vmatprep.mubr.bf16.mxu0 0
      %3664 = vmatmul.mubr.bf16.gmra.mrb[0].mxu0 %v2179
      %v3665 = vpop.f32.mrb[0].mxu0
      %v3666 = vadd.f32 %v606, %v3665
      %v3667 = vpop.f32.mrb[0].mxu0
      %v3668 = vpop.f32.mrb[0].mxu0
      %v3669 = vadd.f32 %v606, %v3668
      %v3670 = vpop.f32.mrb[0].mxu0
      %3671 = vmatprep.mubr.bf16.mxu0 0
      %3672 = vmatmul.mubr.bf16.gmra.mrb[0].mxu0 %v2182
      %v3673 = vpop.f32.mrb[0].mxu0
      %v3674 = vadd.f32 %v606, %v3673
      %v3675 = vpop.f32.mrb[0].mxu0
      %v3676 = vpop.f32.mrb[0].mxu0
      %v3677 = vadd.f32 %v606, %v3676
      %v3678 = vpop.f32.mrb[0].mxu0
      %3679 = vmatprep.mubr.bf16.mxu0 0
      %3680 = vmatmul.mubr.bf16.gmra.mrb[0].mxu0 %v2185
      %v3681 = vpop.f32.mrb[0].mxu0
      %v3682 = vadd.f32 %v606, %v3681
      %v3683 = vpop.f32.mrb[0].mxu0
      %v3684 = vpop.f32.mrb[0].mxu0
      %v3685 = vadd.f32 %v606, %v3684
      %v3686 = vpop.f32.mrb[0].mxu0
      %3687 = vmatprep.mubr.bf16.mxu0 0
      %3688 = vmatmul.mubr.bf16.gmra.mrb[0].mxu0 %v2188
      %v3689 = vpop.f32.mrb[0].mxu0
      %v3690 = vadd.f32 %v606, %v3689
      %v3691 = vpop.f32.mrb[0].mxu0
      %v3692 = vpop.f32.mrb[0].mxu0
      %v3693 = vadd.f32 %v606, %v3692
      %v3694 = vpop.f32.mrb[0].mxu0
      %3695 = vmatprep.mubr.bf16.mxu0 0
      %3696 = vmatmul.mubr.bf16.gmra.mrb[0].mxu0 %v2191
      %v3697 = vpop.f32.mrb[0].mxu0
      %v3698 = vadd.f32 %v606, %v3697
      %v3699 = vpop.f32.mrb[0].mxu0
      %v3700 = vpop.f32.mrb[0].mxu0
      %v3701 = vadd.f32 %v606, %v3700
      %v3702 = vpop.f32.mrb[0].mxu0
      %3703 = vmatprep.mubr.bf16.mxu0 0
      %3704 = vmatmul.mubr.bf16.gmra.mrb[0].mxu0 %v2194
      %v3705 = vpop.f32.mrb[0].mxu0
      %v3706 = vadd.f32 %v606, %v3705
      %v3707 = vpop.f32.mrb[0].mxu0
      %v3708 = vpop.f32.mrb[0].mxu0
      %v3709 = vadd.f32 %v606, %v3708
      %v3710 = vpop.f32.mrb[0].mxu0
      %3711 = vmatprep.mubr.bf16.mxu0 0
      %3712 = vmatmul.mubr.bf16.gmra.mrb[0].mxu0 %v2197
      %v3713 = vpop.f32.mrb[0].mxu0
      %v3714 = vadd.f32 %v606, %v3713
      %v3715 = vpop.f32.mrb[0].mxu0
      %v3716 = vpop.f32.mrb[0].mxu0
      %v3717 = vadd.f32 %v606, %v3716
      %v3718 = vpop.f32.mrb[0].mxu0
      %3719 = vmatprep.mubr.bf16.mxu0 0
      %3720 = vmatmul.mubr.bf16.gmra.mrb[0].mxu0 %v2200
      %v3721 = vpop.f32.mrb[0].mxu0
      %v3722 = vadd.f32 %v606, %v3721
      %v3723 = vpop.f32.mrb[0].mxu0
      %v3724 = vpop.f32.mrb[0].mxu0
      %v3725 = vadd.f32 %v606, %v3724
      %v3726 = vpop.f32.mrb[0].mxu0
      %3727 = vmatprep.mubr.bf16.mxu0 0
      %3728 = vmatmul.mubr.bf16.gmra.mrb[0].mxu0 %v2203
      %v3729 = vpop.f32.mrb[0].mxu0
      %v3730 = vadd.f32 %v606, %v3729
      %v3731 = vpop.f32.mrb[0].mxu0
      %v3732 = vpop.f32.mrb[0].mxu0
      %v3733 = vadd.f32 %v606, %v3732
      %v3734 = vpop.f32.mrb[0].mxu0
      %3735 = vmatprep.mubr.bf16.mxu0 0
      %3736 = vmatmul.mubr.bf16.gmra.mrb[0].mxu0 %v2206
      %v3737 = vpop.f32.mrb[0].mxu0
      %v3738 = vadd.f32 %v606, %v3737
      %v3739 = vpop.f32.mrb[0].mxu0
      %v3740 = vpop.f32.mrb[0].mxu0
      %v3741 = vadd.f32 %v606, %v3740
      %v3742 = vpop.f32.mrb[0].mxu0
      %3743 = vmatprep.mubr.bf16.mxu0 0
      %3744 = vmatmul.mubr.bf16.gmra.mrb[0].mxu0 %v2209
      %v3745 = vpop.f32.mrb[0].mxu0
      %v3746 = vadd.f32 %v606, %v3745
      %v3747 = vpop.f32.mrb[0].mxu0
      %v3748 = vpop.f32.mrb[0].mxu0
      %v3749 = vadd.f32 %v606, %v3748
      %v3750 = vpop.f32.mrb[0].mxu0
      %3751 = vmatprep.mubr.bf16.mxu0 0
      %3752 = vmatmul.mubr.bf16.gmra.mrb[0].mxu0 %v2212
      %v3753 = vpop.f32.mrb[0].mxu0
      %v3754 = vadd.f32 %v606, %v3753
      %v3755 = vpop.f32.mrb[0].mxu0
      %v3756 = vpop.f32.mrb[0].mxu0
      %v3757 = vadd.f32 %v606, %v3756
      %v3758 = vpop.f32.mrb[0].mxu0
      %3759 = vmatprep.mubr.bf16.mxu0 0
      %3760 = vmatmul.mubr.bf16.gmra.mrb[0].mxu0 %v2215
      %v3761 = vpop.f32.mrb[0].mxu0
      %v3762 = vadd.f32 %v606, %v3761
      %v3763 = vpop.f32.mrb[0].mxu0
      %v3764 = vpop.f32.mrb[0].mxu0
      %v3765 = vadd.f32 %v606, %v3764
      %v3766 = vpop.f32.mrb[0].mxu0
      %3767 = vmatprep.mubr.bf16.mxu0 0
      %3768 = vmatmul.mubr.bf16.gmra.mrb[0].mxu0 %v2218
      %v3769 = vpop.f32.mrb[0].mxu0
      %v3770 = vadd.f32 %v606, %v3769
      %v3771 = vpop.f32.mrb[0].mxu0
      %v3772 = vpop.f32.mrb[0].mxu0
      %v3773 = vadd.f32 %v606, %v3772
      %v3774 = vpop.f32.mrb[0].mxu0
      %3775 = vmatprep.mubr.bf16.mxu0 0
      %3776 = vmatmul.mubr.bf16.gmra.mrb[0].mxu0 %v2221
      %v3777 = vpop.f32.mrb[0].mxu0
      %v3778 = vadd.f32 %v606, %v3777
      %v3779 = vpop.f32.mrb[0].mxu0
      %v3780 = vpop.f32.mrb[0].mxu0
      %v3781 = vadd.f32 %v606, %v3780
      %v3782 = vpop.f32.mrb[0].mxu0
      %3783 = vmatprep.mubr.bf16.mxu0 0
      %3784 = vmatmul.mubr.bf16.gmra.mrb[0].mxu0 %v2224
      %v3785 = vpop.f32.mrb[0].mxu0
      %v3786 = vadd.f32 %v606, %v3785
      %v3787 = vpop.f32.mrb[0].mxu0
      %v3788 = vpop.f32.mrb[0].mxu0
      %v3789 = vadd.f32 %v606, %v3788
      %v3790 = vpop.f32.mrb[0].mxu0
      %3791 = vmatprep.mubr.bf16.mxu0 0
      %3792 = vmatmul.mubr.bf16.gmra.mrb[0].mxu0 %v2227
      %v3793 = vpop.f32.mrb[0].mxu0
      %v3794 = vadd.f32 %v606, %v3793
      %v3795 = vpop.f32.mrb[0].mxu0
      %v3796 = vpop.f32.mrb[0].mxu0
      %v3797 = vadd.f32 %v606, %v3796
      %v3798 = vpop.f32.mrb[0].mxu0
      %3799 = vmatprep.mubr.bf16.mxu0 0
      %3800 = vmatmul.mubr.bf16.gmra.mrb[0].mxu0 %v2230
      %v3801 = vpop.f32.mrb[0].mxu0
      %v3802 = vadd.f32 %v606, %v3801
      %v3803 = vpop.f32.mrb[0].mxu0
      %v3804 = vpop.f32.mrb[0].mxu0
      %v3805 = vadd.f32 %v606, %v3804
      %v3806 = vpop.f32.mrb[0].mxu0
      %3807 = vmatprep.mubr.bf16.mxu0 0
      %3808 = vmatmul.mubr.bf16.gmra.mrb[0].mxu0 %v2233
      %v3809 = vpop.f32.mrb[0].mxu0
      %v3810 = vadd.f32 %v606, %v3809
      %v3811 = vpop.f32.mrb[0].mxu0
      %v3812 = vpop.f32.mrb[0].mxu0
      %v3813 = vadd.f32 %v606, %v3812
      %v3814 = vpop.f32.mrb[0].mxu0
      %3815 = vmatprep.mubr.bf16.mxu0 0
      %3816 = vmatmul.mubr.bf16.gmra.mrb[0].mxu0 %v2236
      %v3817 = vpop.f32.mrb[0].mxu0
      %v3818 = vadd.f32 %v606, %v3817
      %v3819 = vpop.f32.mrb[0].mxu0
      %v3820 = vpop.f32.mrb[0].mxu0
      %v3821 = vadd.f32 %v606, %v3820
      %v3822 = vpop.f32.mrb[0].mxu0
      %3823 = vmatprep.mubr.bf16.mxu0 0
      %3824 = vmatmul.mubr.bf16.gmra.mrb[0].mxu0 %v2239
      %v3825 = vpop.f32.mrb[0].mxu0
      %v3826 = vadd.f32 %v606, %v3825
      %v3827 = vpop.f32.mrb[0].mxu0
      %v3828 = vpop.f32.mrb[0].mxu0
      %v3829 = vadd.f32 %v606, %v3828
      %v3830 = vpop.f32.mrb[0].mxu0
      %3831 = vmatprep.mubr.bf16.mxu0 0
      %3832 = vmatmul.mubr.bf16.gmra.mrb[0].mxu0 %v2242
      %v3833 = vpop.f32.mrb[0].mxu0
      %v3834 = vadd.f32 %v606, %v3833
      %v3835 = vpop.f32.mrb[0].mxu0
      %v3836 = vpop.f32.mrb[0].mxu0
      %v3837 = vadd.f32 %v606, %v3836
      %v3838 = vpop.f32.mrb[0].mxu0
      %3839 = vmatprep.mubr.bf16.mxu0 0
      %3840 = vmatmul.mubr.bf16.gmra.mrb[0].mxu0 %v2245
      %v3841 = vpop.f32.mrb[0].mxu0
      %v3842 = vadd.f32 %v606, %v3841
      %v3843 = vpop.f32.mrb[0].mxu0
      %v3844 = vpop.f32.mrb[0].mxu0
      %v3845 = vadd.f32 %v606, %v3844
      %v3846 = vpop.f32.mrb[0].mxu0
      %3847 = vmatprep.mubr.bf16.mxu0 0
      %3848 = vmatmul.mubr.bf16.gmra.mrb[0].mxu0 %v2248
      %v3849 = vpop.f32.mrb[0].mxu0
      %v3850 = vadd.f32 %v606, %v3849
      %v3851 = vpop.f32.mrb[0].mxu0
      %v3852 = vpop.f32.mrb[0].mxu0
      %v3853 = vadd.f32 %v606, %v3852
      %v3854 = vpop.f32.mrb[0].mxu0
      %3855 = vmatprep.mubr.bf16.mxu0 0
      %3856 = vmatmul.mubr.bf16.gmra.mrb[0].mxu0 %v2251
      %v3857 = vpop.f32.mrb[0].mxu0
      %v3858 = vadd.f32 %v606, %v3857
      %v3859 = vpop.f32.mrb[0].mxu0
      %v3860 = vpop.f32.mrb[0].mxu0
      %v3861 = vadd.f32 %v606, %v3860
      %v3862 = vpop.f32.mrb[0].mxu0
      %3863 = vmatprep.mubr.bf16.mxu0 0
      %3864 = vmatmul.mubr.bf16.gmra.mrb[0].mxu0 %v2254
      %v3865 = vpop.f32.mrb[0].mxu0
      %v3866 = vadd.f32 %v606, %v3865
      %v3867 = vpop.f32.mrb[0].mxu0
      %v3868 = vpop.f32.mrb[0].mxu0
      %v3869 = vadd.f32 %v606, %v3868
      %v3870 = vpop.f32.mrb[0].mxu0
      %3871 = vmatprep.mubr.bf16.mxu0 0
      %3872 = vmatmul.mubr.bf16.gmra.mrb[0].mxu0 %v2257
      %v3873 = vpop.f32.mrb[0].mxu0
      %v3874 = vadd.f32 %v606, %v3873
      %v3875 = vpop.f32.mrb[0].mxu0
      %v3876 = vpop.f32.mrb[0].mxu0
      %v3877 = vadd.f32 %v606, %v3876
      %v3878 = vpop.f32.mrb[0].mxu0
      %3879 = vmatprep.mubr.bf16.mxu0 0
      %3880 = vmatmul.mubr.bf16.gmra.mrb[0].mxu0 %v2260
      %v3881 = vpop.f32.mrb[0].mxu0
      %v3882 = vadd.f32 %v606, %v3881
      %v3883 = vpop.f32.mrb[0].mxu0
      %v3884 = vpop.f32.mrb[0].mxu0
      %v3885 = vadd.f32 %v606, %v3884
      %v3886 = vpop.f32.mrb[0].mxu0
      %3887 = vmatprep.mubr.bf16.mxu0 0
      %3888 = vmatmul.mubr.bf16.gmra.mrb[0].mxu0 %v2263
      %v3889 = vpop.f32.mrb[0].mxu0
      %v3890 = vadd.f32 %v606, %v3889
      %v3891 = vpop.f32.mrb[0].mxu0
      %v3892 = vpop.f32.mrb[0].mxu0
      %v3893 = vadd.f32 %v606, %v3892
      %v3894 = vpop.f32.mrb[0].mxu0
      %3895 = vmatprep.mubr.bf16.mxu0 0
      %3896 = vmatmul.mubr.bf16.gmra.mrb[0].mxu0 %v2266
      %v3897 = vpop.f32.mrb[0].mxu0
      %v3898 = vadd.f32 %v606, %v3897
      %v3899 = vpop.f32.mrb[0].mxu0
      %v3900 = vpop.f32.mrb[0].mxu0
      %v3901 = vadd.f32 %v606, %v3900
      %v3902 = vpop.f32.mrb[0].mxu0
      %3903 = vmatprep.mubr.bf16.mxu0 0
      %3904 = vmatmul.mubr.bf16.gmra.mrb[0].mxu0 %v2269
      %v3905 = vpop.f32.mrb[0].mxu0
      %v3906 = vadd.f32 %v606, %v3905
      %v3907 = vpop.f32.mrb[0].mxu0
      %v3908 = vpop.f32.mrb[0].mxu0
      %v3909 = vadd.f32 %v606, %v3908
      %v3910 = vpop.f32.mrb[0].mxu0
      %3911 = vmatprep.mubr.bf16.mxu0 0
      %3912 = vmatmul.mubr.bf16.gmra.mrb[0].mxu0 %v2272
      %v3913 = vpop.f32.mrb[0].mxu0
      %v3914 = vadd.f32 %v606, %v3913
      %v3915 = vpop.f32.mrb[0].mxu0
      %v3916 = vpop.f32.mrb[0].mxu0
      %v3917 = vadd.f32 %v606, %v3916
      %v3918 = vpop.f32.mrb[0].mxu0
      %3919 = vmatprep.mubr.bf16.mxu0 0
      %3920 = vmatmul.mubr.bf16.gmra.mrb[0].mxu0 %v2275
      %v3921 = vpop.f32.mrb[0].mxu0
      %v3922 = vadd.f32 %v606, %v3921
      %v3923 = vpop.f32.mrb[0].mxu0
      %v3924 = vpop.f32.mrb[0].mxu0
      %v3925 = vadd.f32 %v606, %v3924
      %v3926 = vpop.f32.mrb[0].mxu0
      %3927 = vmatprep.mubr.bf16.mxu0 0
      %3928 = vmatmul.mubr.bf16.gmra.mrb[0].mxu0 %v2278
      %v3929 = vpop.f32.mrb[0].mxu0
      %v3930 = vadd.f32 %v606, %v3929
      %v3931 = vpop.f32.mrb[0].mxu0
      %v3932 = vpop.f32.mrb[0].mxu0
      %v3933 = vadd.f32 %v606, %v3932
      %v3934 = vpop.f32.mrb[0].mxu0
      %3935 = vmatprep.mubr.bf16.mxu0 0
      %3936 = vmatmul.mubr.bf16.gmra.mrb[0].mxu0 %v2281
      %v3937 = vpop.f32.mrb[0].mxu0
      %v3938 = vadd.f32 %v606, %v3937
      %v3939 = vpop.f32.mrb[0].mxu0
      %v3940 = vpop.f32.mrb[0].mxu0
      %v3941 = vadd.f32 %v606, %v3940
      %v3942 = vpop.f32.mrb[0].mxu0
      %3943 = vmatprep.mubr.bf16.mxu0 0
      %3944 = vmatmul.mubr.bf16.gmra.mrb[0].mxu0 %v2284
      %v3945 = vpop.f32.mrb[0].mxu0
      %v3946 = vadd.f32 %v606, %v3945
      %v3947 = vpop.f32.mrb[0].mxu0
      %v3948 = vpop.f32.mrb[0].mxu0
      %v3949 = vadd.f32 %v606, %v3948
      %v3950 = vpop.f32.mrb[0].mxu0
      %3951 = vmatprep.mubr.bf16.mxu0 0
      %3952 = vmatmul.mubr.bf16.gmra.mrb[0].mxu0 %v2287
      %v3953 = vpop.f32.mrb[0].mxu0
      %v3954 = vadd.f32 %v606, %v3953
      %v3955 = vpop.f32.mrb[0].mxu0
      %v3956 = vpop.f32.mrb[0].mxu0
      %v3957 = vadd.f32 %v606, %v3956
      %v3958 = vpop.f32.mrb[0].mxu0
      %3959 = vmatprep.mubr.bf16.mxu0 0
      %3960 = vmatmul.mubr.bf16.gmra.mrb[0].mxu0 %v2290
      %v3961 = vpop.f32.mrb[0].mxu0
      %v3962 = vadd.f32 %v606, %v3961
      %v3963 = vpop.f32.mrb[0].mxu0
      %v3964 = vpop.f32.mrb[0].mxu0
      %v3965 = vadd.f32 %v606, %v3964
      %v3966 = vpop.f32.mrb[0].mxu0
      %3967 = vmatprep.mubr.bf16.mxu0 0
      %3968 = vmatmul.mubr.bf16.gmra.mrb[0].mxu0 %v2293
      %v3969 = vpop.f32.mrb[0].mxu0
      %v3970 = vadd.f32 %v606, %v3969
      %v3971 = vpop.f32.mrb[0].mxu0
      %v3972 = vpop.f32.mrb[0].mxu0
      %v3973 = vadd.f32 %v606, %v3972
      %v3974 = vpop.f32.mrb[0].mxu0
      %3975 = vmatprep.mubr.bf16.mxu0 0
      %3976 = vmatmul.mubr.bf16.gmra.mrb[0].mxu0 %v2296
      %v3977 = vpop.f32.mrb[0].mxu0
      %v3978 = vadd.f32 %v606, %v3977
      %v3979 = vpop.f32.mrb[0].mxu0
      %v3980 = vpop.f32.mrb[0].mxu0
      %v3981 = vadd.f32 %v606, %v3980
      %v3982 = vpop.f32.mrb[0].mxu0
      %3983 = vmatprep.mubr.bf16.mxu0 0
      %3984 = vmatmul.mubr.bf16.gmra.mrb[0].mxu0 %v2299
      %v3985 = vpop.f32.mrb[0].mxu0
      %v3986 = vadd.f32 %v606, %v3985
      %v3987 = vpop.f32.mrb[0].mxu0
      %v3988 = vpop.f32.mrb[0].mxu0
      %v3989 = vadd.f32 %v606, %v3988
      %v3990 = vpop.f32.mrb[0].mxu0
      %3991 = vmatprep.mubr.bf16.mxu0 0
      %3992 = vmatmul.mubr.bf16.gmra.mrb[0].mxu0 %v2302
      %v3993 = vpop.f32.mrb[0].mxu0
      %v3994 = vadd.f32 %v606, %v3993
      %v3995 = vpop.f32.mrb[0].mxu0
      %v3996 = vpop.f32.mrb[0].mxu0
      %v3997 = vadd.f32 %v606, %v3996
      %v3998 = vpop.f32.mrb[0].mxu0
      %3999 = vmatprep.mubr.bf16.mxu0 0
      %4000 = vmatmul.mubr.bf16.gmra.mrb[0].mxu0 %v2305
      %v4001 = vpop.f32.mrb[0].mxu0
      %v4002 = vadd.f32 %v606, %v4001
      %v4003 = vpop.f32.mrb[0].mxu0
      %v4004 = vpop.f32.mrb[0].mxu0
      %v4005 = vadd.f32 %v606, %v4004
      %v4006 = vpop.f32.mrb[0].mxu0
      %4007 = vmatprep.mubr.bf16.mxu0 0
      %4008 = vmatmul.mubr.bf16.gmra.mrb[0].mxu0 %v2308
      %v4009 = vpop.f32.mrb[0].mxu0
      %v4010 = vadd.f32 %v606, %v4009
      %v4011 = vpop.f32.mrb[0].mxu0
      %v4012 = vpop.f32.mrb[0].mxu0
      %v4013 = vadd.f32 %v606, %v4012
      %v4014 = vpop.f32.mrb[0].mxu0
      %4015 = vmatprep.mubr.bf16.mxu0 0
      %4016 = vmatmul.mubr.bf16.gmra.mrb[0].mxu0 %v2311
      %v4017 = vpop.f32.mrb[0].mxu0
      %v4018 = vadd.f32 %v606, %v4017
      %v4019 = vpop.f32.mrb[0].mxu0
      %v4020 = vpop.f32.mrb[0].mxu0
      %v4021 = vadd.f32 %v606, %v4020
      %v4022 = vpop.f32.mrb[0].mxu0
      %4023 = vmatprep.mubr.bf16.mxu0 0
      %4024 = vmatmul.mubr.bf16.gmra.mrb[0].mxu0 %v2314
      %v4025 = vpop.f32.mrb[0].mxu0
      %v4026 = vadd.f32 %v606, %v4025
      %v4027 = vpop.f32.mrb[0].mxu0
      %v4028 = vpop.f32.mrb[0].mxu0
      %v4029 = vadd.f32 %v606, %v4028
      %v4030 = vpop.f32.mrb[0].mxu0
      %4031 = vmatprep.mubr.bf16.mxu0 0
      %4032 = vmatmul.mubr.bf16.gmra.mrb[0].mxu0 %v2317
      %v4033 = vpop.f32.mrb[0].mxu0
      %v4034 = vadd.f32 %v606, %v4033
      %v4035 = vpop.f32.mrb[0].mxu0
      %v4036 = vpop.f32.mrb[0].mxu0
      %v4037 = vpop.f32.mrb[0].mxu0
      %4038 = vdwg.mxu0
      %v4039 = vmul.f32 %v2354, 0.2
      %v4040 = vmul.f32 %v2357, 0.2
      %v4041 = vmul.f32 %v2362, 0.2
      %v4042 = vmul.f32 %v2365, 0.2
      %v4043 = vmul.f32 %v2370, 0.2
      %v4044 = vmul.f32 %v2373, 0.2
      %v4045 = vmul.f32 %v2378, 0.2
      %v4046 = vmul.f32 %v2381, 0.2
      %v4047 = vmul.f32 %v2386, 0.2
      %v4048 = vmul.f32 %v2389, 0.2
      %v4049 = vmul.f32 %v2394, 0.2
      %v4050 = vmul.f32 %v2397, 0.2
      %v4051 = vmul.f32 %v2402, 0.2
      %v4052 = vmul.f32 %v2405, 0.2
      %v4053 = vmul.f32 %v2410, 0.2
      %v4054 = vmul.f32 %v2413, 0.2
      %v4055 = vmul.f32 %v2418, 0.2
      %v4056 = vmul.f32 %v2421, 0.2
      %v4057 = vmul.f32 %v2426, 0.2
      %v4058 = vmul.f32 %v2429, 0.2
      %v4059 = vmul.f32 %v2434, 0.2
      %v4060 = vmul.f32 %v2437, 0.2
      %v4061 = vmul.f32 %v2442, 0.2
      %v4062 = vmul.f32 %v2445, 0.2
      %v4063 = vmul.f32 %v2450, 0.2
      %v4064 = vmul.f32 %v2453, 0.2
      %v4065 = vmul.f32 %v2458, 0.2
      %v4066 = vmul.f32 %v2461, 0.2
      %v4067 = vmul.f32 %v2466, 0.2
      %v4068 = vmul.f32 %v2469, 0.2
      %v4069 = vmul.f32 %v2474, 0.2
      %v4070 = vmul.f32 %v2477, 0.2
      %v4071 = vmul.f32 %v2482, 0.2
      %v4072 = vmul.f32 %v2485, 0.2
      %v4073 = vmul.f32 %v2490, 0.2
      %v4074 = vmul.f32 %v2493, 0.2
      %v4075 = vmul.f32 %v2498, 0.2
      %v4076 = vmul.f32 %v2501, 0.2
      %v4077 = vmul.f32 %v2506, 0.2
      %v4078 = vmul.f32 %v2509, 0.2
      %v4079 = vmul.f32 %v2514, 0.2
      %v4080 = vmul.f32 %v2517, 0.2
      %v4081 = vmul.f32 %v2522, 0.2
      %v4082 = vmul.f32 %v2525, 0.2
      %v4083 = vmul.f32 %v2530, 0.2
      %v4084 = vmul.f32 %v2533, 0.2
      %v4085 = vmul.f32 %v2538, 0.2
      %v4086 = vmul.f32 %v2541, 0.2
      %v4087 = vmul.f32 %v2546, 0.2
      %v4088 = vmul.f32 %v2549, 0.2
      %v4089 = vmul.f32 %v2554, 0.2
      %v4090 = vmul.f32 %v2557, 0.2
      %v4091 = vmul.f32 %v2562, 0.2
      %v4092 = vmul.f32 %v2565, 0.2
      %v4093 = vmul.f32 %v2570, 0.2
      %v4094 = vmul.f32 %v2573, 0.2
      %v4095 = vmul.f32 %v2578, 0.2
      %v4096 = vmul.f32 %v2581, 0.2
      %v4097 = vmul.f32 %v2586, 0.2
      %v4098 = vmul.f32 %v2589, 0.2
      %v4099 = vmul.f32 %v2594, 0.2
      %v4100 = vmul.f32 %v2597, 0.2
      %v4101 = vmul.f32 %v2602, 0.2
      %v4102 = vmul.f32 %v2605, 0.2
      %v4103 = vmul.f32 %v2610, 0.2
      %v4104 = vmul.f32 %v2613, 0.2
      %v4105 = vmul.f32 %v2618, 0.2
      %v4106 = vmul.f32 %v2621, 0.2
      %v4107 = vmul.f32 %v2626, 0.2
      %v4108 = vmul.f32 %v2629, 0.2
      %v4109 = vmul.f32 %v2634, 0.2
      %v4110 = vmul.f32 %v2637, 0.2
      %v4111 = vmul.f32 %v2642, 0.2
      %v4112 = vmul.f32 %v2645, 0.2
      %v4113 = vmul.f32 %v2650, 0.2
      %v4114 = vmul.f32 %v2653, 0.2
      %v4115 = vmul.f32 %v2658, 0.2
      %v4116 = vmul.f32 %v2661, 0.2
      %v4117 = vmul.f32 %v2666, 0.2
      %v4118 = vmul.f32 %v2669, 0.2
      %v4119 = vmul.f32 %v2674, 0.2
      %v4120 = vmul.f32 %v2677, 0.2
      %v4121 = vmul.f32 %v2682, 0.2
      %v4122 = vmul.f32 %v2685, 0.2
      %v4123 = vmul.f32 %v2690, 0.2
      %v4124 = vmul.f32 %v2693, 0.2
      %v4125 = vmul.f32 %v2698, 0.2
      %v4126 = vmul.f32 %v2701, 0.2
      %v4127 = vmul.f32 %v2706, 0.2
      %v4128 = vmul.f32 %v2709, 0.2
      %v4129 = vmul.f32 %v2714, 0.2
      %v4130 = vmul.f32 %v2717, 0.2
      %v4131 = vmul.f32 %v2722, 0.2
      %v4132 = vmul.f32 %v2725, 0.2
      %v4133 = vmul.f32 %v2730, 0.2
      %v4134 = vmul.f32 %v2733, 0.2
      %v4135 = vmul.f32 %v2738, 0.2
      %v4136 = vmul.f32 %v2741, 0.2
      %v4137 = vmul.f32 %v2746, 0.2
      %v4138 = vmul.f32 %v2749, 0.2
      %v4139 = vmul.f32 %v2754, 0.2
      %v4140 = vmul.f32 %v2757, 0.2
      %v4141 = vmul.f32 %v2762, 0.2
      %v4142 = vmul.f32 %v2765, 0.2
      %v4143 = vmul.f32 %v2770, 0.2
      %v4144 = vmul.f32 %v2773, 0.2
      %v4145 = vmul.f32 %v2778, 0.2
      %v4146 = vmul.f32 %v2781, 0.2
      %v4147 = vmul.f32 %v2786, 0.2
      %v4148 = vmul.f32 %v2789, 0.2
      %v4149 = vmul.f32 %v2794, 0.2
      %v4150 = vmul.f32 %v2797, 0.2
      %v4151 = vmul.f32 %v2802, 0.2
      %v4152 = vmul.f32 %v2805, 0.2
      %v4153 = vmul.f32 %v2810, 0.2
      %v4154 = vmul.f32 %v2813, 0.2
      %v4155 = vmul.f32 %v2818, 0.2
      %v4156 = vmul.f32 %v2821, 0.2
      %v4157 = vmul.f32 %v2826, 0.2
      %v4158 = vmul.f32 %v2829, 0.2
      %v4159 = vmul.f32 %v2834, 0.2
      %v4160 = vmul.f32 %v2837, 0.2
      %v4161 = vmul.f32 %v2842, 0.2
      %v4162 = vmul.f32 %v2845, 0.2
      %v4163 = vmul.f32 %v2850, 0.2
      %v4164 = vmul.f32 %v2853, 0.2
      %v4165 = vmul.f32 %v2858, 0.2
      %v4166 = vmul.f32 %v2861, 0.2
      %v4167 = vmul.f32 %v2866, 0.2
      %v4168 = vmul.f32 %v2869, 0.2
      %v4169 = vmul.f32 %v2874, 0.2
      %v4170 = vmul.f32 %v2877, 0.2
      %v4171 = vmul.f32 %v2882, 0.2
      %v4172 = vmul.f32 %v2885, 0.2
      %v4173 = vmul.f32 %v2890, 0.2
      %v4174 = vmul.f32 %v2893, 0.2
      %v4175 = vmul.f32 %v2898, 0.2
      %v4176 = vmul.f32 %v2901, 0.2
      %v4177 = vmul.f32 %v2906, 0.2
      %v4178 = vmul.f32 %v2909, 0.2
      %v4179 = vmul.f32 %v2914, 0.2
      %v4180 = vmul.f32 %v2917, 0.2
      %v4181 = vmul.f32 %v2922, 0.2
      %v4182 = vmul.f32 %v2925, 0.2
      %v4183 = vmul.f32 %v2930, 0.2
      %v4184 = vmul.f32 %v2933, 0.2
      %v4185 = vmul.f32 %v2938, 0.2
      %v4186 = vmul.f32 %v2941, 0.2
      %v4187 = vmul.f32 %v2946, 0.2
      %v4188 = vmul.f32 %v2949, 0.2
      %v4189 = vmul.f32 %v2954, 0.2
      %v4190 = vmul.f32 %v2957, 0.2
      %v4191 = vmul.f32 %v2962, 0.2
      %v4192 = vmul.f32 %v2965, 0.2
      %v4193 = vmul.f32 %v2970, 0.2
      %v4194 = vmul.f32 %v2973, 0.2
      %v4195 = vmul.f32 %v2978, 0.2
      %v4196 = vmul.f32 %v2981, 0.2
      %v4197 = vmul.f32 %v2986, 0.2
      %v4198 = vmul.f32 %v2989, 0.2
      %v4199 = vmul.f32 %v2994, 0.2
      %v4200 = vmul.f32 %v2997, 0.2
      %v4201 = vmul.f32 %v3002, 0.2
      %v4202 = vmul.f32 %v3005, 0.2
      %v4203 = vmul.f32 %v3010, 0.2
      %v4204 = vmul.f32 %v3013, 0.2
      %v4205 = vmul.f32 %v3018, 0.2
      %v4206 = vmul.f32 %v3021, 0.2
      %v4207 = vmul.f32 %v3026, 0.2
      %v4208 = vmul.f32 %v3029, 0.2
      %v4209 = vmul.f32 %v3034, 0.2
      %v4210 = vmul.f32 %v3037, 0.2
      %v4211 = vmul.f32 %v3042, 0.2
      %v4212 = vmul.f32 %v3045, 0.2
      %v4213 = vmul.f32 %v3050, 0.2
      %v4214 = vmul.f32 %v3053, 0.2
      %v4215 = vmul.f32 %v3058, 0.2
      %v4216 = vmul.f32 %v3061, 0.2
      %v4217 = vmul.f32 %v3066, 0.2
      %v4218 = vmul.f32 %v3069, 0.2
      %v4219 = vmul.f32 %v3074, 0.2
      %v4220 = vmul.f32 %v3077, 0.2
      %v4221 = vmul.f32 %v3082, 0.2
      %v4222 = vmul.f32 %v3085, 0.2
      %v4223 = vmul.f32 %v3090, 0.2
      %v4224 = vmul.f32 %v3093, 0.2
      %v4225 = vmul.f32 %v3098, 0.2
      %v4226 = vmul.f32 %v3101, 0.2
      %v4227 = vmul.f32 %v3106, 0.2
      %v4228 = vmul.f32 %v3109, 0.2
      %v4229 = vmul.f32 %v3114, 0.2
      %v4230 = vmul.f32 %v3117, 0.2
      %v4231 = vmul.f32 %v3122, 0.2
      %v4232 = vmul.f32 %v3125, 0.2
      %v4233 = vmul.f32 %v3130, 0.2
      %v4234 = vmul.f32 %v3133, 0.2
      %v4235 = vmul.f32 %v3138, 0.2
      %v4236 = vmul.f32 %v3141, 0.2
      %v4237 = vmul.f32 %v3146, 0.2
      %v4238 = vmul.f32 %v3149, 0.2
      %v4239 = vmul.f32 %v3154, 0.2
      %v4240 = vmul.f32 %v3157, 0.2
      %v4241 = vmul.f32 %v3162, 0.2
      %v4242 = vmul.f32 %v3165, 0.2
      %v4243 = vmul.f32 %v3170, 0.2
      %v4244 = vmul.f32 %v3173, 0.2
      %v4245 = vmul.f32 %v3178, 0.2
      %v4246 = vmul.f32 %v3181, 0.2
      %v4247 = vmul.f32 %v3186, 0.2
      %v4248 = vmul.f32 %v3189, 0.2
      %v4249 = vmul.f32 %v3194, 0.2
      %v4250 = vmul.f32 %v3197, 0.2
      %v4251 = vmul.f32 %v3202, 0.2
      %v4252 = vmul.f32 %v3205, 0.2
      %v4253 = vmul.f32 %v3210, 0.2
      %v4254 = vmul.f32 %v3213, 0.2
      %v4255 = vmul.f32 %v3218, 0.2
      %v4256 = vmul.f32 %v3221, 0.2
      %v4257 = vmul.f32 %v3226, 0.2
      %v4258 = vmul.f32 %v3229, 0.2
      %v4259 = vmul.f32 %v3234, 0.2
      %v4260 = vmul.f32 %v3237, 0.2
      %v4261 = vmul.f32 %v3242, 0.2
      %v4262 = vmul.f32 %v3245, 0.2
      %v4263 = vmul.f32 %v3250, 0.2
      %v4264 = vmul.f32 %v3253, 0.2
      %v4265 = vmul.f32 %v3258, 0.2
      %v4266 = vmul.f32 %v3261, 0.2
      %v4267 = vmul.f32 %v3266, 0.2
      %v4268 = vmul.f32 %v3269, 0.2
      %v4269 = vmul.f32 %v3274, 0.2
      %v4270 = vmul.f32 %v3277, 0.2
      %v4271 = vmul.f32 %v3282, 0.2
      %v4272 = vmul.f32 %v3285, 0.2
      %v4273 = vmul.f32 %v3290, 0.2
      %v4274 = vmul.f32 %v3293, 0.2
      %v4275 = vmul.f32 %v3298, 0.2
      %v4276 = vmul.f32 %v3301, 0.2
      %v4277 = vmul.f32 %v3306, 0.2
      %v4278 = vmul.f32 %v3309, 0.2
      %v4279 = vmul.f32 %v3314, 0.2
      %v4280 = vmul.f32 %v3317, 0.2
      %v4281 = vmul.f32 %v3322, 0.2
      %v4282 = vmul.f32 %v3325, 0.2
      %v4283 = vmul.f32 %v3330, 0.2
      %v4284 = vmul.f32 %v3333, 0.2
      %v4285 = vmul.f32 %v3338, 0.2
      %v4286 = vmul.f32 %v3341, 0.2
      %v4287 = vmul.f32 %v3346, 0.2
      %v4288 = vmul.f32 %v3349, 0.2
      %v4289 = vmul.f32 %v3354, 0.2
      %v4290 = vmul.f32 %v3357, 0.2
      %v4291 = vmul.f32 %v3362, 0.2
      %v4292 = vmul.f32 %v3365, 0.2
      %v4293 = vmul.f32 %v3370, 0.2
      %v4294 = vmul.f32 %v3373, 0.2
      %v4295 = vmul.f32 %v3378, 0.2
      %v4296 = vmul.f32 %v3381, 0.2
      %v4297 = vmul.f32 %v3386, 0.2
      %v4298 = vmul.f32 %v3389, 0.2
      %v4299 = vmul.f32 %v3394, 0.2
      %v4300 = vmul.f32 %v3397, 0.2
      %v4301 = vmul.f32 %v3402, 0.2
      %v4302 = vmul.f32 %v3405, 0.2
      %v4303 = vmul.f32 %v3410, 0.2
      %v4304 = vmul.f32 %v3413, 0.2
      %v4305 = vmul.f32 %v3418, 0.2
      %v4306 = vmul.f32 %v3421, 0.2
      %v4307 = vmul.f32 %v3426, 0.2
      %v4308 = vmul.f32 %v3429, 0.2
      %v4309 = vmul.f32 %v3434, 0.2
      %v4310 = vmul.f32 %v3437, 0.2
      %v4311 = vmul.f32 %v3442, 0.2
      %v4312 = vmul.f32 %v3445, 0.2
      %v4313 = vmul.f32 %v3450, 0.2
      %v4314 = vmul.f32 %v3453, 0.2
      %v4315 = vmul.f32 %v3458, 0.2
      %v4316 = vmul.f32 %v3461, 0.2
      %v4317 = vmul.f32 %v3466, 0.2
      %v4318 = vmul.f32 %v3469, 0.2
      %v4319 = vmul.f32 %v3474, 0.2
      %v4320 = vmul.f32 %v3477, 0.2
      %v4321 = vmul.f32 %v3482, 0.2
      %v4322 = vmul.f32 %v3485, 0.2
      %v4323 = vmul.f32 %v3490, 0.2
      %v4324 = vmul.f32 %v3493, 0.2
      %v4325 = vmul.f32 %v3498, 0.2
      %v4326 = vmul.f32 %v3501, 0.2
      %v4327 = vmul.f32 %v3506, 0.2
      %v4328 = vmul.f32 %v3509, 0.2
      %v4329 = vmul.f32 %v3514, 0.2
      %v4330 = vmul.f32 %v3517, 0.2
      %v4331 = vmul.f32 %v3522, 0.2
      %v4332 = vmul.f32 %v3525, 0.2
      %v4333 = vmul.f32 %v3530, 0.2
      %v4334 = vmul.f32 %v3533, 0.2
      %v4335 = vmul.f32 %v3538, 0.2
      %v4336 = vmul.f32 %v3541, 0.2
      %v4337 = vmul.f32 %v3546, 0.2
      %v4338 = vmul.f32 %v3549, 0.2
      %v4339 = vmul.f32 %v3554, 0.2
      %v4340 = vmul.f32 %v3557, 0.2
      %v4341 = vmul.f32 %v3562, 0.2
      %v4342 = vmul.f32 %v3565, 0.2
      %v4343 = vmul.f32 %v3570, 0.2
      %v4344 = vmul.f32 %v3573, 0.2
      %v4345 = vmul.f32 %v3578, 0.2
      %v4346 = vmul.f32 %v3581, 0.2
      %v4347 = vmul.f32 %v3586, 0.2
      %v4348 = vmul.f32 %v3589, 0.2
      %v4349 = vmul.f32 %v3594, 0.2
      %v4350 = vmul.f32 %v3597, 0.2
      %v4351 = vmul.f32 %v3602, 0.2
      %v4352 = vmul.f32 %v3605, 0.2
      %v4353 = vmul.f32 %v3610, 0.2
      %v4354 = vmul.f32 %v3613, 0.2
      %v4355 = vmul.f32 %v3618, 0.2
      %v4356 = vmul.f32 %v3621, 0.2
      %v4357 = vmul.f32 %v3626, 0.2
      %v4358 = vmul.f32 %v3629, 0.2
      %v4359 = vmul.f32 %v3634, 0.2
      %v4360 = vmul.f32 %v3637, 0.2
      %v4361 = vmul.f32 %v3642, 0.2
      %v4362 = vmul.f32 %v3645, 0.2
      %v4363 = vmul.f32 %v3650, 0.2
      %v4364 = vmul.f32 %v3653, 0.2
      %v4365 = vmul.f32 %v3658, 0.2
      %v4366 = vmul.f32 %v3661, 0.2
      %v4367 = vmul.f32 %v3666, 0.2
      %v4368 = vmul.f32 %v3669, 0.2
      %v4369 = vmul.f32 %v3674, 0.2
      %v4370 = vmul.f32 %v3677, 0.2
      %v4371 = vmul.f32 %v3682, 0.2
      %v4372 = vmul.f32 %v3685, 0.2
      %v4373 = vmul.f32 %v3690, 0.2
      %v4374 = vmul.f32 %v3693, 0.2
      %v4375 = vmul.f32 %v3698, 0.2
      %v4376 = vmul.f32 %v3701, 0.2
      %v4377 = vmul.f32 %v3706, 0.2
      %v4378 = vmul.f32 %v3709, 0.2
      %v4379 = vmul.f32 %v3714, 0.2
      %v4380 = vmul.f32 %v3717, 0.2
      %v4381 = vmul.f32 %v3722, 0.2
      %v4382 = vmul.f32 %v3725, 0.2
      %v4383 = vmul.f32 %v3730, 0.2
      %v4384 = vmul.f32 %v3733, 0.2
      %v4385 = vmul.f32 %v3738, 0.2
      %v4386 = vmul.f32 %v3741, 0.2
      %v4387 = vmul.f32 %v3746, 0.2
      %v4388 = vmul.f32 %v3749, 0.2
      %v4389 = vmul.f32 %v3754, 0.2
      %v4390 = vmul.f32 %v3757, 0.2
      %v4391 = vmul.f32 %v3762, 0.2
      %v4392 = vmul.f32 %v3765, 0.2
      %v4393 = vmul.f32 %v3770, 0.2
      %v4394 = vmul.f32 %v3773, 0.2
      %v4395 = vmul.f32 %v3778, 0.2
      %v4396 = vmul.f32 %v3781, 0.2
      %v4397 = vmul.f32 %v3786, 0.2
      %v4398 = vmul.f32 %v3789, 0.2
      %v4399 = vmul.f32 %v3794, 0.2
      %v4400 = vmul.f32 %v3797, 0.2
      %v4401 = vmul.f32 %v3802, 0.2
      %v4402 = vmul.f32 %v3805, 0.2
      %v4403 = vmul.f32 %v3810, 0.2
      %v4404 = vmul.f32 %v3813, 0.2
      %v4405 = vmul.f32 %v3818, 0.2
      %v4406 = vmul.f32 %v3821, 0.2
      %v4407 = vmul.f32 %v3826, 0.2
      %v4408 = vmul.f32 %v3829, 0.2
      %v4409 = vmul.f32 %v3834, 0.2
      %v4410 = vmul.f32 %v3837, 0.2
      %v4411 = vmul.f32 %v3842, 0.2
      %v4412 = vmul.f32 %v3845, 0.2
      %v4413 = vmul.f32 %v3850, 0.2
      %v4414 = vmul.f32 %v3853, 0.2
      %v4415 = vmul.f32 %v3858, 0.2
      %v4416 = vmul.f32 %v3861, 0.2
      %v4417 = vmul.f32 %v3866, 0.2
      %v4418 = vmul.f32 %v3869, 0.2
      %v4419 = vmul.f32 %v3874, 0.2
      %v4420 = vmul.f32 %v3877, 0.2
      %v4421 = vmul.f32 %v3882, 0.2
      %v4422 = vmul.f32 %v3885, 0.2
      %v4423 = vmul.f32 %v3890, 0.2
      %v4424 = vmul.f32 %v3893, 0.2
      %v4425 = vmul.f32 %v3898, 0.2
      %v4426 = vmul.f32 %v3901, 0.2
      %v4427 = vmul.f32 %v3906, 0.2
      %v4428 = vmul.f32 %v3909, 0.2
      %v4429 = vmul.f32 %v3914, 0.2
      %v4430 = vmul.f32 %v3917, 0.2
      %v4431 = vmul.f32 %v3922, 0.2
      %v4432 = vmul.f32 %v3925, 0.2
      %v4433 = vmul.f32 %v3930, 0.2
      %v4434 = vmul.f32 %v3933, 0.2
      %v4435 = vmul.f32 %v3938, 0.2
      %v4436 = vmul.f32 %v3941, 0.2
      %v4437 = vmul.f32 %v3946, 0.2
      %v4438 = vmul.f32 %v3949, 0.2
      %v4439 = vmul.f32 %v3954, 0.2
      %v4440 = vmul.f32 %v3957, 0.2
      %v4441 = vmul.f32 %v3962, 0.2
      %v4442 = vmul.f32 %v3965, 0.2
      %v4443 = vmul.f32 %v3970, 0.2
      %v4444 = vmul.f32 %v3973, 0.2
      %v4445 = vmul.f32 %v3978, 0.2
      %v4446 = vmul.f32 %v3981, 0.2
      %v4447 = vmul.f32 %v3986, 0.2
      %v4448 = vmul.f32 %v3989, 0.2
      %v4449 = vmul.f32 %v3994, 0.2
      %v4450 = vmul.f32 %v3997, 0.2
      %v4451 = vmul.f32 %v4002, 0.2
      %v4452 = vmul.f32 %v4005, 0.2
      %v4453 = vmul.f32 %v4010, 0.2
      %v4454 = vmul.f32 %v4013, 0.2
      %v4455 = vmul.f32 %v4018, 0.2
      %v4456 = vmul.f32 %v4021, 0.2
      %v4457 = vmul.f32 %v4026, 0.2
      %v4458 = vmul.f32 %v4029, 0.2
      %v4459 = vmul.f32 %v4034, 0.2
      %v4460 = vmax.f32 %v2354, %v4039
      %v4461 = vmax.f32 %v2357, %v4040
      %v4462 = vmax.f32 %v2362, %v4041
      %v4463 = vmax.f32 %v2365, %v4042
      %v4464 = vmax.f32 %v2370, %v4043
      %v4465 = vmax.f32 %v2373, %v4044
      %v4466 = vmax.f32 %v2378, %v4045
      %v4467 = vmax.f32 %v2381, %v4046
      %v4468 = vmax.f32 %v2386, %v4047
      %v4469 = vmax.f32 %v2389, %v4048
      %v4470 = vmax.f32 %v2394, %v4049
      %v4471 = vmax.f32 %v2397, %v4050
      %v4472 = vmax.f32 %v2402, %v4051
      %v4473 = vmax.f32 %v2405, %v4052
      %v4474 = vmax.f32 %v2410, %v4053
      %v4475 = vmax.f32 %v2413, %v4054
      %v4476 = vmax.f32 %v2418, %v4055
      %v4477 = vmax.f32 %v2421, %v4056
      %v4478 = vmax.f32 %v2426, %v4057
      %v4479 = vmax.f32 %v2429, %v4058
      %v4480 = vmax.f32 %v2434, %v4059
      %v4481 = vmax.f32 %v2437, %v4060
      %v4482 = vmax.f32 %v2442, %v4061
      %v4483 = vmax.f32 %v2445, %v4062
      %v4484 = vmax.f32 %v2450, %v4063
      %v4485 = vmax.f32 %v2453, %v4064
      %v4486 = vmax.f32 %v2458, %v4065
      %v4487 = vmax.f32 %v2461, %v4066
      %v4488 = vmax.f32 %v2466, %v4067
      %v4489 = vmax.f32 %v2469, %v4068
      %v4490 = vmax.f32 %v2474, %v4069
      %v4491 = vmax.f32 %v2477, %v4070
      %v4492 = vmax.f32 %v2482, %v4071
      %v4493 = vmax.f32 %v2485, %v4072
      %v4494 = vmax.f32 %v2490, %v4073
      %v4495 = vmax.f32 %v2493, %v4074
      %v4496 = vmax.f32 %v2498, %v4075
      %v4497 = vmax.f32 %v2501, %v4076
      %v4498 = vmax.f32 %v2506, %v4077
      %v4499 = vmax.f32 %v2509, %v4078
      %v4500 = vmax.f32 %v2514, %v4079
      %v4501 = vmax.f32 %v2517, %v4080
      %v4502 = vmax.f32 %v2522, %v4081
      %v4503 = vmax.f32 %v2525, %v4082
      %v4504 = vmax.f32 %v2530, %v4083
      %v4505 = vmax.f32 %v2533, %v4084
      %v4506 = vmax.f32 %v2538, %v4085
      %v4507 = vmax.f32 %v2541, %v4086
      %v4508 = vmax.f32 %v2546, %v4087
      %v4509 = vmax.f32 %v2549, %v4088
      %v4510 = vmax.f32 %v2554, %v4089
      %v4511 = vmax.f32 %v2557, %v4090
      %v4512 = vmax.f32 %v2562, %v4091
      %v4513 = vmax.f32 %v2565, %v4092
      %v4514 = vmax.f32 %v2570, %v4093
      %v4515 = vmax.f32 %v2573, %v4094
      %v4516 = vmax.f32 %v2578, %v4095
      %v4517 = vmax.f32 %v2581, %v4096
      %v4518 = vmax.f32 %v2586, %v4097
      %v4519 = vmax.f32 %v2589, %v4098
      %v4520 = vmax.f32 %v2594, %v4099
      %v4521 = vmax.f32 %v2597, %v4100
      %v4522 = vmax.f32 %v2602, %v4101
      %v4523 = vmax.f32 %v2605, %v4102
      %v4524 = vmax.f32 %v2610, %v4103
      %v4525 = vmax.f32 %v2613, %v4104
      %v4526 = vmax.f32 %v2618, %v4105
      %v4527 = vmax.f32 %v2621, %v4106
      %v4528 = vmax.f32 %v2626, %v4107
      %v4529 = vmax.f32 %v2629, %v4108
      %v4530 = vmax.f32 %v2634, %v4109
      %v4531 = vmax.f32 %v2637, %v4110
      %v4532 = vmax.f32 %v2642, %v4111
      %v4533 = vmax.f32 %v2645, %v4112
      %v4534 = vmax.f32 %v2650, %v4113
      %v4535 = vmax.f32 %v2653, %v4114
      %v4536 = vmax.f32 %v2658, %v4115
      %v4537 = vmax.f32 %v2661, %v4116
      %v4538 = vmax.f32 %v2666, %v4117
      %v4539 = vmax.f32 %v2669, %v4118
      %v4540 = vmax.f32 %v2674, %v4119
      %v4541 = vmax.f32 %v2677, %v4120
      %v4542 = vmax.f32 %v2682, %v4121
      %v4543 = vmax.f32 %v2685, %v4122
      %v4544 = vmax.f32 %v2690, %v4123
      %v4545 = vmax.f32 %v2693, %v4124
      %v4546 = vmax.f32 %v2698, %v4125
      %v4547 = vmax.f32 %v2701, %v4126
      %v4548 = vmax.f32 %v2706, %v4127
      %v4549 = vmax.f32 %v2709, %v4128
      %v4550 = vmax.f32 %v2714, %v4129
      %v4551 = vmax.f32 %v2717, %v4130
      %v4552 = vmax.f32 %v2722, %v4131
      %v4553 = vmax.f32 %v2725, %v4132
      %v4554 = vmax.f32 %v2730, %v4133
      %v4555 = vmax.f32 %v2733, %v4134
      %v4556 = vmax.f32 %v2738, %v4135
      %v4557 = vmax.f32 %v2741, %v4136
      %v4558 = vmax.f32 %v2746, %v4137
      %v4559 = vmax.f32 %v2749, %v4138
      %v4560 = vmax.f32 %v2754, %v4139
      %v4561 = vmax.f32 %v2757, %v4140
      %v4562 = vmax.f32 %v2762, %v4141
      %v4563 = vmax.f32 %v2765, %v4142
      %v4564 = vmax.f32 %v2770, %v4143
      %v4565 = vmax.f32 %v2773, %v4144
      %v4566 = vmax.f32 %v2778, %v4145
      %v4567 = vmax.f32 %v2781, %v4146
      %v4568 = vmax.f32 %v2786, %v4147
      %v4569 = vmax.f32 %v2789, %v4148
      %v4570 = vmax.f32 %v2794, %v4149
      %v4571 = vmax.f32 %v2797, %v4150
      %v4572 = vmax.f32 %v2802, %v4151
      %v4573 = vmax.f32 %v2805, %v4152
      %v4574 = vmax.f32 %v2810, %v4153
      %v4575 = vmax.f32 %v2813, %v4154
      %v4576 = vmax.f32 %v2818, %v4155
      %v4577 = vmax.f32 %v2821, %v4156
      %v4578 = vmax.f32 %v2826, %v4157
      %v4579 = vmax.f32 %v2829, %v4158
      %v4580 = vmax.f32 %v2834, %v4159
      %v4581 = vmax.f32 %v2837, %v4160
      %v4582 = vmax.f32 %v2842, %v4161
      %v4583 = vmax.f32 %v2845, %v4162
      %v4584 = vmax.f32 %v2850, %v4163
      %v4585 = vmax.f32 %v2853, %v4164
      %v4586 = vmax.f32 %v2858, %v4165
      %v4587 = vmax.f32 %v2861, %v4166
      %v4588 = vmax.f32 %v2866, %v4167
      %v4589 = vmax.f32 %v2869, %v4168
      %v4590 = vmax.f32 %v2874, %v4169
      %v4591 = vmax.f32 %v2877, %v4170
      %v4592 = vmax.f32 %v2882, %v4171
      %v4593 = vmax.f32 %v2885, %v4172
      %v4594 = vmax.f32 %v2890, %v4173
      %v4595 = vmax.f32 %v2893, %v4174
      %v4596 = vmax.f32 %v2898, %v4175
      %v4597 = vmax.f32 %v2901, %v4176
      %v4598 = vmax.f32 %v2906, %v4177
      %v4599 = vmax.f32 %v2909, %v4178
      %v4600 = vmax.f32 %v2914, %v4179
      %v4601 = vmax.f32 %v2917, %v4180
      %v4602 = vmax.f32 %v2922, %v4181
      %v4603 = vmax.f32 %v2925, %v4182
      %v4604 = vmax.f32 %v2930, %v4183
      %v4605 = vmax.f32 %v2933, %v4184
      %v4606 = vmax.f32 %v2938, %v4185
      %v4607 = vmax.f32 %v2941, %v4186
      %v4608 = vmax.f32 %v2946, %v4187
      %v4609 = vmax.f32 %v2949, %v4188
      %v4610 = vmax.f32 %v2954, %v4189
      %v4611 = vmax.f32 %v2957, %v4190
      %v4612 = vmax.f32 %v2962, %v4191
      %v4613 = vmax.f32 %v2965, %v4192
      %v4614 = vmax.f32 %v2970, %v4193
      %v4615 = vmax.f32 %v2973, %v4194
      %v4616 = vmax.f32 %v2978, %v4195
      %v4617 = vmax.f32 %v2981, %v4196
      %v4618 = vmax.f32 %v2986, %v4197
      %v4619 = vmax.f32 %v2989, %v4198
      %v4620 = vmax.f32 %v2994, %v4199
      %v4621 = vmax.f32 %v2997, %v4200
      %v4622 = vmax.f32 %v3002, %v4201
      %v4623 = vmax.f32 %v3005, %v4202
      %v4624 = vmax.f32 %v3010, %v4203
      %v4625 = vmax.f32 %v3013, %v4204
      %v4626 = vmax.f32 %v3018, %v4205
      %v4627 = vmax.f32 %v3021, %v4206
      %v4628 = vmax.f32 %v3026, %v4207
      %v4629 = vmax.f32 %v3029, %v4208
      %v4630 = vmax.f32 %v3034, %v4209
      %v4631 = vmax.f32 %v3037, %v4210
      %v4632 = vmax.f32 %v3042, %v4211
      %v4633 = vmax.f32 %v3045, %v4212
      %v4634 = vmax.f32 %v3050, %v4213
      %v4635 = vmax.f32 %v3053, %v4214
      %v4636 = vmax.f32 %v3058, %v4215
      %v4637 = vmax.f32 %v3061, %v4216
      %v4638 = vmax.f32 %v3066, %v4217
      %v4639 = vmax.f32 %v3069, %v4218
      %v4640 = vmax.f32 %v3074, %v4219
      %v4641 = vmax.f32 %v3077, %v4220
      %v4642 = vmax.f32 %v3082, %v4221
      %v4643 = vmax.f32 %v3085, %v4222
      %v4644 = vmax.f32 %v3090, %v4223
      %v4645 = vmax.f32 %v3093, %v4224
      %v4646 = vmax.f32 %v3098, %v4225
      %v4647 = vmax.f32 %v3101, %v4226
      %v4648 = vmax.f32 %v3106, %v4227
      %v4649 = vmax.f32 %v3109, %v4228
      %v4650 = vmax.f32 %v3114, %v4229
      %v4651 = vmax.f32 %v3117, %v4230
      %v4652 = vmax.f32 %v3122, %v4231
      %v4653 = vmax.f32 %v3125, %v4232
      %v4654 = vmax.f32 %v3130, %v4233
      %v4655 = vmax.f32 %v3133, %v4234
      %v4656 = vmax.f32 %v3138, %v4235
      %v4657 = vmax.f32 %v3141, %v4236
      %v4658 = vmax.f32 %v3146, %v4237
      %v4659 = vmax.f32 %v3149, %v4238
      %v4660 = vmax.f32 %v3154, %v4239
      %v4661 = vmax.f32 %v3157, %v4240
      %v4662 = vmax.f32 %v3162, %v4241
      %v4663 = vmax.f32 %v3165, %v4242
      %v4664 = vmax.f32 %v3170, %v4243
      %v4665 = vmax.f32 %v3173, %v4244
      %v4666 = vmax.f32 %v3178, %v4245
      %v4667 = vmax.f32 %v3181, %v4246
      %v4668 = vmax.f32 %v3186, %v4247
      %v4669 = vmax.f32 %v3189, %v4248
      %v4670 = vmax.f32 %v3194, %v4249
      %v4671 = vmax.f32 %v3197, %v4250
      %v4672 = vmax.f32 %v3202, %v4251
      %v4673 = vmax.f32 %v3205, %v4252
      %v4674 = vmax.f32 %v3210, %v4253
      %v4675 = vmax.f32 %v3213, %v4254
      %v4676 = vmax.f32 %v3218, %v4255
      %v4677 = vmax.f32 %v3221, %v4256
      %v4678 = vmax.f32 %v3226, %v4257
      %v4679 = vmax.f32 %v3229, %v4258
      %v4680 = vmax.f32 %v3234, %v4259
      %v4681 = vmax.f32 %v3237, %v4260
      %v4682 = vmax.f32 %v3242, %v4261
      %v4683 = vmax.f32 %v3245, %v4262
      %v4684 = vmax.f32 %v3250, %v4263
      %v4685 = vmax.f32 %v3253, %v4264
      %v4686 = vmax.f32 %v3258, %v4265
      %v4687 = vmax.f32 %v3261, %v4266
      %v4688 = vmax.f32 %v3266, %v4267
      %v4689 = vmax.f32 %v3269, %v4268
      %v4690 = vmax.f32 %v3274, %v4269
      %v4691 = vmax.f32 %v3277, %v4270
      %v4692 = vmax.f32 %v3282, %v4271
      %v4693 = vmax.f32 %v3285, %v4272
      %v4694 = vmax.f32 %v3290, %v4273
      %v4695 = vmax.f32 %v3293, %v4274
      %v4696 = vmax.f32 %v3298, %v4275
      %v4697 = vmax.f32 %v3301, %v4276
      %v4698 = vmax.f32 %v3306, %v4277
      %v4699 = vmax.f32 %v3309, %v4278
      %v4700 = vmax.f32 %v3314, %v4279
      %v4701 = vmax.f32 %v3317, %v4280
      %v4702 = vmax.f32 %v3322, %v4281
      %v4703 = vmax.f32 %v3325, %v4282
      %v4704 = vmax.f32 %v3330, %v4283
      %v4705 = vmax.f32 %v3333, %v4284
      %v4706 = vmax.f32 %v3338, %v4285
      %v4707 = vmax.f32 %v3341, %v4286
      %v4708 = vmax.f32 %v3346, %v4287
      %v4709 = vmax.f32 %v3349, %v4288
      %v4710 = vmax.f32 %v3354, %v4289
      %v4711 = vmax.f32 %v3357, %v4290
      %v4712 = vmax.f32 %v3362, %v4291
      %v4713 = vmax.f32 %v3365, %v4292
      %v4714 = vmax.f32 %v3370, %v4293
      %v4715 = vmax.f32 %v3373, %v4294
      %v4716 = vmax.f32 %v3378, %v4295
      %v4717 = vmax.f32 %v3381, %v4296
      %v4718 = vmax.f32 %v3386, %v4297
      %v4719 = vmax.f32 %v3389, %v4298
      %v4720 = vmax.f32 %v3394, %v4299
      %v4721 = vmax.f32 %v3397, %v4300
      %v4722 = vmax.f32 %v3402, %v4301
      %v4723 = vmax.f32 %v3405, %v4302
      %v4724 = vmax.f32 %v3410, %v4303
      %v4725 = vmax.f32 %v3413, %v4304
      %v4726 = vmax.f32 %v3418, %v4305
      %v4727 = vmax.f32 %v3421, %v4306
      %v4728 = vmax.f32 %v3426, %v4307
      %v4729 = vmax.f32 %v3429, %v4308
      %v4730 = vmax.f32 %v3434, %v4309
      %v4731 = vmax.f32 %v3437, %v4310
      %v4732 = vmax.f32 %v3442, %v4311
      %v4733 = vmax.f32 %v3445, %v4312
      %v4734 = vmax.f32 %v3450, %v4313
      %v4735 = vmax.f32 %v3453, %v4314
      %v4736 = vmax.f32 %v3458, %v4315
      %v4737 = vmax.f32 %v3461, %v4316
      %v4738 = vmax.f32 %v3466, %v4317
      %v4739 = vmax.f32 %v3469, %v4318
      %v4740 = vmax.f32 %v3474, %v4319
      %v4741 = vmax.f32 %v3477, %v4320
      %v4742 = vmax.f32 %v3482, %v4321
      %v4743 = vmax.f32 %v3485, %v4322
      %v4744 = vmax.f32 %v3490, %v4323
      %v4745 = vmax.f32 %v3493, %v4324
      %v4746 = vmax.f32 %v3498, %v4325
      %v4747 = vmax.f32 %v3501, %v4326
      %v4748 = vmax.f32 %v3506, %v4327
      %v4749 = vmax.f32 %v3509, %v4328
      %v4750 = vmax.f32 %v3514, %v4329
      %v4751 = vmax.f32 %v3517, %v4330
      %v4752 = vmax.f32 %v3522, %v4331
      %v4753 = vmax.f32 %v3525, %v4332
      %v4754 = vmax.f32 %v3530, %v4333
      %v4755 = vmax.f32 %v3533, %v4334
      %v4756 = vmax.f32 %v3538, %v4335
      %v4757 = vmax.f32 %v3541, %v4336
      %v4758 = vmax.f32 %v3546, %v4337
      %v4759 = vmax.f32 %v3549, %v4338
      %v4760 = vmax.f32 %v3554, %v4339
      %v4761 = vmax.f32 %v3557, %v4340
      %v4762 = vmax.f32 %v3562, %v4341
      %v4763 = vmax.f32 %v3565, %v4342
      %v4764 = vmax.f32 %v3570, %v4343
      %v4765 = vmax.f32 %v3573, %v4344
      %v4766 = vmax.f32 %v3578, %v4345
      %v4767 = vmax.f32 %v3581, %v4346
      %v4768 = vmax.f32 %v3586, %v4347
      %v4769 = vmax.f32 %v3589, %v4348
      %v4770 = vmax.f32 %v3594, %v4349
      %v4771 = vmax.f32 %v3597, %v4350
      %v4772 = vmax.f32 %v3602, %v4351
      %v4773 = vmax.f32 %v3605, %v4352
      %v4774 = vmax.f32 %v3610, %v4353
      %v4775 = vmax.f32 %v3613, %v4354
      %v4776 = vmax.f32 %v3618, %v4355
      %v4777 = vmax.f32 %v3621, %v4356
      %v4778 = vmax.f32 %v3626, %v4357
      %v4779 = vmax.f32 %v3629, %v4358
      %v4780 = vmax.f32 %v3634, %v4359
      %v4781 = vmax.f32 %v3637, %v4360
      %v4782 = vmax.f32 %v3642, %v4361
      %v4783 = vmax.f32 %v3645, %v4362
      %v4784 = vmax.f32 %v3650, %v4363
      %v4785 = vmax.f32 %v3653, %v4364
      %v4786 = vmax.f32 %v3658, %v4365
      %v4787 = vmax.f32 %v3661, %v4366
      %v4788 = vmax.f32 %v3666, %v4367
      %v4789 = vmax.f32 %v3669, %v4368
      %v4790 = vmax.f32 %v3674, %v4369
      %v4791 = vmax.f32 %v3677, %v4370
      %v4792 = vmax.f32 %v3682, %v4371
      %v4793 = vmax.f32 %v3685, %v4372
      %v4794 = vmax.f32 %v3690, %v4373
      %v4795 = vmax.f32 %v3693, %v4374
      %v4796 = vmax.f32 %v3698, %v4375
      %v4797 = vmax.f32 %v3701, %v4376
      %v4798 = vmax.f32 %v3706, %v4377
      %v4799 = vmax.f32 %v3709, %v4378
      %v4800 = vmax.f32 %v3714, %v4379
      %v4801 = vmax.f32 %v3717, %v4380
      %v4802 = vmax.f32 %v3722, %v4381
      %v4803 = vmax.f32 %v3725, %v4382
      %v4804 = vmax.f32 %v3730, %v4383
      %v4805 = vmax.f32 %v3733, %v4384
      %v4806 = vmax.f32 %v3738, %v4385
      %v4807 = vmax.f32 %v3741, %v4386
      %v4808 = vmax.f32 %v3746, %v4387
      %v4809 = vmax.f32 %v3749, %v4388
      %v4810 = vmax.f32 %v3754, %v4389
      %v4811 = vmax.f32 %v3757, %v4390
      %v4812 = vmax.f32 %v3762, %v4391
      %v4813 = vmax.f32 %v3765, %v4392
      %v4814 = vmax.f32 %v3770, %v4393
      %v4815 = vmax.f32 %v3773, %v4394
      %v4816 = vmax.f32 %v3778, %v4395
      %v4817 = vmax.f32 %v3781, %v4396
      %v4818 = vmax.f32 %v3786, %v4397
      %v4819 = vmax.f32 %v3789, %v4398
      %v4820 = vmax.f32 %v3794, %v4399
      %v4821 = vmax.f32 %v3797, %v4400
      %v4822 = vmax.f32 %v3802, %v4401
      %v4823 = vmax.f32 %v3805, %v4402
      %v4824 = vmax.f32 %v3810, %v4403
      %v4825 = vmax.f32 %v3813, %v4404
      %v4826 = vmax.f32 %v3818, %v4405
      %v4827 = vmax.f32 %v3821, %v4406
      %v4828 = vmax.f32 %v3826, %v4407
      %v4829 = vmax.f32 %v3829, %v4408
      %v4830 = vmax.f32 %v3834, %v4409
      %v4831 = vmax.f32 %v3837, %v4410
      %v4832 = vmax.f32 %v3842, %v4411
      %v4833 = vmax.f32 %v3845, %v4412
      %v4834 = vmax.f32 %v3850, %v4413
      %v4835 = vmax.f32 %v3853, %v4414
      %v4836 = vmax.f32 %v3858, %v4415
      %v4837 = vmax.f32 %v3861, %v4416
      %v4838 = vmax.f32 %v3866, %v4417
      %v4839 = vmax.f32 %v3869, %v4418
      %v4840 = vmax.f32 %v3874, %v4419
      %v4841 = vmax.f32 %v3877, %v4420
      %v4842 = vmax.f32 %v3882, %v4421
      %v4843 = vmax.f32 %v3885, %v4422
      %v4844 = vmax.f32 %v3890, %v4423
      %v4845 = vmax.f32 %v3893, %v4424
      %v4846 = vmax.f32 %v3898, %v4425
      %v4847 = vmax.f32 %v3901, %v4426
      %v4848 = vmax.f32 %v3906, %v4427
      %v4849 = vmax.f32 %v3909, %v4428
      %v4850 = vmax.f32 %v3914, %v4429
      %v4851 = vmax.f32 %v3917, %v4430
      %v4852 = vmax.f32 %v3922, %v4431
      %v4853 = vmax.f32 %v3925, %v4432
      %v4854 = vmax.f32 %v3930, %v4433
      %v4855 = vmax.f32 %v3933, %v4434
      %v4856 = vmax.f32 %v3938, %v4435
      %v4857 = vmax.f32 %v3941, %v4436
      %v4858 = vmax.f32 %v3946, %v4437
      %v4859 = vmax.f32 %v3949, %v4438
      %v4860 = vmax.f32 %v3954, %v4439
      %v4861 = vmax.f32 %v3957, %v4440
      %v4862 = vmax.f32 %v3962, %v4441
      %v4863 = vmax.f32 %v3965, %v4442
      %v4864 = vmax.f32 %v3970, %v4443
      %v4865 = vmax.f32 %v3973, %v4444
      %v4866 = vmax.f32 %v3978, %v4445
      %v4867 = vmax.f32 %v3981, %v4446
      %v4868 = vmax.f32 %v3986, %v4447
      %v4869 = vmax.f32 %v3989, %v4448
      %v4870 = vmax.f32 %v3994, %v4449
      %v4871 = vmax.f32 %v3997, %v4450
      %v4872 = vmax.f32 %v4002, %v4451
      %v4873 = vmax.f32 %v4005, %v4452
      %v4874 = vmax.f32 %v4010, %v4453
      %v4875 = vmax.f32 %v4013, %v4454
      %v4876 = vmax.f32 %v4018, %v4455
      %v4877 = vmax.f32 %v4021, %v4456
      %v4878 = vmax.f32 %v4026, %v4457
      %v4879 = vmax.f32 %v4029, %v4458
      %v4880 = vmax.f32 %v4034, %v4459
      %4881 = vst.msk [vmem:[%s170] sm:$0xff] %vm1685, %v4460
      %4882 = vst.msk [vmem:[%s170 + $0x8] sm:$0xff] %vm1685, %v4461
      %4883 = vst.msk [vmem:[%s170 + $0x10] sm:$0xff] %vm1685, %v4462
      %4884 = vst.msk [vmem:[%s170 + $0x18] sm:$0xff] %vm1685, %v4463
      %4885 = vst.msk [vmem:[%s170 + $0x20] sm:$0xff] %vm1685, %v4464
      %4886 = vst.msk [vmem:[%s170 + $0x28] sm:$0xff] %vm1685, %v4465
      %4887 = vst.msk [vmem:[%s170 + $0x30] sm:$0xff] %vm1685, %v4466
      %4888 = vst.msk [vmem:[%s170 + $0x38] sm:$0xff] %vm1685, %v4467
      %4889 = vst.msk [vmem:[%s170 + $0x40] sm:$0xff] %vm1685, %v4468
      %4890 = vst.msk [vmem:[%s170 + $0x48] sm:$0xff] %vm1685, %v4469
      %4891 = vst.msk [vmem:[%s170 + $0x50] sm:$0xff] %vm1685, %v4470
      %4892 = vst.msk [vmem:[%s170 + $0x58] sm:$0xff] %vm1685, %v4471
      %4893 = vst.msk [vmem:[%s170 + $0x60] sm:$0xff] %vm1685, %v4472
      %4894 = vst.msk [vmem:[%s170 + $0x68] sm:$0xff] %vm1685, %v4473
      %4895 = vst.msk [vmem:[%s170 + $0x70] sm:$0xff] %vm1685, %v4474
      %4896 = vst.msk [vmem:[%s170 + $0x78] sm:$0xff] %vm1685, %v4475
      %4897 = vst.msk [vmem:[%s170 + $0x80] sm:$0xff] %vm1685, %v4476
      %4898 = vst.msk [vmem:[%s170 + $0x88] sm:$0xff] %vm1685, %v4477
      %4899 = vst.msk [vmem:[%s170 + $0x90] sm:$0xff] %vm1685, %v4478
      %4900 = vst.msk [vmem:[%s170 + $0x98] sm:$0xff] %vm1685, %v4479
      %4901 = vst.msk [vmem:[%s170 + $0xa0] sm:$0xff] %vm1685, %v4480
      %4902 = vst.msk [vmem:[%s170 + $0xa8] sm:$0xff] %vm1685, %v4481
      %4903 = vst.msk [vmem:[%s170 + $0xb0] sm:$0xff] %vm1685, %v4482
      %4904 = vst.msk [vmem:[%s170 + $0xb8] sm:$0xff] %vm1685, %v4483
      %4905 = vst.msk [vmem:[%s170 + $0xc0] sm:$0xff] %vm1685, %v4484
      %4906 = vst.msk [vmem:[%s170 + $0xc8] sm:$0xff] %vm1685, %v4485
      %4907 = vst.msk [vmem:[%s170 + $0xd0] sm:$0xff] %vm1685, %v4486
      %4908 = vst.msk [vmem:[%s170 + $0xd8] sm:$0xff] %vm1685, %v4487
      %4909 = vst.msk [vmem:[%s170 + $0xe0] sm:$0xff] %vm1685, %v4488
      %4910 = vst.msk [vmem:[%s170 + $0xe8] sm:$0xff] %vm1685, %v4489
      %4911 = vst.msk [vmem:[%s170 + $0xf0] sm:$0xff] %vm1685, %v4490
      %4912 = vst.msk [vmem:[%s170 + $0xf8] sm:$0xff] %vm1685, %v4491
      %4913 = vst.msk [vmem:[%s170 + $0x100] sm:$0xff] %vm1685, %v4492
      %4914 = vst.msk [vmem:[%s170 + $0x108] sm:$0xff] %vm1685, %v4493
      %4915 = vst.msk [vmem:[%s170 + $0x110] sm:$0xff] %vm1685, %v4494
      %4916 = vst.msk [vmem:[%s170 + $0x118] sm:$0xff] %vm1685, %v4495
      %4917 = vst.msk [vmem:[%s170 + $0x120] sm:$0xff] %vm1685, %v4496
      %4918 = vst.msk [vmem:[%s170 + $0x128] sm:$0xff] %vm1685, %v4497
      %4919 = vst.msk [vmem:[%s170 + $0x130] sm:$0xff] %vm1685, %v4498
      %4920 = vst.msk [vmem:[%s170 + $0x138] sm:$0xff] %vm1685, %v4499
      %4921 = vst.msk [vmem:[%s170 + $0x140] sm:$0xff] %vm1685, %v4500
      %4922 = vst.msk [vmem:[%s170 + $0x148] sm:$0xff] %vm1685, %v4501
      %4923 = vst.msk [vmem:[%s170 + $0x150] sm:$0xff] %vm1685, %v4502
      %4924 = vst.msk [vmem:[%s170 + $0x158] sm:$0xff] %vm1685, %v4503
      %4925 = vst.msk [vmem:[%s170 + $0x160] sm:$0xff] %vm1685, %v4504
      %4926 = vst.msk [vmem:[%s170 + $0x168] sm:$0xff] %vm1685, %v4505
      %4927 = vst.msk [vmem:[%s170 + $0x170] sm:$0xff] %vm1685, %v4506
      %4928 = vst.msk [vmem:[%s170 + $0x178] sm:$0xff] %vm1685, %v4507
      %4929 = vst.msk [vmem:[%s170 + $0x180] sm:$0xff] %vm1685, %v4508
      %4930 = vst.msk [vmem:[%s170 + $0x188] sm:$0xff] %vm1685, %v4509
      %4931 = vst.msk [vmem:[%s170 + $0x190] sm:$0xff] %vm1685, %v4510
      %4932 = vst.msk [vmem:[%s170 + $0x198] sm:$0xff] %vm1685, %v4511
      %4933 = vst.msk [vmem:[%s170 + $0x1a0] sm:$0xff] %vm1685, %v4512
      %4934 = vst.msk [vmem:[%s170 + $0x1a8] sm:$0xff] %vm1685, %v4513
      %4935 = vst.msk [vmem:[%s170 + $0x1b0] sm:$0xff] %vm1685, %v4514
      %4936 = vst.msk [vmem:[%s170 + $0x1b8] sm:$0xff] %vm1685, %v4515
      %4937 = vst.msk [vmem:[%s170 + $0x1c0] sm:$0xff] %vm1685, %v4516
      %4938 = vst.msk [vmem:[%s170 + $0x1c8] sm:$0xff] %vm1685, %v4517
      %4939 = vst.msk [vmem:[%s170 + $0x1d0] sm:$0xff] %vm1685, %v4518
      %4940 = vst.msk [vmem:[%s170 + $0x1d8] sm:$0xff] %vm1685, %v4519
      %4941 = vst.msk [vmem:[%s170 + $0x1e0] sm:$0xff] %vm1685, %v4520
      %4942 = vst.msk [vmem:[%s170 + $0x1e8] sm:$0xff] %vm1685, %v4521
      %4943 = vst.msk [vmem:[%s170 + $0x1f0] sm:$0xff] %vm1685, %v4522
      %4944 = vst.msk [vmem:[%s170 + $0x1f8] sm:$0xff] %vm1685, %v4523
      %4945 = vst.msk [vmem:[%s170 + $0x200] sm:$0xff] %vm1685, %v4524
      %4946 = vst.msk [vmem:[%s170 + $0x208] sm:$0xff] %vm1685, %v4525
      %4947 = vst.msk [vmem:[%s170 + $0x210] sm:$0xff] %vm1685, %v4526
      %4948 = vst.msk [vmem:[%s170 + $0x218] sm:$0xff] %vm1685, %v4527
      %4949 = vst.msk [vmem:[%s170 + $0x220] sm:$0xff] %vm1685, %v4528
      %4950 = vst.msk [vmem:[%s170 + $0x228] sm:$0xff] %vm1685, %v4529
      %4951 = vst.msk [vmem:[%s170 + $0x230] sm:$0xff] %vm1685, %v4530
      %4952 = vst.msk [vmem:[%s170 + $0x238] sm:$0xff] %vm1685, %v4531
      %4953 = vst.msk [vmem:[%s170 + $0x240] sm:$0xff] %vm1685, %v4532
      %4954 = vst.msk [vmem:[%s170 + $0x248] sm:$0xff] %vm1685, %v4533
      %4955 = vst.msk [vmem:[%s170 + $0x250] sm:$0xff] %vm1685, %v4534
      %4956 = vst.msk [vmem:[%s170 + $0x258] sm:$0xff] %vm1685, %v4535
      %4957 = vst.msk [vmem:[%s170 + $0x260] sm:$0xff] %vm1685, %v4536
      %4958 = vst.msk [vmem:[%s170 + $0x268] sm:$0xff] %vm1685, %v4537
      %4959 = vst.msk [vmem:[%s170 + $0x270] sm:$0xff] %vm1685, %v4538
      %4960 = vst.msk [vmem:[%s170 + $0x278] sm:$0xff] %vm1685, %v4539
      %4961 = vst.msk [vmem:[%s170 + $0x280] sm:$0xff] %vm1685, %v4540
      %4962 = vst.msk [vmem:[%s170 + $0x288] sm:$0xff] %vm1685, %v4541
      %4963 = vst.msk [vmem:[%s170 + $0x290] sm:$0xff] %vm1685, %v4542
      %4964 = vst.msk [vmem:[%s170 + $0x298] sm:$0xff] %vm1685, %v4543
      %4965 = vst.msk [vmem:[%s170 + $0x2a0] sm:$0xff] %vm1685, %v4544
      %4966 = vst.msk [vmem:[%s170 + $0x2a8] sm:$0xff] %vm1685, %v4545
      %4967 = vst.msk [vmem:[%s170 + $0x2b0] sm:$0xff] %vm1685, %v4546
      %4968 = vst.msk [vmem:[%s170 + $0x2b8] sm:$0xff] %vm1685, %v4547
      %4969 = vst.msk [vmem:[%s170 + $0x2c0] sm:$0xff] %vm1685, %v4548
      %4970 = vst.msk [vmem:[%s170 + $0x2c8] sm:$0xff] %vm1685, %v4549
      %4971 = vst.msk [vmem:[%s170 + $0x2d0] sm:$0xff] %vm1685, %v4550
      %4972 = vst.msk [vmem:[%s170 + $0x2d8] sm:$0xff] %vm1685, %v4551
      %4973 = vst.msk [vmem:[%s170 + $0x2e0] sm:$0xff] %vm1685, %v4552
      %4974 = vst.msk [vmem:[%s170 + $0x2e8] sm:$0xff] %vm1685, %v4553
      %4975 = vst.msk [vmem:[%s170 + $0x2f0] sm:$0xff] %vm1685, %v4554
      %4976 = vst.msk [vmem:[%s170 + $0x2f8] sm:$0xff] %vm1685, %v4555
      %4977 = vst.msk [vmem:[%s170 + $0x300] sm:$0xff] %vm1685, %v4556
      %4978 = vst.msk [vmem:[%s170 + $0x308] sm:$0xff] %vm1685, %v4557
      %4979 = vst.msk [vmem:[%s170 + $0x310] sm:$0xff] %vm1685, %v4558
      %4980 = vst.msk [vmem:[%s170 + $0x318] sm:$0xff] %vm1685, %v4559
      %4981 = vst.msk [vmem:[%s170 + $0x320] sm:$0xff] %vm1685, %v4560
      %4982 = vst.msk [vmem:[%s170 + $0x328] sm:$0xff] %vm1685, %v4561
      %4983 = vst.msk [vmem:[%s170 + $0x330] sm:$0xff] %vm1685, %v4562
      %4984 = vst.msk [vmem:[%s170 + $0x338] sm:$0xff] %vm1685, %v4563
      %4985 = vst.msk [vmem:[%s170 + $0x340] sm:$0xff] %vm1685, %v4564
      %4986 = vst.msk [vmem:[%s170 + $0x348] sm:$0xff] %vm1685, %v4565
      %4987 = vst.msk [vmem:[%s170 + $0x350] sm:$0xff] %vm1685, %v4566
      %4988 = vst.msk [vmem:[%s170 + $0x358] sm:$0xff] %vm1685, %v4567
      %4989 = vst.msk [vmem:[%s170 + $0x360] sm:$0xff] %vm1685, %v4568
      %4990 = vst.msk [vmem:[%s170 + $0x368] sm:$0xff] %vm1685, %v4569
      %4991 = vst.msk [vmem:[%s170 + $0x370] sm:$0xff] %vm1685, %v4570
      %4992 = vst.msk [vmem:[%s170 + $0x378] sm:$0xff] %vm1685, %v4571
      %4993 = vst.msk [vmem:[%s170 + $0x380] sm:$0xff] %vm1685, %v4572
      %4994 = vst.msk [vmem:[%s170 + $0x388] sm:$0xff] %vm1685, %v4573
      %4995 = vst.msk [vmem:[%s170 + $0x390] sm:$0xff] %vm1685, %v4574
      %4996 = vst.msk [vmem:[%s170 + $0x398] sm:$0xff] %vm1685, %v4575
      %4997 = vst.msk [vmem:[%s170 + $0x3a0] sm:$0xff] %vm1685, %v4576
      %4998 = vst.msk [vmem:[%s170 + $0x3a8] sm:$0xff] %vm1685, %v4577
      %4999 = vst.msk [vmem:[%s170 + $0x3b0] sm:$0xff] %vm1685, %v4578
      %5000 = vst.msk [vmem:[%s170 + $0x3b8] sm:$0xff] %vm1685, %v4579
      %5001 = vst.msk [vmem:[%s170 + $0x3c0] sm:$0xff] %vm1685, %v4580
      %5002 = vst.msk [vmem:[%s170 + $0x3c8] sm:$0xff] %vm1685, %v4581
      %5003 = vst.msk [vmem:[%s170 + $0x3d0] sm:$0xff] %vm1685, %v4582
      %5004 = vst.msk [vmem:[%s170 + $0x3d8] sm:$0xff] %vm1685, %v4583
      %5005 = vst.msk [vmem:[%s170 + $0x3e0] sm:$0xff] %vm1685, %v4584
      %5006 = vst.msk [vmem:[%s170 + $0x3e8] sm:$0xff] %vm1685, %v4585
      %5007 = vst.msk [vmem:[%s170 + $0x3f0] sm:$0xff] %vm1685, %v4586
      %5008 = vst.msk [vmem:[%s170 + $0x3f8] sm:$0xff] %vm1685, %v4587
      %5009 = vst.msk [vmem:[%s170 + $0x400] sm:$0xff] %vm1685, %v4588
      %5010 = vst.msk [vmem:[%s170 + $0x408] sm:$0xff] %vm1685, %v4589
      %5011 = vst.msk [vmem:[%s170 + $0x410] sm:$0xff] %vm1685, %v4590
      %5012 = vst.msk [vmem:[%s170 + $0x418] sm:$0xff] %vm1685, %v4591
      %5013 = vst.msk [vmem:[%s170 + $0x420] sm:$0xff] %vm1685, %v4592
      %5014 = vst.msk [vmem:[%s170 + $0x428] sm:$0xff] %vm1685, %v4593
      %5015 = vst.msk [vmem:[%s170 + $0x430] sm:$0xff] %vm1685, %v4594
      %5016 = vst.msk [vmem:[%s170 + $0x438] sm:$0xff] %vm1685, %v4595
      %5017 = vst.msk [vmem:[%s170 + $0x440] sm:$0xff] %vm1685, %v4596
      %5018 = vst.msk [vmem:[%s170 + $0x448] sm:$0xff] %vm1685, %v4597
      %5019 = vst.msk [vmem:[%s170 + $0x450] sm:$0xff] %vm1685, %v4598
      %5020 = vst.msk [vmem:[%s170 + $0x458] sm:$0xff] %vm1685, %v4599
      %5021 = vst.msk [vmem:[%s170 + $0x460] sm:$0xff] %vm1685, %v4600
      %5022 = vst.msk [vmem:[%s170 + $0x468] sm:$0xff] %vm1685, %v4601
      %5023 = vst.msk [vmem:[%s170 + $0x470] sm:$0xff] %vm1685, %v4602
      %5024 = vst.msk [vmem:[%s170 + $0x478] sm:$0xff] %vm1685, %v4603
      %5025 = vst.msk [vmem:[%s170 + $0x480] sm:$0xff] %vm1685, %v4604
      %5026 = vst.msk [vmem:[%s170 + $0x488] sm:$0xff] %vm1685, %v4605
      %5027 = vst.msk [vmem:[%s170 + $0x490] sm:$0xff] %vm1685, %v4606
      %5028 = vst.msk [vmem:[%s170 + $0x498] sm:$0xff] %vm1685, %v4607
      %5029 = vst.msk [vmem:[%s170 + $0x4a0] sm:$0xff] %vm1685, %v4608
      %5030 = vst.msk [vmem:[%s170 + $0x4a8] sm:$0xff] %vm1685, %v4609
      %5031 = vst.msk [vmem:[%s170 + $0x4b0] sm:$0xff] %vm1685, %v4610
      %5032 = vst.msk [vmem:[%s170 + $0x4b8] sm:$0xff] %vm1685, %v4611
      %5033 = vst.msk [vmem:[%s170 + $0x4c0] sm:$0xff] %vm1685, %v4612
      %5034 = vst.msk [vmem:[%s170 + $0x4c8] sm:$0xff] %vm1685, %v4613
      %5035 = vst.msk [vmem:[%s170 + $0x4d0] sm:$0xff] %vm1685, %v4614
      %5036 = vst.msk [vmem:[%s170 + $0x4d8] sm:$0xff] %vm1685, %v4615
      %5037 = vst.msk [vmem:[%s170 + $0x4e0] sm:$0xff] %vm1685, %v4616
      %5038 = vst.msk [vmem:[%s170 + $0x4e8] sm:$0xff] %vm1685, %v4617
      %5039 = vst.msk [vmem:[%s170 + $0x4f0] sm:$0xff] %vm1685, %v4618
      %5040 = vst.msk [vmem:[%s170 + $0x4f8] sm:$0xff] %vm1685, %v4619
      %5041 = vst.msk [vmem:[%s170 + $0x500] sm:$0xff] %vm1685, %v4620
      %5042 = vst.msk [vmem:[%s170 + $0x508] sm:$0xff] %vm1685, %v4621
      %5043 = vst.msk [vmem:[%s170 + $0x510] sm:$0xff] %vm1685, %v4622
      %5044 = vst.msk [vmem:[%s170 + $0x518] sm:$0xff] %vm1685, %v4623
      %5045 = vst.msk [vmem:[%s170 + $0x520] sm:$0xff] %vm1685, %v4624
      %5046 = vst.msk [vmem:[%s170 + $0x528] sm:$0xff] %vm1685, %v4625
      %5047 = vst.msk [vmem:[%s170 + $0x530] sm:$0xff] %vm1685, %v4626
      %5048 = vst.msk [vmem:[%s170 + $0x538] sm:$0xff] %vm1685, %v4627
      %5049 = vst.msk [vmem:[%s170 + $0x540] sm:$0xff] %vm1685, %v4628
      %5050 = vst.msk [vmem:[%s170 + $0x548] sm:$0xff] %vm1685, %v4629
      %5051 = vst.msk [vmem:[%s170 + $0x550] sm:$0xff] %vm1685, %v4630
      %5052 = vst.msk [vmem:[%s170 + $0x558] sm:$0xff] %vm1685, %v4631
      %5053 = vst.msk [vmem:[%s170 + $0x560] sm:$0xff] %vm1685, %v4632
      %5054 = vst.msk [vmem:[%s170 + $0x568] sm:$0xff] %vm1685, %v4633
      %5055 = vst.msk [vmem:[%s170 + $0x570] sm:$0xff] %vm1685, %v4634
      %5056 = vst.msk [vmem:[%s170 + $0x578] sm:$0xff] %vm1685, %v4635
      %5057 = vst.msk [vmem:[%s170 + $0x580] sm:$0xff] %vm1685, %v4636
      %5058 = vst.msk [vmem:[%s170 + $0x588] sm:$0xff] %vm1685, %v4637
      %5059 = vst.msk [vmem:[%s170 + $0x590] sm:$0xff] %vm1685, %v4638
      %5060 = vst.msk [vmem:[%s170 + $0x598] sm:$0xff] %vm1685, %v4639
      %5061 = vst.msk [vmem:[%s170 + $0x5a0] sm:$0xff] %vm1685, %v4640
      %5062 = vst.msk [vmem:[%s170 + $0x5a8] sm:$0xff] %vm1685, %v4641
      %5063 = vst.msk [vmem:[%s170 + $0x5b0] sm:$0xff] %vm1685, %v4642
      %5064 = vst.msk [vmem:[%s170 + $0x5b8] sm:$0xff] %vm1685, %v4643
      %5065 = vst.msk [vmem:[%s170 + $0x5c0] sm:$0xff] %vm1685, %v4644
      %5066 = vst.msk [vmem:[%s170 + $0x5c8] sm:$0xff] %vm1685, %v4645
      %5067 = vst.msk [vmem:[%s170 + $0x5d0] sm:$0xff] %vm1685, %v4646
      %5068 = vst.msk [vmem:[%s170 + $0x5d8] sm:$0xff] %vm1685, %v4647
      %5069 = vst.msk [vmem:[%s170 + $0x5e0] sm:$0xff] %vm1685, %v4648
      %5070 = vst.msk [vmem:[%s170 + $0x5e8] sm:$0xff] %vm1685, %v4649
      %5071 = vst.msk [vmem:[%s170 + $0x5f0] sm:$0xff] %vm1685, %v4650
      %5072 = vst.msk [vmem:[%s170 + $0x5f8] sm:$0xff] %vm1685, %v4651
      %5073 = vst.msk [vmem:[%s170 + $0x600] sm:$0xff] %vm1685, %v4652
      %5074 = vst.msk [vmem:[%s170 + $0x608] sm:$0xff] %vm1685, %v4653
      %5075 = vst.msk [vmem:[%s170 + $0x610] sm:$0xff] %vm1685, %v4654
      %5076 = vst.msk [vmem:[%s170 + $0x618] sm:$0xff] %vm1685, %v4655
      %5077 = vst.msk [vmem:[%s170 + $0x620] sm:$0xff] %vm1685, %v4656
      %5078 = vst.msk [vmem:[%s170 + $0x628] sm:$0xff] %vm1685, %v4657
      %5079 = vst.msk [vmem:[%s170 + $0x630] sm:$0xff] %vm1685, %v4658
      %5080 = vst.msk [vmem:[%s170 + $0x638] sm:$0xff] %vm1685, %v4659
      %5081 = vst.msk [vmem:[%s170 + $0x640] sm:$0xff] %vm1685, %v4660
      %5082 = vst.msk [vmem:[%s170 + $0x648] sm:$0xff] %vm1685, %v4661
      %5083 = vst.msk [vmem:[%s170 + $0x650] sm:$0xff] %vm1685, %v4662
      %5084 = vst.msk [vmem:[%s170 + $0x658] sm:$0xff] %vm1685, %v4663
      %5085 = vst.msk [vmem:[%s170 + $0x660] sm:$0xff] %vm1685, %v4664
      %5086 = vst.msk [vmem:[%s170 + $0x668] sm:$0xff] %vm1685, %v4665
      %5087 = vst.msk [vmem:[%s170 + $0x670] sm:$0xff] %vm1685, %v4666
      %5088 = vst.msk [vmem:[%s170 + $0x678] sm:$0xff] %vm1685, %v4667
      %5089 = vst.msk [vmem:[%s170 + $0x680] sm:$0xff] %vm1685, %v4668
      %5090 = vst.msk [vmem:[%s170 + $0x688] sm:$0xff] %vm1685, %v4669
      %5091 = vst.msk [vmem:[%s170 + $0x690] sm:$0xff] %vm1685, %v4670
      %5092 = vst.msk [vmem:[%s170 + $0x698] sm:$0xff] %vm1685, %v4671
      %5093 = vst.msk [vmem:[%s170 + $0x6a0] sm:$0xff] %vm1685, %v4672
      %5094 = vst.msk [vmem:[%s170 + $0x6a8] sm:$0xff] %vm1685, %v4673
      %5095 = vst.msk [vmem:[%s170 + $0x6b0] sm:$0xff] %vm1685, %v4674
      %5096 = vst.msk [vmem:[%s170 + $0x6b8] sm:$0xff] %vm1685, %v4675
      %5097 = vst.msk [vmem:[%s170 + $0x6c0] sm:$0xff] %vm1685, %v4676
      %5098 = vst.msk [vmem:[%s170 + $0x6c8] sm:$0xff] %vm1685, %v4677
      %5099 = vst.msk [vmem:[%s170 + $0x6d0] sm:$0xff] %vm1685, %v4678
      %5100 = vst.msk [vmem:[%s170 + $0x6d8] sm:$0xff] %vm1685, %v4679
      %5101 = vst.msk [vmem:[%s170 + $0x6e0] sm:$0xff] %vm1685, %v4680
      %5102 = vst.msk [vmem:[%s170 + $0x6e8] sm:$0xff] %vm1685, %v4681
      %5103 = vst.msk [vmem:[%s170 + $0x6f0] sm:$0xff] %vm1685, %v4682
      %5104 = vst.msk [vmem:[%s170 + $0x6f8] sm:$0xff] %vm1685, %v4683
      %5105 = vst.msk [vmem:[%s170 + $0x700] sm:$0xff] %vm1685, %v4684
      %5106 = vst.msk [vmem:[%s170 + $0x708] sm:$0xff] %vm1685, %v4685
      %5107 = vst.msk [vmem:[%s170 + $0x710] sm:$0xff] %vm1685, %v4686
      %5108 = vst.msk [vmem:[%s170 + $0x718] sm:$0xff] %vm1685, %v4687
      %5109 = vst.msk [vmem:[%s170 + $0x720] sm:$0xff] %vm1685, %v4688
      %5110 = vst.msk [vmem:[%s170 + $0x728] sm:$0xff] %vm1685, %v4689
      %5111 = vst.msk [vmem:[%s170 + $0x730] sm:$0xff] %vm1685, %v4690
      %5112 = vst.msk [vmem:[%s170 + $0x738] sm:$0xff] %vm1685, %v4691
      %5113 = vst.msk [vmem:[%s170 + $0x740] sm:$0xff] %vm1685, %v4692
      %5114 = vst.msk [vmem:[%s170 + $0x748] sm:$0xff] %vm1685, %v4693
      %5115 = vst.msk [vmem:[%s170 + $0x750] sm:$0xff] %vm1685, %v4694
      %5116 = vst.msk [vmem:[%s170 + $0x758] sm:$0xff] %vm1685, %v4695
      %5117 = vst.msk [vmem:[%s170 + $0x760] sm:$0xff] %vm1685, %v4696
      %5118 = vst.msk [vmem:[%s170 + $0x768] sm:$0xff] %vm1685, %v4697
      %5119 = vst.msk [vmem:[%s170 + $0x770] sm:$0xff] %vm1685, %v4698
      %5120 = vst.msk [vmem:[%s170 + $0x778] sm:$0xff] %vm1685, %v4699
      %5121 = vst.msk [vmem:[%s170 + $0x780] sm:$0xff] %vm1685, %v4700
      %5122 = vst.msk [vmem:[%s170 + $0x788] sm:$0xff] %vm1685, %v4701
      %5123 = vst.msk [vmem:[%s170 + $0x790] sm:$0xff] %vm1685, %v4702
      %5124 = vst.msk [vmem:[%s170 + $0x798] sm:$0xff] %vm1685, %v4703
      %5125 = vst.msk [vmem:[%s170 + $0x7a0] sm:$0xff] %vm1685, %v4704
      %5126 = vst.msk [vmem:[%s170 + $0x7a8] sm:$0xff] %vm1685, %v4705
      %5127 = vst.msk [vmem:[%s170 + $0x7b0] sm:$0xff] %vm1685, %v4706
      %5128 = vst.msk [vmem:[%s170 + $0x7b8] sm:$0xff] %vm1685, %v4707
      %5129 = vst.msk [vmem:[%s170 + $0x7c0] sm:$0xff] %vm1685, %v4708
      %5130 = vst.msk [vmem:[%s170 + $0x7c8] sm:$0xff] %vm1685, %v4709
      %5131 = vst.msk [vmem:[%s170 + $0x7d0] sm:$0xff] %vm1685, %v4710
      %5132 = vst.msk [vmem:[%s170 + $0x7d8] sm:$0xff] %vm1685, %v4711
      %5133 = vst.msk [vmem:[%s170 + $0x7e0] sm:$0xff] %vm1685, %v4712
      %5134 = vst.msk [vmem:[%s170 + $0x7e8] sm:$0xff] %vm1685, %v4713
      %5135 = vst.msk [vmem:[%s170 + $0x7f0] sm:$0xff] %vm1685, %v4714
      %5136 = vst.msk [vmem:[%s170 + $0x7f8] sm:$0xff] %vm1685, %v4715
      %5137 = vst.msk [vmem:[%s170 + $0x800] sm:$0xff] %vm1685, %v4716
      %5138 = vst.msk [vmem:[%s170 + $0x808] sm:$0xff] %vm1685, %v4717
      %5139 = vst.msk [vmem:[%s170 + $0x810] sm:$0xff] %vm1685, %v4718
      %5140 = vst.msk [vmem:[%s170 + $0x818] sm:$0xff] %vm1685, %v4719
      %5141 = vst.msk [vmem:[%s170 + $0x820] sm:$0xff] %vm1685, %v4720
      %5142 = vst.msk [vmem:[%s170 + $0x828] sm:$0xff] %vm1685, %v4721
      %5143 = vst.msk [vmem:[%s170 + $0x830] sm:$0xff] %vm1685, %v4722
      %5144 = vst.msk [vmem:[%s170 + $0x838] sm:$0xff] %vm1685, %v4723
      %5145 = vst.msk [vmem:[%s170 + $0x840] sm:$0xff] %vm1685, %v4724
      %5146 = vst.msk [vmem:[%s170 + $0x848] sm:$0xff] %vm1685, %v4725
      %5147 = vst.msk [vmem:[%s170 + $0x850] sm:$0xff] %vm1685, %v4726
      %5148 = vst.msk [vmem:[%s170 + $0x858] sm:$0xff] %vm1685, %v4727
      %5149 = vst.msk [vmem:[%s170 + $0x860] sm:$0xff] %vm1685, %v4728
      %5150 = vst.msk [vmem:[%s170 + $0x868] sm:$0xff] %vm1685, %v4729
      %5151 = vst.msk [vmem:[%s170 + $0x870] sm:$0xff] %vm1685, %v4730
      %5152 = vst.msk [vmem:[%s170 + $0x878] sm:$0xff] %vm1685, %v4731
      %5153 = vst.msk [vmem:[%s170 + $0x880] sm:$0xff] %vm1685, %v4732
      %5154 = vst.msk [vmem:[%s170 + $0x888] sm:$0xff] %vm1685, %v4733
      %5155 = vst.msk [vmem:[%s170 + $0x890] sm:$0xff] %vm1685, %v4734
      %5156 = vst.msk [vmem:[%s170 + $0x898] sm:$0xff] %vm1685, %v4735
      %5157 = vst.msk [vmem:[%s170 + $0x8a0] sm:$0xff] %vm1685, %v4736
      %5158 = vst.msk [vmem:[%s170 + $0x8a8] sm:$0xff] %vm1685, %v4737
      %5159 = vst.msk [vmem:[%s170 + $0x8b0] sm:$0xff] %vm1685, %v4738
      %5160 = vst.msk [vmem:[%s170 + $0x8b8] sm:$0xff] %vm1685, %v4739
      %5161 = vst.msk [vmem:[%s170 + $0x8c0] sm:$0xff] %vm1685, %v4740
      %5162 = vst.msk [vmem:[%s170 + $0x8c8] sm:$0xff] %vm1685, %v4741
      %5163 = vst.msk [vmem:[%s170 + $0x8d0] sm:$0xff] %vm1685, %v4742
      %5164 = vst.msk [vmem:[%s170 + $0x8d8] sm:$0xff] %vm1685, %v4743
      %5165 = vst.msk [vmem:[%s170 + $0x8e0] sm:$0xff] %vm1685, %v4744
      %5166 = vst.msk [vmem:[%s170 + $0x8e8] sm:$0xff] %vm1685, %v4745
      %5167 = vst.msk [vmem:[%s170 + $0x8f0] sm:$0xff] %vm1685, %v4746
      %5168 = vst.msk [vmem:[%s170 + $0x8f8] sm:$0xff] %vm1685, %v4747
      %5169 = vst.msk [vmem:[%s170 + $0x900] sm:$0xff] %vm1685, %v4748
      %5170 = vst.msk [vmem:[%s170 + $0x908] sm:$0xff] %vm1685, %v4749
      %5171 = vst.msk [vmem:[%s170 + $0x910] sm:$0xff] %vm1685, %v4750
      %5172 = vst.msk [vmem:[%s170 + $0x918] sm:$0xff] %vm1685, %v4751
      %5173 = vst.msk [vmem:[%s170 + $0x920] sm:$0xff] %vm1685, %v4752
      %5174 = vst.msk [vmem:[%s170 + $0x928] sm:$0xff] %vm1685, %v4753
      %5175 = vst.msk [vmem:[%s170 + $0x930] sm:$0xff] %vm1685, %v4754
      %5176 = vst.msk [vmem:[%s170 + $0x938] sm:$0xff] %vm1685, %v4755
      %5177 = vst.msk [vmem:[%s170 + $0x940] sm:$0xff] %vm1685, %v4756
      %5178 = vst.msk [vmem:[%s170 + $0x948] sm:$0xff] %vm1685, %v4757
      %5179 = vst.msk [vmem:[%s170 + $0x950] sm:$0xff] %vm1685, %v4758
      %5180 = vst.msk [vmem:[%s170 + $0x958] sm:$0xff] %vm1685, %v4759
      %5181 = vst.msk [vmem:[%s170 + $0x960] sm:$0xff] %vm1685, %v4760
      %5182 = vst.msk [vmem:[%s170 + $0x968] sm:$0xff] %vm1685, %v4761
      %5183 = vst.msk [vmem:[%s170 + $0x970] sm:$0xff] %vm1685, %v4762
      %5184 = vst.msk [vmem:[%s170 + $0x978] sm:$0xff] %vm1685, %v4763
      %5185 = vst.msk [vmem:[%s170 + $0x980] sm:$0xff] %vm1685, %v4764
      %5186 = vst.msk [vmem:[%s170 + $0x988] sm:$0xff] %vm1685, %v4765
      %5187 = vst.msk [vmem:[%s170 + $0x990] sm:$0xff] %vm1685, %v4766
      %5188 = vst.msk [vmem:[%s170 + $0x998] sm:$0xff] %vm1685, %v4767
      %5189 = vst.msk [vmem:[%s170 + $0x9a0] sm:$0xff] %vm1685, %v4768
      %5190 = vst.msk [vmem:[%s170 + $0x9a8] sm:$0xff] %vm1685, %v4769
      %5191 = vst.msk [vmem:[%s170 + $0x9b0] sm:$0xff] %vm1685, %v4770
      %5192 = vst.msk [vmem:[%s170 + $0x9b8] sm:$0xff] %vm1685, %v4771
      %5193 = vst.msk [vmem:[%s170 + $0x9c0] sm:$0xff] %vm1685, %v4772
      %5194 = vst.msk [vmem:[%s170 + $0x9c8] sm:$0xff] %vm1685, %v4773
      %5195 = vst.msk [vmem:[%s170 + $0x9d0] sm:$0xff] %vm1685, %v4774
      %5196 = vst.msk [vmem:[%s170 + $0x9d8] sm:$0xff] %vm1685, %v4775
      %5197 = vst.msk [vmem:[%s170 + $0x9e0] sm:$0xff] %vm1685, %v4776
      %5198 = vst.msk [vmem:[%s170 + $0x9e8] sm:$0xff] %vm1685, %v4777
      %5199 = vst.msk [vmem:[%s170 + $0x9f0] sm:$0xff] %vm1685, %v4778
      %5200 = vst.msk [vmem:[%s170 + $0x9f8] sm:$0xff] %vm1685, %v4779
      %5201 = vst.msk [vmem:[%s170 + $0xa00] sm:$0xff] %vm1685, %v4780
      %5202 = vst.msk [vmem:[%s170 + $0xa08] sm:$0xff] %vm1685, %v4781
      %5203 = vst.msk [vmem:[%s170 + $0xa10] sm:$0xff] %vm1685, %v4782
      %5204 = vst.msk [vmem:[%s170 + $0xa18] sm:$0xff] %vm1685, %v4783
      %5205 = vst.msk [vmem:[%s170 + $0xa20] sm:$0xff] %vm1685, %v4784
      %5206 = vst.msk [vmem:[%s170 + $0xa28] sm:$0xff] %vm1685, %v4785
      %5207 = vst.msk [vmem:[%s170 + $0xa30] sm:$0xff] %vm1685, %v4786
      %5208 = vst.msk [vmem:[%s170 + $0xa38] sm:$0xff] %vm1685, %v4787
      %5209 = vst.msk [vmem:[%s170 + $0xa40] sm:$0xff] %vm1685, %v4788
      %5210 = vst.msk [vmem:[%s170 + $0xa48] sm:$0xff] %vm1685, %v4789
      %5211 = vst.msk [vmem:[%s170 + $0xa50] sm:$0xff] %vm1685, %v4790
      %5212 = vst.msk [vmem:[%s170 + $0xa58] sm:$0xff] %vm1685, %v4791
      %5213 = vst.msk [vmem:[%s170 + $0xa60] sm:$0xff] %vm1685, %v4792
      %5214 = vst.msk [vmem:[%s170 + $0xa68] sm:$0xff] %vm1685, %v4793
      %5215 = vst.msk [vmem:[%s170 + $0xa70] sm:$0xff] %vm1685, %v4794
      %5216 = vst.msk [vmem:[%s170 + $0xa78] sm:$0xff] %vm1685, %v4795
      %5217 = vst.msk [vmem:[%s170 + $0xa80] sm:$0xff] %vm1685, %v4796
      %5218 = vst.msk [vmem:[%s170 + $0xa88] sm:$0xff] %vm1685, %v4797
      %5219 = vst.msk [vmem:[%s170 + $0xa90] sm:$0xff] %vm1685, %v4798
      %5220 = vst.msk [vmem:[%s170 + $0xa98] sm:$0xff] %vm1685, %v4799
      %5221 = vst.msk [vmem:[%s170 + $0xaa0] sm:$0xff] %vm1685, %v4800
      %5222 = vst.msk [vmem:[%s170 + $0xaa8] sm:$0xff] %vm1685, %v4801
      %5223 = vst.msk [vmem:[%s170 + $0xab0] sm:$0xff] %vm1685, %v4802
      %5224 = vst.msk [vmem:[%s170 + $0xab8] sm:$0xff] %vm1685, %v4803
      %5225 = vst.msk [vmem:[%s170 + $0xac0] sm:$0xff] %vm1685, %v4804
      %5226 = vst.msk [vmem:[%s170 + $0xac8] sm:$0xff] %vm1685, %v4805
      %5227 = vst.msk [vmem:[%s170 + $0xad0] sm:$0xff] %vm1685, %v4806
      %5228 = vst.msk [vmem:[%s170 + $0xad8] sm:$0xff] %vm1685, %v4807
      %5229 = vst.msk [vmem:[%s170 + $0xae0] sm:$0xff] %vm1685, %v4808
      %5230 = vst.msk [vmem:[%s170 + $0xae8] sm:$0xff] %vm1685, %v4809
      %5231 = vst.msk [vmem:[%s170 + $0xaf0] sm:$0xff] %vm1685, %v4810
      %5232 = vst.msk [vmem:[%s170 + $0xaf8] sm:$0xff] %vm1685, %v4811
      %5233 = vst.msk [vmem:[%s170 + $0xb00] sm:$0xff] %vm1685, %v4812
      %5234 = vst.msk [vmem:[%s170 + $0xb08] sm:$0xff] %vm1685, %v4813
      %5235 = vst.msk [vmem:[%s170 + $0xb10] sm:$0xff] %vm1685, %v4814
      %5236 = vst.msk [vmem:[%s170 + $0xb18] sm:$0xff] %vm1685, %v4815
      %5237 = vst.msk [vmem:[%s170 + $0xb20] sm:$0xff] %vm1685, %v4816
      %5238 = vst.msk [vmem:[%s170 + $0xb28] sm:$0xff] %vm1685, %v4817
      %5239 = vst.msk [vmem:[%s170 + $0xb30] sm:$0xff] %vm1685, %v4818
      %5240 = vst.msk [vmem:[%s170 + $0xb38] sm:$0xff] %vm1685, %v4819
      %5241 = vst.msk [vmem:[%s170 + $0xb40] sm:$0xff] %vm1685, %v4820
      %5242 = vst.msk [vmem:[%s170 + $0xb48] sm:$0xff] %vm1685, %v4821
      %5243 = vst.msk [vmem:[%s170 + $0xb50] sm:$0xff] %vm1685, %v4822
      %5244 = vst.msk [vmem:[%s170 + $0xb58] sm:$0xff] %vm1685, %v4823
      %5245 = vst.msk [vmem:[%s170 + $0xb60] sm:$0xff] %vm1685, %v4824
      %5246 = vst.msk [vmem:[%s170 + $0xb68] sm:$0xff] %vm1685, %v4825
      %5247 = vst.msk [vmem:[%s170 + $0xb70] sm:$0xff] %vm1685, %v4826
      %5248 = vst.msk [vmem:[%s170 + $0xb78] sm:$0xff] %vm1685, %v4827
      %5249 = vst.msk [vmem:[%s170 + $0xb80] sm:$0xff] %vm1685, %v4828
      %5250 = vst.msk [vmem:[%s170 + $0xb88] sm:$0xff] %vm1685, %v4829
      %5251 = vst.msk [vmem:[%s170 + $0xb90] sm:$0xff] %vm1685, %v4830
      %5252 = vst.msk [vmem:[%s170 + $0xb98] sm:$0xff] %vm1685, %v4831
      %5253 = vst.msk [vmem:[%s170 + $0xba0] sm:$0xff] %vm1685, %v4832
      %5254 = vst.msk [vmem:[%s170 + $0xba8] sm:$0xff] %vm1685, %v4833
      %5255 = vst.msk [vmem:[%s170 + $0xbb0] sm:$0xff] %vm1685, %v4834
      %5256 = vst.msk [vmem:[%s170 + $0xbb8] sm:$0xff] %vm1685, %v4835
      %5257 = vst.msk [vmem:[%s170 + $0xbc0] sm:$0xff] %vm1685, %v4836
      %5258 = vst.msk [vmem:[%s170 + $0xbc8] sm:$0xff] %vm1685, %v4837
      %5259 = vst.msk [vmem:[%s170 + $0xbd0] sm:$0xff] %vm1685, %v4838
      %5260 = vst.msk [vmem:[%s170 + $0xbd8] sm:$0xff] %vm1685, %v4839
      %5261 = vst.msk [vmem:[%s170 + $0xbe0] sm:$0xff] %vm1685, %v4840
      %5262 = vst.msk [vmem:[%s170 + $0xbe8] sm:$0xff] %vm1685, %v4841
      %5263 = vst.msk [vmem:[%s170 + $0xbf0] sm:$0xff] %vm1685, %v4842
      %5264 = vst.msk [vmem:[%s170 + $0xbf8] sm:$0xff] %vm1685, %v4843
      %5265 = vst.msk [vmem:[%s170 + $0xc00] sm:$0xff] %vm1685, %v4844
      %5266 = vst.msk [vmem:[%s170 + $0xc08] sm:$0xff] %vm1685, %v4845
      %5267 = vst.msk [vmem:[%s170 + $0xc10] sm:$0xff] %vm1685, %v4846
      %5268 = vst.msk [vmem:[%s170 + $0xc18] sm:$0xff] %vm1685, %v4847
      %5269 = vst.msk [vmem:[%s170 + $0xc20] sm:$0xff] %vm1685, %v4848
      %5270 = vst.msk [vmem:[%s170 + $0xc28] sm:$0xff] %vm1685, %v4849
      %5271 = vst.msk [vmem:[%s170 + $0xc30] sm:$0xff] %vm1685, %v4850
      %5272 = vst.msk [vmem:[%s170 + $0xc38] sm:$0xff] %vm1685, %v4851
      %5273 = vst.msk [vmem:[%s170 + $0xc40] sm:$0xff] %vm1685, %v4852
      %5274 = vst.msk [vmem:[%s170 + $0xc48] sm:$0xff] %vm1685, %v4853
      %5275 = vst.msk [vmem:[%s170 + $0xc50] sm:$0xff] %vm1685, %v4854
      %5276 = vst.msk [vmem:[%s170 + $0xc58] sm:$0xff] %vm1685, %v4855
      %5277 = vst.msk [vmem:[%s170 + $0xc60] sm:$0xff] %vm1685, %v4856
      %5278 = vst.msk [vmem:[%s170 + $0xc68] sm:$0xff] %vm1685, %v4857
      %5279 = vst.msk [vmem:[%s170 + $0xc70] sm:$0xff] %vm1685, %v4858
      %5280 = vst.msk [vmem:[%s170 + $0xc78] sm:$0xff] %vm1685, %v4859
      %5281 = vst.msk [vmem:[%s170 + $0xc80] sm:$0xff] %vm1685, %v4860
      %5282 = vst.msk [vmem:[%s170 + $0xc88] sm:$0xff] %vm1685, %v4861
      %5283 = vst.msk [vmem:[%s170 + $0xc90] sm:$0xff] %vm1685, %v4862
      %5284 = vst.msk [vmem:[%s170 + $0xc98] sm:$0xff] %vm1685, %v4863
      %5285 = vst.msk [vmem:[%s170 + $0xca0] sm:$0xff] %vm1685, %v4864
      %5286 = vst.msk [vmem:[%s170 + $0xca8] sm:$0xff] %vm1685, %v4865
      %5287 = vst.msk [vmem:[%s170 + $0xcb0] sm:$0xff] %vm1685, %v4866
      %5288 = vst.msk [vmem:[%s170 + $0xcb8] sm:$0xff] %vm1685, %v4867
      %5289 = vst.msk [vmem:[%s170 + $0xcc0] sm:$0xff] %vm1685, %v4868
      %5290 = vst.msk [vmem:[%s170 + $0xcc8] sm:$0xff] %vm1685, %v4869
      %5291 = vst.msk [vmem:[%s170 + $0xcd0] sm:$0xff] %vm1685, %v4870
      %5292 = vst.msk [vmem:[%s170 + $0xcd8] sm:$0xff] %vm1685, %v4871
      %5293 = vst.msk [vmem:[%s170 + $0xce0] sm:$0xff] %vm1685, %v4872
      %5294 = vst.msk [vmem:[%s170 + $0xce8] sm:$0xff] %vm1685, %v4873
      %5295 = vst.msk [vmem:[%s170 + $0xcf0] sm:$0xff] %vm1685, %v4874
      %5296 = vst.msk [vmem:[%s170 + $0xcf8] sm:$0xff] %vm1685, %v4875
      %5297 = vst.msk [vmem:[%s170 + $0xd00] sm:$0xff] %vm1685, %v4876
      %5298 = vst.msk [vmem:[%s170 + $0xd08] sm:$0xff] %vm1685, %v4877
      %5299 = vst.msk [vmem:[%s170 + $0xd10] sm:$0xff] %vm1685, %v4878
      %5300 = vst.msk [vmem:[%s170 + $0xd18] sm:$0xff] %vm1685, %v4879
      %vm5301 = vcmask 519168
      %5302 = vst.msk [vmem:[%s170 + $0xd20] sm:$0xf] %vm5301, %v4880
      %p5303 = scmp.lt.s32.totalorder %s14, 1
      %s5304 = scalar_select %p5303, %s14, 1
      %s5305 = smul.addr %s5304, 421
      %s5306 = smul.addr %s5305, 8
      %s5307 = scalar_lea.vmem %s3, %s5306
      // Predicated region
      $region33: #{tpu_custom_call.1} parent=31 // pred_check
        %p5308 = pneg %p100
      $region34: #{tpu_custom_call.1} parent=31 // pred_check_branch
        %5310 = sbr.rel (%p5308) target = $region36
      $region35: #{tpu_custom_call.1} parent=31 // pred_region
        _
      $region36: #{tpu_custom_call.1} parent=31 // pred_fallthru
        _
    $region32: #{tpu_custom_call.1} parent=5 // pred_fallthru
      _
    %p5311 = scmp.le.s32.totalorder 2, %s9
    // Predicated region
    $region37: #{tpu_custom_call.1} parent=5 // pred_check
      %p5312 = pneg %p5311
    $region38: #{tpu_custom_call.1} parent=5 // pred_check_branch
      %5314 = sbr.rel (%p5312) target = $region40
    $region39: #{tpu_custom_call.1} parent=5 // pred_region
      %s5315 = ssub.s32 %s9, 2
      // Predicated region
      $region41: #{tpu_custom_call.1} parent=39 // pred_check
        %p5316 = pneg %p106
      $region42: #{tpu_custom_call.1} parent=39 // pred_check_branch
        %5318 = sbr.rel (%p5316) target = $region44
      $region43: #{tpu_custom_call.1} parent=39 // pred_region
        %p5319 = scmp.lt.s32.totalorder %s15, 1
        %s5320 = scalar_select %p5319, %s15, 1
        %s5321 = smul.addr %s5320, 421
        %s5322 = smul.addr %s5321, 8
        %s5323 = scalar_lea.vmem %s3, %s5322
      $region44: #{tpu_custom_call.1} parent=39 // pred_fallthru
        _
    $region40: #{tpu_custom_call.1} parent=5 // pred_fallthru
      _
  $region6: #{tpu_custom_call.1} parent=0 // loop_footer
    %s13 = sadd.s32 1, %s9
  $region7: #{tpu_custom_call.1} parent=0 // loop_footer_branch
    %8 = sbr.rel target = $region3
  $region8: #{tpu_custom_call.1} parent=0 // loop_exit
    _

</llo_original>
